<compile_context>
chip_gen: v7x
topology: tpu7x:2x2x1
jax: 0.10.0
libtpu: 0.0.40
codegen_flags: <defaults>
</compile_context>

<pallas_src>
import functools

import jax
import jax.numpy as jnp
from jax.experimental import pallas as pl
from jax.experimental.pallas import tpu as pltpu

BN_EPS = 1e-5
LANE = 128
_MIB = 1 << 20


def _physical_vmem_bytes():
    try:
        return int(pltpu.get_tpu_info().vmem_capacity_bytes)
    except Exception:
        return 64 * _MIB  # conservative fallback: v7x per-TensorCore VMEM


def _vmem_estimate(B, tk, ne_s, nc_pad, getemb, w_bytes):
    """Rough per-core VMEM footprint for a given K tile (double buffers counted)."""
    est = 2 * B * tk * w_bytes            # x block (double-buffered)
    est += 2 * tk * ne_s * w_bytes        # w1 block (double-buffered, dominant)
    est += 2 * 2 * ne_s * 4               # gamma, beta
    est += 2 * ne_s * nc_pad * 4          # w2 (resident, counted with 2 bufs)
    est += B * ne_s * 4                   # f32 accumulator scratch
    est += 2 * B * nc_pad * 4             # logits output block
    if getemb:
        est += 2 * B * ne_s * 4           # emb output block
    return est


def _pick_tk(inc, fits, max_tk=None):
    """Largest K tile (full inc, else a lane-aligned divisor of inc) that fits VMEM."""
    cap = inc if max_tk is None else min(inc, max_tk)
    cands = []
    if inc <= cap:
        cands.append(inc)
    tk = (cap // LANE) * LANE
    while tk >= LANE:
        if inc % tk == 0 and tk not in cands:
            cands.append(tk)
        tk -= LANE
    if not cands:
        return inc
    for c in cands:
        if fits(c):
            return c
    return cands[-1]


def _make_kernel(write_emb):
    def kernel(x_ref, w1_ref, gamma_ref, beta_ref, w2_ref, *refs):
        if write_emb:
            emb_ref, out_ref, acc_ref = refs
        else:
            out_ref, acc_ref = refs
            emb_ref = None

        k = pl.program_id(1)

        @pl.when(k == 0)
        def _():
            acc_ref[...] = jnp.zeros_like(acc_ref)

        # fc1 partial product for this K tile (MXU, f32 accumulation).  fc1's bias
        # is intentionally omitted: a per-feature constant shift is exactly
        # cancelled by the training-mode BatchNorm batch-mean subtraction (it
        # must be re-added for an eval-mode / running-stats BN variant).
        acc_ref[...] += jnp.dot(x_ref[...], w1_ref[...],
                                preferred_element_type=jnp.float32)

        @pl.when(k == pl.num_programs(1) - 1)
        def _():
            h = acc_ref[...]
            # One-pass biased batch statistics (training-mode BatchNorm1d).
            mean = jnp.mean(h, axis=0, keepdims=True)
            mean_sq = jnp.mean(h * h, axis=0, keepdims=True)
            var = jnp.maximum(mean_sq - mean * mean, 0.0)
            # Fold BN normalize + affine into one FMA; rsqrt goes to the EUP.
            scale = gamma_ref[...] * jax.lax.rsqrt(var + BN_EPS)
            shift = beta_ref[...] - mean * scale
            emb = jnp.maximum(h * scale + shift, 0.0)          # BN + ReLU
            if write_emb:
                emb_ref[...] = emb.astype(emb_ref.dtype)
            # fc2 partial for this feature split; b2 is added in the wrapper so
            # multi-split partials can simply be summed.
            out_ref[...] = jnp.dot(emb, w2_ref[...],
                                   preferred_element_type=jnp.float32
                                   ).astype(out_ref.dtype)

    return kernel


@functools.partial(
    jax.jit, static_argnames=("getemb", "bf16_weights", "emb_splits", "max_tk"))
def classifier_forward(x, params, getemb=False, *, bf16_weights=False,
                       emb_splits=1, max_tk=None):
    """x: (B, inc) float32.  params: dict of weights (see init_params)."""
    B, inc = x.shape
    num_emb = params["w1"].shape[1]
    num_class = params["w2"].shape[1]

    # Leading "parallel" grid axis splitting num_emb (v7x megacore path).
    split = int(emb_splits) if emb_splits and emb_splits > 0 else 1
    if num_emb % split != 0 or (split > 1 and (num_emb // split) % LANE != 0):
        split = 1
    ne_s = num_emb // split

    # Lane-pad fc2's output features so the final stores are lane-dense (>=128).
    nc_pad = max(LANE, ((num_class + LANE - 1) // LANE) * LANE)
    w2 = params["w2"]
    if nc_pad != num_class:
        w2 = jnp.pad(w2, ((0, 0), (0, nc_pad - num_class)))

    # Optional bf16 streaming of the dominant operands (f32 accumulation kept).
    if bf16_weights:
        x_in = x.astype(jnp.bfloat16)
        w1 = params["w1"].astype(jnp.bfloat16)
        w_bytes = 2
    else:
        x_in = x
        w1 = params["w1"]
        w_bytes = 4

    # Budget-driven K tile + explicit scoped-VMEM limit.
    budget = min(int(0.75 * _physical_vmem_bytes()), 100 * _MIB)
    fits = lambda t: _vmem_estimate(B, t, ne_s, nc_pad, getemb, w_bytes) <= budget
    tk = _pick_tk(inc, fits, max_tk)
    grid = (split, inc // tk)
    needed = _vmem_estimate(B, tk, ne_s, nc_pad, getemb, w_bytes)
    vmem_limit = int(max(32 * _MIB, min(budget, needed + 8 * _MIB)))

    in_specs = [
        pl.BlockSpec((B, tk), lambda p, k: (0, k)),          # x: K-streamed
        pl.BlockSpec((tk, ne_s), lambda p, k: (k, p)),       # w1: K-streamed, col-split
        pl.BlockSpec((1, ne_s), lambda p, k: (0, p)),        # gamma (VMEM-resident)
        pl.BlockSpec((1, ne_s), lambda p, k: (0, p)),        # beta
        pl.BlockSpec((ne_s, nc_pad), lambda p, k: (p, 0)),   # w2 (VMEM-resident)
    ]
    out_partial_spec = pl.BlockSpec((None, B, nc_pad), lambda p, k: (p, 0, 0))

    if getemb:
        out_shape = (jax.ShapeDtypeStruct((B, num_emb), jnp.float32),
                     jax.ShapeDtypeStruct((split, B, nc_pad), jnp.float32))
        out_specs = (pl.BlockSpec((B, ne_s), lambda p, k: (0, p)),
                     out_partial_spec)
    else:
        out_shape = jax.ShapeDtypeStruct((split, B, nc_pad), jnp.float32)
        out_specs = out_partial_spec

    flops = 2 * B * inc * num_emb + 2 * B * num_emb * nc_pad
    bytes_accessed = (B * inc * w_bytes + inc * num_emb * w_bytes
                      + 2 * num_emb * 4 + num_emb * nc_pad * 4
                      + split * B * nc_pad * 4
                      + (B * num_emb * 4 if getemb else 0))
    cost = pl.CostEstimate(flops=flops, transcendentals=num_emb,
                           bytes_accessed=bytes_accessed)

    result = pl.pallas_call(
        _make_kernel(getemb),
        out_shape=out_shape,
        grid_spec=pltpu.PrefetchScalarGridSpec(
            num_scalar_prefetch=0,
            grid=grid,
            in_specs=in_specs,
            out_specs=out_specs,
            scratch_shapes=[pltpu.VMEM((B, ne_s), jnp.float32)],
        ),
        compiler_params=pltpu.CompilerParams(
            dimension_semantics=("parallel", "arbitrary"),
            vmem_limit_bytes=vmem_limit),
        cost_estimate=cost,
    )(x_in, w1, params["gamma"], params["beta"], w2)

    if getemb:
        emb, partials = result
    else:
        emb, partials = None, result

    # Sum feature-split partials (no-op squeeze for split=1), add b2, un-pad.
    logits = jnp.sum(partials, axis=0)[:, :num_class] + params["b2"]
    return (emb, logits) if getemb else logits


def init_params(key, inc=2048, num_emb=512, num_class=64):
    """Deterministic init mimicking nn.Linear defaults (uniform +/- 1/sqrt(fan_in)).

    Note: b1 is only used by the pure-JAX reference; the kernel drops it because
    training-mode BatchNorm's batch-mean subtraction cancels any per-feature
    constant added by fc1."""
    k1, k2, k3, k4 = jax.random.split(key, 4)
    bound1 = 1.0 / (inc ** 0.5)
    bound2 = 1.0 / (num_emb ** 0.5)
    return {
        # stored pre-transposed: (in_features, out_features)
        "w1": jax.random.uniform(k1, (inc, num_emb), jnp.float32, -bound1, bound1),
        "b1": jax.random.uniform(k2, (1, num_emb), jnp.float32, -bound1, bound1),
        "gamma": jnp.ones((1, num_emb), jnp.float32),
        "beta": jnp.zeros((1, num_emb), jnp.float32),
        "w2": jax.random.uniform(k3, (num_emb, num_class), jnp.float32, -bound2, bound2),
        "b2": jax.random.uniform(k4, (1, num_class), jnp.float32, -bound2, bound2),
    }


def reference_forward(x, params, getemb=False):
    """Pure-JAX reference matching PyTorch training-mode forward semantics."""
    h = x @ params["w1"] + params["b1"]
    mean = jnp.mean(h, axis=0, keepdims=True)
    var = jnp.mean((h - mean) ** 2, axis=0, keepdims=True)
    h = (h - mean) * jax.lax.rsqrt(var + BN_EPS) * params["gamma"] + params["beta"]
    emb = jnp.maximum(h, 0.0)
    out = emb @ params["w2"] + params["b2"]
    return (emb, out) if getemb else out


if __name__ == "__main__":
    key = jax.random.PRNGKey(0)
    pkey, xkey = jax.random.split(key)

    B, INC, NUM_EMB, NUM_CLASS = 8, 2048, 512, 64
    params = init_params(pkey, inc=INC, num_emb=NUM_EMB, num_class=NUM_CLASS)
    x = jax.random.normal(xkey, (B, INC), jnp.float32)

    emb_ref, out_ref = reference_forward(x, params, getemb=True)

    # 1) Default path: budget-driven tk (= full inc here -> single K step), no emb out.
    out1 = classifier_forward(x, params, getemb=False)
    # 2) getemb=True path (emb + logits).
    emb2, out2 = classifier_forward(x, params, getemb=True)
    # 3) Forced K streaming (tk=512, 4 K steps) to exercise the accumulator loop.
    out3 = classifier_forward(x, params, getemb=False, max_tk=512)
    # 4) Two-way feature split (v7x megacore path; correct on 1-TC chips too).
    emb4, out4 = classifier_forward(x, params, getemb=True, emb_splits=2)
    # 5) bf16 weight/activation streaming (precision tradeoff -> looser tolerance).
    out5 = classifier_forward(x, params, getemb=False, bf16_weights=True)

    jax.block_until_ready((out1, emb2, out2, out3, emb4, out4, out5))

    assert out1.shape == (B, NUM_CLASS)
    assert emb2.shape == (B, NUM_EMB) and out2.shape == (B, NUM_CLASS)
    assert jnp.allclose(out1, out_ref, atol=1e-3, rtol=1e-3)
    assert jnp.allclose(out2, out_ref, atol=1e-3, rtol=1e-3)
    assert jnp.allclose(emb2, emb_ref, atol=1e-3, rtol=1e-3)
    assert jnp.allclose(out3, out_ref, atol=1e-3, rtol=1e-3)
    assert jnp.allclose(out4, out_ref, atol=1e-3, rtol=1e-3)
    assert jnp.allclose(emb4, emb_ref, atol=1e-3, rtol=1e-3)
    assert jnp.allclose(out5, out_ref, atol=5e-2, rtol=5e-2)

    print("KERNEL_OK")
</pallas_src>

<mosaic_0001>
module attributes {stable_mosaic.version = 11 : i64} {
  func.func @kernel(%arg0: i32, %arg1: i32, %arg2: memref<8x2048xf32, #tpu.memory_space<vmem>>, %arg3: memref<2048x512xf32, #tpu.memory_space<vmem>>, %arg4: memref<1x512xf32, #tpu.memory_space<vmem>>, %arg5: memref<1x512xf32, #tpu.memory_space<vmem>>, %arg6: memref<512x128xf32, #tpu.memory_space<vmem>>, %arg7: memref<1x8x128xf32, #tpu.memory_space<vmem>>, %arg8: memref<8x512xf32, #tpu.memory_space<vmem>>) attributes {dimension_semantics = [#tpu.dimension_semantics<parallel>, #tpu.dimension_semantics<arbitrary>], iteration_bounds = array<i64: 1, 1>, scalar_prefetch = 0 : i64, scratch_operands = 1 : i64, tpu.core_type = #tpu.core_type<tc>, window_params = [{transform_indices = @transform_0, window_bounds = array<i64: 8, 2048>}, {transform_indices = @transform_1, window_bounds = array<i64: 2048, 512>}, {transform_indices = @transform_2, window_bounds = array<i64: 1, 512>}, {transform_indices = @transform_3, window_bounds = array<i64: 1, 512>}, {transform_indices = @transform_4, window_bounds = array<i64: 512, 128>}, {transform_indices = @transform_5, window_bounds = array<i64: 1, 8, 128>}]} {
    %c0_i32 = arith.constant 0 : i32
    %0 = arith.cmpi eq, %arg1, %c0_i32 : i32
    %1 = arith.extui %0 : i1 to i32
    %c0_i32_0 = arith.constant 0 : i32
    %2 = arith.cmpi ne, %1, %c0_i32_0 : i32
    scf.if %2 {
      %cst_10 = arith.constant 0.000000e+00 : f32
      %12 = vector.broadcast %cst_10 : f32 to vector<8x512xf32>
      %c0_11 = arith.constant 0 : index
      %c0_12 = arith.constant 0 : index
      %13 = vector.load %arg8[%c0_11, %c0_12] : memref<8x512xf32, #tpu.memory_space<vmem>>, vector<8x512xf32>
      tpu.vector_store %arg8[%c0_11, %c0_12], %12 {strides = array<i32>} : memref<8x512xf32, #tpu.memory_space<vmem>>, vector<8x512xf32>,
    } else {
    }
    %c0 = arith.constant 0 : index
    %c0_1 = arith.constant 0 : index
    %3 = vector.load %arg8[%c0, %c0_1] : memref<8x512xf32, #tpu.memory_space<vmem>>, vector<8x512xf32>
    %c0_2 = arith.constant 0 : index
    %c0_3 = arith.constant 0 : index
    %4 = vector.load %arg2[%c0_2, %c0_3] : memref<8x2048xf32, #tpu.memory_space<vmem>>, vector<8x2048xf32>
    %c0_4 = arith.constant 0 : index
    %c0_5 = arith.constant 0 : index
    %5 = vector.load %arg3[%c0_4, %c0_5] : memref<2048x512xf32, #tpu.memory_space<vmem>>, vector<2048x512xf32>
    %cst = arith.constant dense<0.000000e+00> : vector<8x512xf32>
    %6 = tpu.matmul %4, %5, %cst {dimension_numbers = #tpu.dot_dimension_numbers<[1], [0], [0], [1], [0, 0, 1, 1], [], []>} : vector<8x2048xf32>, vector<2048x512xf32>, vector<8x512xf32> -> vector<8x512xf32>
    %7 = arith.addf %3, %6 : vector<8x512xf32>
    %c0_6 = arith.constant 0 : index
    %c0_7 = arith.constant 0 : index
    %8 = vector.load %arg8[%c0_6, %c0_7] : memref<8x512xf32, #tpu.memory_space<vmem>>, vector<8x512xf32>
    tpu.vector_store %arg8[%c0_6, %c0_7], %7 {strides = array<i32>} : memref<8x512xf32, #tpu.memory_space<vmem>>, vector<8x512xf32>,
    %c0_i32_8 = arith.constant 0 : i32
    %9 = arith.cmpi eq, %arg1, %c0_i32_8 : i32
    %10 = arith.extui %9 : i1 to i32
    %c0_i32_9 = arith.constant 0 : i32
    %11 = arith.cmpi ne, %10, %c0_i32_9 : i32
    scf.if %11 {
      %c0_10 = arith.constant 0 : index
      %c0_11 = arith.constant 0 : index
      %12 = vector.load %arg8[%c0_10, %c0_11] : memref<8x512xf32, #tpu.memory_space<vmem>>, vector<8x512xf32>
      %cst_12 = arith.constant dense<0.000000e+00> : vector<512xf32>
      %13 = vector.multi_reduction <add>, %12, %cst_12 [0] : vector<8x512xf32> to vector<512xf32>
      %14 = vector.shape_cast %13 : vector<512xf32> to vector<1x512xf32>
      %cst_13 = arith.constant 8.000000e+00 : f32
      %15 = vector.broadcast %cst_13 : f32 to vector<1x512xf32>
      %16 = arith.divf %14, %15 : vector<1x512xf32>
      %17 = arith.mulf %12, %12 : vector<8x512xf32>
      %cst_14 = arith.constant dense<0.000000e+00> : vector<512xf32>
      %18 = vector.multi_reduction <add>, %17, %cst_14 [0] : vector<8x512xf32> to vector<512xf32>
      %19 = vector.shape_cast %18 : vector<512xf32> to vector<1x512xf32>
      %cst_15 = arith.constant 8.000000e+00 : f32
      %20 = vector.broadcast %cst_15 : f32 to vector<1x512xf32>
      %21 = arith.divf %19, %20 : vector<1x512xf32>
      %22 = arith.mulf %16, %16 : vector<1x512xf32>
      %23 = arith.subf %21, %22 : vector<1x512xf32>
      %cst_16 = arith.constant 0.000000e+00 : f32
      %24 = vector.broadcast %cst_16 : f32 to vector<1x512xf32>
      %25 = arith.maximumf %23, %24 : vector<1x512xf32>
      %c0_17 = arith.constant 0 : index
      %c0_18 = arith.constant 0 : index
      %26 = vector.load %arg4[%c0_17, %c0_18] : memref<1x512xf32, #tpu.memory_space<vmem>>, vector<1x512xf32>
      %cst_19 = arith.constant 9.99999974E-6 : f32
      %27 = vector.broadcast %cst_19 : f32 to vector<1x512xf32>
      %28 = arith.addf %25, %27 : vector<1x512xf32>
      %29 = math.rsqrt %28 : vector<1x512xf32>
      %30 = arith.mulf %26, %29 : vector<1x512xf32>
      %c0_20 = arith.constant 0 : index
      %c0_21 = arith.constant 0 : index
      %31 = vector.load %arg5[%c0_20, %c0_21] : memref<1x512xf32, #tpu.memory_space<vmem>>, vector<1x512xf32>
      %32 = arith.mulf %16, %30 : vector<1x512xf32>
      %33 = arith.subf %31, %32 : vector<1x512xf32>
      %34 = vector.broadcast %30 : vector<1x512xf32> to vector<8x512xf32>
      %35 = arith.mulf %12, %34 : vector<8x512xf32>
      %36 = vector.broadcast %33 : vector<1x512xf32> to vector<8x512xf32>
      %37 = arith.addf %35, %36 : vector<8x512xf32>
      %cst_22 = arith.constant 0.000000e+00 : f32
      %38 = vector.broadcast %cst_22 : f32 to vector<8x512xf32>
      %39 = arith.maximumf %37, %38 : vector<8x512xf32>
      %c0_23 = arith.constant 0 : index
      %c0_24 = arith.constant 0 : index
      %40 = vector.load %arg6[%c0_23, %c0_24] : memref<512x128xf32, #tpu.memory_space<vmem>>, vector<512x128xf32>
      %cst_25 = arith.constant dense<0.000000e+00> : vector<8x128xf32>
      %41 = tpu.matmul %39, %40, %cst_25 {dimension_numbers = #tpu.dot_dimension_numbers<[1], [0], [0], [1], [0, 0, 1, 1], [], []>} : vector<8x512xf32>, vector<512x128xf32>, vector<8x128xf32> -> vector<8x128xf32>
      %c0_26 = arith.constant 0 : index
      %c0_27 = arith.constant 0 : index
      %c0_28 = arith.constant 0 : index
      %42 = vector.load %arg7[%c0_26, %c0_27, %c0_28] : memref<1x8x128xf32, #tpu.memory_space<vmem>>, vector<1x8x128xf32>
      %43 = vector.shape_cast %42 : vector<1x8x128xf32> to vector<8x128xf32>
      %44 = vector.shape_cast %41 : vector<8x128xf32> to vector<1x8x128xf32>
      tpu.vector_store %arg7[%c0_26, %c0_27, %c0_28], %44 {strides = array<i32>} : memref<1x8x128xf32, #tpu.memory_space<vmem>>, vector<1x8x128xf32>,
    } else {
    }
    return
  }
  func.func @transform_0(%arg0: i32, %arg1: i32) -> (i32, i32) {
    %c0_i32 = arith.constant 0 : i32
    %c0_i32_0 = arith.constant 0 : i32
    return %c0_i32, %arg1 : i32, i32
  }
  func.func @transform_1(%arg0: i32, %arg1: i32) -> (i32, i32) {
    %c0_i32 = arith.constant 0 : i32
    return %arg1, %arg0 : i32, i32
  }
  func.func @transform_2(%arg0: i32, %arg1: i32) -> (i32, i32) {
    %c0_i32 = arith.constant 0 : i32
    %c0_i32_0 = arith.constant 0 : i32
    return %c0_i32, %arg0 : i32, i32
  }
  func.func @transform_3(%arg0: i32, %arg1: i32) -> (i32, i32) {
    %c0_i32 = arith.constant 0 : i32
    %c0_i32_0 = arith.constant 0 : i32
    return %c0_i32, %arg0 : i32, i32
  }
  func.func @transform_4(%arg0: i32, %arg1: i32) -> (i32, i32) {
    %c0_i32 = arith.constant 0 : i32
    %c0_i32_0 = arith.constant 0 : i32
    return %arg0, %c0_i32 : i32, i32
  }
  func.func @transform_5(%arg0: i32, %arg1: i32) -> (i32, i32, i32) {
    %c0_i32 = arith.constant 0 : i32
    %c0_i32_0 = arith.constant 0 : i32
    %c0_i32_1 = arith.constant 0 : i32
    return %arg0, %c0_i32, %c0_i32_0 : i32, i32, i32
  }
}

</mosaic_0001>

<llo_original>
// kernel: classifier_forward.1
$region0: #{classifier_forward.1}
  #allocation0 [shape = 'u32[]', space=smem, size = 0x4, offset = 0x4, fixed_abs, tag = 'smem constant byte address 0x4 - core index']
  #allocation1 [shape = 'u32[144,128]{1,0:T(1,128)}', space=vmem, size = 0x12000, scoped, tag = 'internal scratch']
  #allocation2 [shape = 'f32[8,512]{1,0:T(8,128)}', space=vmem, size = 0x4000, scoped, tag = 'scratch operand']
  %s0 = inlined_call_operand.hbm [shape: f32[8,2048], index: 0, kind: input, shape index: {}]
  %s1 = inlined_call_operand.hbm [shape: f32[2048,512], index: 1, kind: input, shape index: {}]
  %s2 = inlined_call_operand.hbm [shape: f32[1,512], index: 2, kind: input, shape index: {}]
  %s3 = inlined_call_operand.hbm [shape: f32[1,512], index: 3, kind: input, shape index: {}]
  %s4 = inlined_call_operand.vmem [shape: f32[512,128], index: 4, kind: input, shape index: {}]
  %s5 = inlined_call_operand.vmem [shape: f32[1,8,128], index: 5, kind: output, shape index: {}]
  %s6 = sld [smem:[#allocation0]]
  $region54: #{classifier_forward.1} parent=0
    _
  %s8 = ssub.s32 1, %s6
  %s9 = scalar_select 0, %s8, %s6
  $region1: #{classifier_forward.1} parent=0
    #allocation3 [shape = 'u8[65536]{0}', space=vmem, size = 0x10000, scoped, tag = 'input window, operand 0, single buffered']
    #allocation4 [shape = 's32[1]{0}', space=sflag, size = 0x4, scoped, tag = 'scoped memory for classifier_forward.1']
    #allocation5 [shape = 'u8[4194304]{0}', space=vmem, size = 0x400000, scoped, tag = 'input window, operand 1, single buffered']
    #allocation6 [shape = 's32[1]{0}', space=sflag, size = 0x4, scoped, tag = 'scoped memory for classifier_forward.1']
    #allocation7 [shape = 'u8[2048]{0}', space=vmem, size = 0x800, scoped, tag = 'input window, operand 2, single buffered']
    #allocation8 [shape = 'u8[2048]{0}', space=vmem, size = 0x800, scoped, tag = 'input window, operand 3, single buffered']
    #allocation9 [shape = 's32[1]{0}', space=sflag, size = 0x4, scoped, tag = 'scoped memory for classifier_forward.1']
    %10 = vsyncpa [#allocation4], 0
    %11 = vsyncpa [#allocation6], 0
    %12 = vsyncpa [#allocation9], 0
    // Predicated region
    $region2: #{classifier_forward.1} parent=1 // pred_check
      _
    $region3: #{classifier_forward.1} parent=1 // pred_check_branch
      %14 = sbr.rel (0) target = $region5
    $region4: #{classifier_forward.1} parent=1 // pred_region
      %s16 = ssub.s32 2048, 2048
      %17 = vsyncadd [#allocation4], %s16
      %s19 = sshll.u32 [#allocation3], 4
      %s20 = int_to_ptr.vmem [resolvable:$true] %s19
      %22 = dma.hbm_to_vmem [thread:$0]  %s0, 2048, %s20, [#allocation4]
    $region5: #{classifier_forward.1} parent=1 // pred_fallthru
      _
    // Predicated region
    $region6: #{classifier_forward.1} parent=1 // pred_check
      _
    $region7: #{classifier_forward.1} parent=1 // pred_check_branch
      %24 = sbr.rel (0) target = $region9
    $region8: #{classifier_forward.1} parent=1 // pred_region
      %s26 = ssub.s32 131072, 131072
      %27 = vsyncadd [#allocation6], %s26
      %s28 = sshll.u32 [#allocation5], 4
      %s29 = int_to_ptr.vmem [resolvable:$true] %s28
      %34 = dma.hbm_to_vmem [thread:$0]  %s1, 131072, %s29, [#allocation6], 512, 512, 32
    $region9: #{classifier_forward.1} parent=1 // pred_fallthru
      _
    // Predicated region
    $region10: #{classifier_forward.1} parent=1 // pred_check
      _
    $region11: #{classifier_forward.1} parent=1 // pred_check_branch
      %36 = sbr.rel (0) target = $region13
    $region12: #{classifier_forward.1} parent=1 // pred_region
      %s38 = ssub.s32 64, 64
      %39 = vsyncadd [#allocation6], %s38
      %s41 = sshll.u32 [#allocation7], 4
      %s42 = int_to_ptr.vmem [resolvable:$true] %s41
      %44 = dma.hbm_to_vmem [thread:$0]  %s2, 64, %s42, [#allocation6]
    $region13: #{classifier_forward.1} parent=1 // pred_fallthru
      _
    // Predicated region
    $region14: #{classifier_forward.1} parent=1 // pred_check
      _
    $region15: #{classifier_forward.1} parent=1 // pred_check_branch
      %46 = sbr.rel (0) target = $region17
    $region16: #{classifier_forward.1} parent=1 // pred_region
      %s48 = ssub.s32 64, 64
      %49 = vsyncadd [#allocation9], %s48
      %s51 = sshll.u32 [#allocation8], 4
      %s52 = int_to_ptr.vmem [resolvable:$true] %s51
      %54 = dma.hbm_to_vmem [thread:$0]  %s3, 64, %s52, [#allocation9]
    $region17: #{classifier_forward.1} parent=1 // pred_fallthru
      _
    // Predicated region
    $region18: #{classifier_forward.1} parent=1 // pred_check
      _
    $region19: #{classifier_forward.1} parent=1 // pred_check_branch
      %56 = sbr.rel (0) target = $region21
    $region20: #{classifier_forward.1} parent=1 // pred_region
      _
    $region21: #{classifier_forward.1} parent=1 // pred_fallthru
      _
    // Predicated region
    $region22: #{classifier_forward.1} parent=1 // pred_check
      _
    $region23: #{classifier_forward.1} parent=1 // pred_check_branch
      %58 = sbr.rel (0) target = $region25
    $region24: #{classifier_forward.1} parent=1 // pred_region
      %59 = dma.done [#allocation4], 2048
    $region25: #{classifier_forward.1} parent=1 // pred_fallthru
      _
    // Predicated region
    $region26: #{classifier_forward.1} parent=1 // pred_check
      _
    $region27: #{classifier_forward.1} parent=1 // pred_check_branch
      %61 = sbr.rel (0) target = $region29
    $region28: #{classifier_forward.1} parent=1 // pred_region
      %62 = dma.done [#allocation6], 131072
    $region29: #{classifier_forward.1} parent=1 // pred_fallthru
      _
    // Predicated region
    $region30: #{classifier_forward.1} parent=1 // pred_check
      _
    $region31: #{classifier_forward.1} parent=1 // pred_check_branch
      %64 = sbr.rel (0) target = $region33
    $region32: #{classifier_forward.1} parent=1 // pred_region
      %65 = dma.done [#allocation6], 64
    $region33: #{classifier_forward.1} parent=1 // pred_fallthru
      _
    // Predicated region
    $region34: #{classifier_forward.1} parent=1 // pred_check
      _
    $region35: #{classifier_forward.1} parent=1 // pred_check_branch
      %67 = sbr.rel (0) target = $region37
    $region36: #{classifier_forward.1} parent=1 // pred_region
      %68 = dma.done [#allocation9], 64
    $region37: #{classifier_forward.1} parent=1 // pred_fallthru
      _
    %p69 = scmp.eq.s32.totalorder 0, 0
    // Predicated region
    $region38: #{classifier_forward.1} parent=1 // pred_check
      %p70 = pneg %p69
    $region39: #{classifier_forward.1} parent=1 // pred_check_branch
      %72 = sbr.rel (%p70) target = $region41
    $region40: #{classifier_forward.1} parent=1 // pred_region
      %73 = vst [vmem:[#allocation2] sm:$0xff] 0.0
      %74 = vst [vmem:[#allocation2 + $0x8] sm:$0xff] 0.0
      %75 = vst [vmem:[#allocation2 + $0x10] sm:$0xff] 0.0
      %76 = vst [vmem:[#allocation2 + $0x18] sm:$0xff] 0.0
    $region41: #{classifier_forward.1} parent=1 // pred_fallthru
      _
    %v77 = vld [vmem:[#allocation2] sm:$0xff]
    %v78 = vld [vmem:[#allocation2 + $0x8] sm:$0xff]
    %v79 = vld [vmem:[#allocation2 + $0x10] sm:$0xff]
    %v80 = vld [vmem:[#allocation2 + $0x18] sm:$0xff]
    %v81 = vld [vmem:[#allocation3] sm:$0xff]
    %v82 = vld [vmem:[#allocation3 + $0x8] sm:$0xff]
    %v83 = vld [vmem:[#allocation3 + $0x10] sm:$0xff]
    %v84 = vld [vmem:[#allocation3 + $0x18] sm:$0xff]
    %v85 = vld [vmem:[#allocation3 + $0x20] sm:$0xff]
    %v86 = vld [vmem:[#allocation3 + $0x28] sm:$0xff]
    %v87 = vld [vmem:[#allocation3 + $0x30] sm:$0xff]
    %v88 = vld [vmem:[#allocation3 + $0x38] sm:$0xff]
    %v89 = vld [vmem:[#allocation3 + $0x40] sm:$0xff]
    %v90 = vld [vmem:[#allocation3 + $0x48] sm:$0xff]
    %v91 = vld [vmem:[#allocation3 + $0x50] sm:$0xff]
    %v92 = vld [vmem:[#allocation3 + $0x58] sm:$0xff]
    %v93 = vld [vmem:[#allocation3 + $0x60] sm:$0xff]
    %v94 = vld [vmem:[#allocation3 + $0x68] sm:$0xff]
    %v95 = vld [vmem:[#allocation3 + $0x70] sm:$0xff]
    %v96 = vld [vmem:[#allocation3 + $0x78] sm:$0xff]
    %v97 = vld [vmem:[#allocation5] sm:$0xff]
    %v98 = vld [vmem:[#allocation5 + $0x8] sm:$0xff]
    %v99 = vld [vmem:[#allocation5 + $0x10] sm:$0xff]
    %v100 = vld [vmem:[#allocation5 + $0x18] sm:$0xff]
    %v101 = vld [vmem:[#allocation5 + $0x20] sm:$0xff]
    %v102 = vld [vmem:[#allocation5 + $0x28] sm:$0xff]
    %v103 = vld [vmem:[#allocation5 + $0x30] sm:$0xff]
    %v104 = vld [vmem:[#allocation5 + $0x38] sm:$0xff]
    %v105 = vld [vmem:[#allocation5 + $0x40] sm:$0xff]
    %v106 = vld [vmem:[#allocation5 + $0x48] sm:$0xff]
    %v107 = vld [vmem:[#allocation5 + $0x50] sm:$0xff]
    %v108 = vld [vmem:[#allocation5 + $0x58] sm:$0xff]
    %v109 = vld [vmem:[#allocation5 + $0x60] sm:$0xff]
    %v110 = vld [vmem:[#allocation5 + $0x68] sm:$0xff]
    %v111 = vld [vmem:[#allocation5 + $0x70] sm:$0xff]
    %v112 = vld [vmem:[#allocation5 + $0x78] sm:$0xff]
    %v113 = vld [vmem:[#allocation5 + $0x80] sm:$0xff]
    %v114 = vld [vmem:[#allocation5 + $0x88] sm:$0xff]
    %v115 = vld [vmem:[#allocation5 + $0x90] sm:$0xff]
    %v116 = vld [vmem:[#allocation5 + $0x98] sm:$0xff]
    %v117 = vld [vmem:[#allocation5 + $0xa0] sm:$0xff]
    %v118 = vld [vmem:[#allocation5 + $0xa8] sm:$0xff]
    %v119 = vld [vmem:[#allocation5 + $0xb0] sm:$0xff]
    %v120 = vld [vmem:[#allocation5 + $0xb8] sm:$0xff]
    %v121 = vld [vmem:[#allocation5 + $0xc0] sm:$0xff]
    %v122 = vld [vmem:[#allocation5 + $0xc8] sm:$0xff]
    %v123 = vld [vmem:[#allocation5 + $0xd0] sm:$0xff]
    %v124 = vld [vmem:[#allocation5 + $0xd8] sm:$0xff]
    %v125 = vld [vmem:[#allocation5 + $0xe0] sm:$0xff]
    %v126 = vld [vmem:[#allocation5 + $0xe8] sm:$0xff]
    %v127 = vld [vmem:[#allocation5 + $0xf0] sm:$0xff]
    %v128 = vld [vmem:[#allocation5 + $0xf8] sm:$0xff]
    %v129 = vld [vmem:[#allocation5 + $0x100] sm:$0xff]
    %v130 = vld [vmem:[#allocation5 + $0x108] sm:$0xff]
    %v131 = vld [vmem:[#allocation5 + $0x110] sm:$0xff]
    %v132 = vld [vmem:[#allocation5 + $0x118] sm:$0xff]
    %v133 = vld [vmem:[#allocation5 + $0x120] sm:$0xff]
    %v134 = vld [vmem:[#allocation5 + $0x128] sm:$0xff]
    %v135 = vld [vmem:[#allocation5 + $0x130] sm:$0xff]
    %v136 = vld [vmem:[#allocation5 + $0x138] sm:$0xff]
    %v137 = vld [vmem:[#allocation5 + $0x140] sm:$0xff]
    %v138 = vld [vmem:[#allocation5 + $0x148] sm:$0xff]
    %v139 = vld [vmem:[#allocation5 + $0x150] sm:$0xff]
    %v140 = vld [vmem:[#allocation5 + $0x158] sm:$0xff]
    %v141 = vld [vmem:[#allocation5 + $0x160] sm:$0xff]
    %v142 = vld [vmem:[#allocation5 + $0x168] sm:$0xff]
    %v143 = vld [vmem:[#allocation5 + $0x170] sm:$0xff]
    %v144 = vld [vmem:[#allocation5 + $0x178] sm:$0xff]
    %v145 = vld [vmem:[#allocation5 + $0x180] sm:$0xff]
    %v146 = vld [vmem:[#allocation5 + $0x188] sm:$0xff]
    %v147 = vld [vmem:[#allocation5 + $0x190] sm:$0xff]
    %v148 = vld [vmem:[#allocation5 + $0x198] sm:$0xff]
    %v149 = vld [vmem:[#allocation5 + $0x1a0] sm:$0xff]
    %v150 = vld [vmem:[#allocation5 + $0x1a8] sm:$0xff]
    %v151 = vld [vmem:[#allocation5 + $0x1b0] sm:$0xff]
    %v152 = vld [vmem:[#allocation5 + $0x1b8] sm:$0xff]
    %v153 = vld [vmem:[#allocation5 + $0x1c0] sm:$0xff]
    %v154 = vld [vmem:[#allocation5 + $0x1c8] sm:$0xff]
    %v155 = vld [vmem:[#allocation5 + $0x1d0] sm:$0xff]
    %v156 = vld [vmem:[#allocation5 + $0x1d8] sm:$0xff]
    %v157 = vld [vmem:[#allocation5 + $0x1e0] sm:$0xff]
    %v158 = vld [vmem:[#allocation5 + $0x1e8] sm:$0xff]
    %v159 = vld [vmem:[#allocation5 + $0x1f0] sm:$0xff]
    %v160 = vld [vmem:[#allocation5 + $0x1f8] sm:$0xff]
    %v161 = vld [vmem:[#allocation5 + $0x200] sm:$0xff]
    %v162 = vld [vmem:[#allocation5 + $0x208] sm:$0xff]
    %v163 = vld [vmem:[#allocation5 + $0x210] sm:$0xff]
    %v164 = vld [vmem:[#allocation5 + $0x218] sm:$0xff]
    %v165 = vld [vmem:[#allocation5 + $0x220] sm:$0xff]
    %v166 = vld [vmem:[#allocation5 + $0x228] sm:$0xff]
    %v167 = vld [vmem:[#allocation5 + $0x230] sm:$0xff]
    %v168 = vld [vmem:[#allocation5 + $0x238] sm:$0xff]
    %v169 = vld [vmem:[#allocation5 + $0x240] sm:$0xff]
    %v170 = vld [vmem:[#allocation5 + $0x248] sm:$0xff]
    %v171 = vld [vmem:[#allocation5 + $0x250] sm:$0xff]
    %v172 = vld [vmem:[#allocation5 + $0x258] sm:$0xff]
    %v173 = vld [vmem:[#allocation5 + $0x260] sm:$0xff]
    %v174 = vld [vmem:[#allocation5 + $0x268] sm:$0xff]
    %v175 = vld [vmem:[#allocation5 + $0x270] sm:$0xff]
    %v176 = vld [vmem:[#allocation5 + $0x278] sm:$0xff]
    %v177 = vld [vmem:[#allocation5 + $0x280] sm:$0xff]
    %v178 = vld [vmem:[#allocation5 + $0x288] sm:$0xff]
    %v179 = vld [vmem:[#allocation5 + $0x290] sm:$0xff]
    %v180 = vld [vmem:[#allocation5 + $0x298] sm:$0xff]
    %v181 = vld [vmem:[#allocation5 + $0x2a0] sm:$0xff]
    %v182 = vld [vmem:[#allocation5 + $0x2a8] sm:$0xff]
    %v183 = vld [vmem:[#allocation5 + $0x2b0] sm:$0xff]
    %v184 = vld [vmem:[#allocation5 + $0x2b8] sm:$0xff]
    %v185 = vld [vmem:[#allocation5 + $0x2c0] sm:$0xff]
    %v186 = vld [vmem:[#allocation5 + $0x2c8] sm:$0xff]
    %v187 = vld [vmem:[#allocation5 + $0x2d0] sm:$0xff]
    %v188 = vld [vmem:[#allocation5 + $0x2d8] sm:$0xff]
    %v189 = vld [vmem:[#allocation5 + $0x2e0] sm:$0xff]
    %v190 = vld [vmem:[#allocation5 + $0x2e8] sm:$0xff]
    %v191 = vld [vmem:[#allocation5 + $0x2f0] sm:$0xff]
    %v192 = vld [vmem:[#allocation5 + $0x2f8] sm:$0xff]
    %v193 = vld [vmem:[#allocation5 + $0x300] sm:$0xff]
    %v194 = vld [vmem:[#allocation5 + $0x308] sm:$0xff]
    %v195 = vld [vmem:[#allocation5 + $0x310] sm:$0xff]
    %v196 = vld [vmem:[#allocation5 + $0x318] sm:$0xff]
    %v197 = vld [vmem:[#allocation5 + $0x320] sm:$0xff]
    %v198 = vld [vmem:[#allocation5 + $0x328] sm:$0xff]
    %v199 = vld [vmem:[#allocation5 + $0x330] sm:$0xff]
    %v200 = vld [vmem:[#allocation5 + $0x338] sm:$0xff]
    %v201 = vld [vmem:[#allocation5 + $0x340] sm:$0xff]
    %v202 = vld [vmem:[#allocation5 + $0x348] sm:$0xff]
    %v203 = vld [vmem:[#allocation5 + $0x350] sm:$0xff]
    %v204 = vld [vmem:[#allocation5 + $0x358] sm:$0xff]
    %v205 = vld [vmem:[#allocation5 + $0x360] sm:$0xff]
    %v206 = vld [vmem:[#allocation5 + $0x368] sm:$0xff]
    %v207 = vld [vmem:[#allocation5 + $0x370] sm:$0xff]
    %v208 = vld [vmem:[#allocation5 + $0x378] sm:$0xff]
    %v209 = vld [vmem:[#allocation5 + $0x380] sm:$0xff]
    %v210 = vld [vmem:[#allocation5 + $0x388] sm:$0xff]
    %v211 = vld [vmem:[#allocation5 + $0x390] sm:$0xff]
    %v212 = vld [vmem:[#allocation5 + $0x398] sm:$0xff]
    %v213 = vld [vmem:[#allocation5 + $0x3a0] sm:$0xff]
    %v214 = vld [vmem:[#allocation5 + $0x3a8] sm:$0xff]
    %v215 = vld [vmem:[#allocation5 + $0x3b0] sm:$0xff]
    %v216 = vld [vmem:[#allocation5 + $0x3b8] sm:$0xff]
    %v217 = vld [vmem:[#allocation5 + $0x3c0] sm:$0xff]
    %v218 = vld [vmem:[#allocation5 + $0x3c8] sm:$0xff]
    %v219 = vld [vmem:[#allocation5 + $0x3d0] sm:$0xff]
    %v220 = vld [vmem:[#allocation5 + $0x3d8] sm:$0xff]
    %v221 = vld [vmem:[#allocation5 + $0x3e0] sm:$0xff]
    %v222 = vld [vmem:[#allocation5 + $0x3e8] sm:$0xff]
    %v223 = vld [vmem:[#allocation5 + $0x3f0] sm:$0xff]
    %v224 = vld [vmem:[#allocation5 + $0x3f8] sm:$0xff]
    %v225 = vld [vmem:[#allocation5 + $0x400] sm:$0xff]
    %v226 = vld [vmem:[#allocation5 + $0x408] sm:$0xff]
    %v227 = vld [vmem:[#allocation5 + $0x410] sm:$0xff]
    %v228 = vld [vmem:[#allocation5 + $0x418] sm:$0xff]
    %v229 = vld [vmem:[#allocation5 + $0x420] sm:$0xff]
    %v230 = vld [vmem:[#allocation5 + $0x428] sm:$0xff]
    %v231 = vld [vmem:[#allocation5 + $0x430] sm:$0xff]
    %v232 = vld [vmem:[#allocation5 + $0x438] sm:$0xff]
    %v233 = vld [vmem:[#allocation5 + $0x440] sm:$0xff]
    %v234 = vld [vmem:[#allocation5 + $0x448] sm:$0xff]
    %v235 = vld [vmem:[#allocation5 + $0x450] sm:$0xff]
    %v236 = vld [vmem:[#allocation5 + $0x458] sm:$0xff]
    %v237 = vld [vmem:[#allocation5 + $0x460] sm:$0xff]
    %v238 = vld [vmem:[#allocation5 + $0x468] sm:$0xff]
    %v239 = vld [vmem:[#allocation5 + $0x470] sm:$0xff]
    %v240 = vld [vmem:[#allocation5 + $0x478] sm:$0xff]
    %v241 = vld [vmem:[#allocation5 + $0x480] sm:$0xff]
    %v242 = vld [vmem:[#allocation5 + $0x488] sm:$0xff]
    %v243 = vld [vmem:[#allocation5 + $0x490] sm:$0xff]
    %v244 = vld [vmem:[#allocation5 + $0x498] sm:$0xff]
    %v245 = vld [vmem:[#allocation5 + $0x4a0] sm:$0xff]
    %v246 = vld [vmem:[#allocation5 + $0x4a8] sm:$0xff]
    %v247 = vld [vmem:[#allocation5 + $0x4b0] sm:$0xff]
    %v248 = vld [vmem:[#allocation5 + $0x4b8] sm:$0xff]
    %v249 = vld [vmem:[#allocation5 + $0x4c0] sm:$0xff]
    %v250 = vld [vmem:[#allocation5 + $0x4c8] sm:$0xff]
    %v251 = vld [vmem:[#allocation5 + $0x4d0] sm:$0xff]
    %v252 = vld [vmem:[#allocation5 + $0x4d8] sm:$0xff]
    %v253 = vld [vmem:[#allocation5 + $0x4e0] sm:$0xff]
    %v254 = vld [vmem:[#allocation5 + $0x4e8] sm:$0xff]
    %v255 = vld [vmem:[#allocation5 + $0x4f0] sm:$0xff]
    %v256 = vld [vmem:[#allocation5 + $0x4f8] sm:$0xff]
    %v257 = vld [vmem:[#allocation5 + $0x500] sm:$0xff]
    %v258 = vld [vmem:[#allocation5 + $0x508] sm:$0xff]
    %v259 = vld [vmem:[#allocation5 + $0x510] sm:$0xff]
    %v260 = vld [vmem:[#allocation5 + $0x518] sm:$0xff]
    %v261 = vld [vmem:[#allocation5 + $0x520] sm:$0xff]
    %v262 = vld [vmem:[#allocation5 + $0x528] sm:$0xff]
    %v263 = vld [vmem:[#allocation5 + $0x530] sm:$0xff]
    %v264 = vld [vmem:[#allocation5 + $0x538] sm:$0xff]
    %v265 = vld [vmem:[#allocation5 + $0x540] sm:$0xff]
    %v266 = vld [vmem:[#allocation5 + $0x548] sm:$0xff]
    %v267 = vld [vmem:[#allocation5 + $0x550] sm:$0xff]
    %v268 = vld [vmem:[#allocation5 + $0x558] sm:$0xff]
    %v269 = vld [vmem:[#allocation5 + $0x560] sm:$0xff]
    %v270 = vld [vmem:[#allocation5 + $0x568] sm:$0xff]
    %v271 = vld [vmem:[#allocation5 + $0x570] sm:$0xff]
    %v272 = vld [vmem:[#allocation5 + $0x578] sm:$0xff]
    %v273 = vld [vmem:[#allocation5 + $0x580] sm:$0xff]
    %v274 = vld [vmem:[#allocation5 + $0x588] sm:$0xff]
    %v275 = vld [vmem:[#allocation5 + $0x590] sm:$0xff]
    %v276 = vld [vmem:[#allocation5 + $0x598] sm:$0xff]
    %v277 = vld [vmem:[#allocation5 + $0x5a0] sm:$0xff]
    %v278 = vld [vmem:[#allocation5 + $0x5a8] sm:$0xff]
    %v279 = vld [vmem:[#allocation5 + $0x5b0] sm:$0xff]
    %v280 = vld [vmem:[#allocation5 + $0x5b8] sm:$0xff]
    %v281 = vld [vmem:[#allocation5 + $0x5c0] sm:$0xff]
    %v282 = vld [vmem:[#allocation5 + $0x5c8] sm:$0xff]
    %v283 = vld [vmem:[#allocation5 + $0x5d0] sm:$0xff]
    %v284 = vld [vmem:[#allocation5 + $0x5d8] sm:$0xff]
    %v285 = vld [vmem:[#allocation5 + $0x5e0] sm:$0xff]
    %v286 = vld [vmem:[#allocation5 + $0x5e8] sm:$0xff]
    %v287 = vld [vmem:[#allocation5 + $0x5f0] sm:$0xff]
    %v288 = vld [vmem:[#allocation5 + $0x5f8] sm:$0xff]
    %v289 = vld [vmem:[#allocation5 + $0x600] sm:$0xff]
    %v290 = vld [vmem:[#allocation5 + $0x608] sm:$0xff]
    %v291 = vld [vmem:[#allocation5 + $0x610] sm:$0xff]
    %v292 = vld [vmem:[#allocation5 + $0x618] sm:$0xff]
    %v293 = vld [vmem:[#allocation5 + $0x620] sm:$0xff]
    %v294 = vld [vmem:[#allocation5 + $0x628] sm:$0xff]
    %v295 = vld [vmem:[#allocation5 + $0x630] sm:$0xff]
    %v296 = vld [vmem:[#allocation5 + $0x638] sm:$0xff]
    %v297 = vld [vmem:[#allocation5 + $0x640] sm:$0xff]
    %v298 = vld [vmem:[#allocation5 + $0x648] sm:$0xff]
    %v299 = vld [vmem:[#allocation5 + $0x650] sm:$0xff]
    %v300 = vld [vmem:[#allocation5 + $0x658] sm:$0xff]
    %v301 = vld [vmem:[#allocation5 + $0x660] sm:$0xff]
    %v302 = vld [vmem:[#allocation5 + $0x668] sm:$0xff]
    %v303 = vld [vmem:[#allocation5 + $0x670] sm:$0xff]
    %v304 = vld [vmem:[#allocation5 + $0x678] sm:$0xff]
    %v305 = vld [vmem:[#allocation5 + $0x680] sm:$0xff]
    %v306 = vld [vmem:[#allocation5 + $0x688] sm:$0xff]
    %v307 = vld [vmem:[#allocation5 + $0x690] sm:$0xff]
    %v308 = vld [vmem:[#allocation5 + $0x698] sm:$0xff]
    %v309 = vld [vmem:[#allocation5 + $0x6a0] sm:$0xff]
    %v310 = vld [vmem:[#allocation5 + $0x6a8] sm:$0xff]
    %v311 = vld [vmem:[#allocation5 + $0x6b0] sm:$0xff]
    %v312 = vld [vmem:[#allocation5 + $0x6b8] sm:$0xff]
    %v313 = vld [vmem:[#allocation5 + $0x6c0] sm:$0xff]
    %v314 = vld [vmem:[#allocation5 + $0x6c8] sm:$0xff]
    %v315 = vld [vmem:[#allocation5 + $0x6d0] sm:$0xff]
    %v316 = vld [vmem:[#allocation5 + $0x6d8] sm:$0xff]
    %v317 = vld [vmem:[#allocation5 + $0x6e0] sm:$0xff]
    %v318 = vld [vmem:[#allocation5 + $0x6e8] sm:$0xff]
    %v319 = vld [vmem:[#allocation5 + $0x6f0] sm:$0xff]
    %v320 = vld [vmem:[#allocation5 + $0x6f8] sm:$0xff]
    %v321 = vld [vmem:[#allocation5 + $0x700] sm:$0xff]
    %v322 = vld [vmem:[#allocation5 + $0x708] sm:$0xff]
    %v323 = vld [vmem:[#allocation5 + $0x710] sm:$0xff]
    %v324 = vld [vmem:[#allocation5 + $0x718] sm:$0xff]
    %v325 = vld [vmem:[#allocation5 + $0x720] sm:$0xff]
    %v326 = vld [vmem:[#allocation5 + $0x728] sm:$0xff]
    %v327 = vld [vmem:[#allocation5 + $0x730] sm:$0xff]
    %v328 = vld [vmem:[#allocation5 + $0x738] sm:$0xff]
    %v329 = vld [vmem:[#allocation5 + $0x740] sm:$0xff]
    %v330 = vld [vmem:[#allocation5 + $0x748] sm:$0xff]
    %v331 = vld [vmem:[#allocation5 + $0x750] sm:$0xff]
    %v332 = vld [vmem:[#allocation5 + $0x758] sm:$0xff]
    %v333 = vld [vmem:[#allocation5 + $0x760] sm:$0xff]
    %v334 = vld [vmem:[#allocation5 + $0x768] sm:$0xff]
    %v335 = vld [vmem:[#allocation5 + $0x770] sm:$0xff]
    %v336 = vld [vmem:[#allocation5 + $0x778] sm:$0xff]
    %v337 = vld [vmem:[#allocation5 + $0x780] sm:$0xff]
    %v338 = vld [vmem:[#allocation5 + $0x788] sm:$0xff]
    %v339 = vld [vmem:[#allocation5 + $0x790] sm:$0xff]
    %v340 = vld [vmem:[#allocation5 + $0x798] sm:$0xff]
    %v341 = vld [vmem:[#allocation5 + $0x7a0] sm:$0xff]
    %v342 = vld [vmem:[#allocation5 + $0x7a8] sm:$0xff]
    %v343 = vld [vmem:[#allocation5 + $0x7b0] sm:$0xff]
    %v344 = vld [vmem:[#allocation5 + $0x7b8] sm:$0xff]
    %v345 = vld [vmem:[#allocation5 + $0x7c0] sm:$0xff]
    %v346 = vld [vmem:[#allocation5 + $0x7c8] sm:$0xff]
    %v347 = vld [vmem:[#allocation5 + $0x7d0] sm:$0xff]
    %v348 = vld [vmem:[#allocation5 + $0x7d8] sm:$0xff]
    %v349 = vld [vmem:[#allocation5 + $0x7e0] sm:$0xff]
    %v350 = vld [vmem:[#allocation5 + $0x7e8] sm:$0xff]
    %v351 = vld [vmem:[#allocation5 + $0x7f0] sm:$0xff]
    %v352 = vld [vmem:[#allocation5 + $0x7f8] sm:$0xff]
    %v353 = vld [vmem:[#allocation5 + $0x800] sm:$0xff]
    %v354 = vld [vmem:[#allocation5 + $0x808] sm:$0xff]
    %v355 = vld [vmem:[#allocation5 + $0x810] sm:$0xff]
    %v356 = vld [vmem:[#allocation5 + $0x818] sm:$0xff]
    %v357 = vld [vmem:[#allocation5 + $0x820] sm:$0xff]
    %v358 = vld [vmem:[#allocation5 + $0x828] sm:$0xff]
    %v359 = vld [vmem:[#allocation5 + $0x830] sm:$0xff]
    %v360 = vld [vmem:[#allocation5 + $0x838] sm:$0xff]
    %v361 = vld [vmem:[#allocation5 + $0x840] sm:$0xff]
    %v362 = vld [vmem:[#allocation5 + $0x848] sm:$0xff]
    %v363 = vld [vmem:[#allocation5 + $0x850] sm:$0xff]
    %v364 = vld [vmem:[#allocation5 + $0x858] sm:$0xff]
    %v365 = vld [vmem:[#allocation5 + $0x860] sm:$0xff]
    %v366 = vld [vmem:[#allocation5 + $0x868] sm:$0xff]
    %v367 = vld [vmem:[#allocation5 + $0x870] sm:$0xff]
    %v368 = vld [vmem:[#allocation5 + $0x878] sm:$0xff]
    %v369 = vld [vmem:[#allocation5 + $0x880] sm:$0xff]
    %v370 = vld [vmem:[#allocation5 + $0x888] sm:$0xff]
    %v371 = vld [vmem:[#allocation5 + $0x890] sm:$0xff]
    %v372 = vld [vmem:[#allocation5 + $0x898] sm:$0xff]
    %v373 = vld [vmem:[#allocation5 + $0x8a0] sm:$0xff]
    %v374 = vld [vmem:[#allocation5 + $0x8a8] sm:$0xff]
    %v375 = vld [vmem:[#allocation5 + $0x8b0] sm:$0xff]
    %v376 = vld [vmem:[#allocation5 + $0x8b8] sm:$0xff]
    %v377 = vld [vmem:[#allocation5 + $0x8c0] sm:$0xff]
    %v378 = vld [vmem:[#allocation5 + $0x8c8] sm:$0xff]
    %v379 = vld [vmem:[#allocation5 + $0x8d0] sm:$0xff]
    %v380 = vld [vmem:[#allocation5 + $0x8d8] sm:$0xff]
    %v381 = vld [vmem:[#allocation5 + $0x8e0] sm:$0xff]
    %v382 = vld [vmem:[#allocation5 + $0x8e8] sm:$0xff]
    %v383 = vld [vmem:[#allocation5 + $0x8f0] sm:$0xff]
    %v384 = vld [vmem:[#allocation5 + $0x8f8] sm:$0xff]
    %v385 = vld [vmem:[#allocation5 + $0x900] sm:$0xff]
    %v386 = vld [vmem:[#allocation5 + $0x908] sm:$0xff]
    %v387 = vld [vmem:[#allocation5 + $0x910] sm:$0xff]
    %v388 = vld [vmem:[#allocation5 + $0x918] sm:$0xff]
    %v389 = vld [vmem:[#allocation5 + $0x920] sm:$0xff]
    %v390 = vld [vmem:[#allocation5 + $0x928] sm:$0xff]
    %v391 = vld [vmem:[#allocation5 + $0x930] sm:$0xff]
    %v392 = vld [vmem:[#allocation5 + $0x938] sm:$0xff]
    %v393 = vld [vmem:[#allocation5 + $0x940] sm:$0xff]
    %v394 = vld [vmem:[#allocation5 + $0x948] sm:$0xff]
    %v395 = vld [vmem:[#allocation5 + $0x950] sm:$0xff]
    %v396 = vld [vmem:[#allocation5 + $0x958] sm:$0xff]
    %v397 = vld [vmem:[#allocation5 + $0x960] sm:$0xff]
    %v398 = vld [vmem:[#allocation5 + $0x968] sm:$0xff]
    %v399 = vld [vmem:[#allocation5 + $0x970] sm:$0xff]
    %v400 = vld [vmem:[#allocation5 + $0x978] sm:$0xff]
    %v401 = vld [vmem:[#allocation5 + $0x980] sm:$0xff]
    %v402 = vld [vmem:[#allocation5 + $0x988] sm:$0xff]
    %v403 = vld [vmem:[#allocation5 + $0x990] sm:$0xff]
    %v404 = vld [vmem:[#allocation5 + $0x998] sm:$0xff]
    %v405 = vld [vmem:[#allocation5 + $0x9a0] sm:$0xff]
    %v406 = vld [vmem:[#allocation5 + $0x9a8] sm:$0xff]
    %v407 = vld [vmem:[#allocation5 + $0x9b0] sm:$0xff]
    %v408 = vld [vmem:[#allocation5 + $0x9b8] sm:$0xff]
    %v409 = vld [vmem:[#allocation5 + $0x9c0] sm:$0xff]
    %v410 = vld [vmem:[#allocation5 + $0x9c8] sm:$0xff]
    %v411 = vld [vmem:[#allocation5 + $0x9d0] sm:$0xff]
    %v412 = vld [vmem:[#allocation5 + $0x9d8] sm:$0xff]
    %v413 = vld [vmem:[#allocation5 + $0x9e0] sm:$0xff]
    %v414 = vld [vmem:[#allocation5 + $0x9e8] sm:$0xff]
    %v415 = vld [vmem:[#allocation5 + $0x9f0] sm:$0xff]
    %v416 = vld [vmem:[#allocation5 + $0x9f8] sm:$0xff]
    %v417 = vld [vmem:[#allocation5 + $0xa00] sm:$0xff]
    %v418 = vld [vmem:[#allocation5 + $0xa08] sm:$0xff]
    %v419 = vld [vmem:[#allocation5 + $0xa10] sm:$0xff]
    %v420 = vld [vmem:[#allocation5 + $0xa18] sm:$0xff]
    %v421 = vld [vmem:[#allocation5 + $0xa20] sm:$0xff]
    %v422 = vld [vmem:[#allocation5 + $0xa28] sm:$0xff]
    %v423 = vld [vmem:[#allocation5 + $0xa30] sm:$0xff]
    %v424 = vld [vmem:[#allocation5 + $0xa38] sm:$0xff]
    %v425 = vld [vmem:[#allocation5 + $0xa40] sm:$0xff]
    %v426 = vld [vmem:[#allocation5 + $0xa48] sm:$0xff]
    %v427 = vld [vmem:[#allocation5 + $0xa50] sm:$0xff]
    %v428 = vld [vmem:[#allocation5 + $0xa58] sm:$0xff]
    %v429 = vld [vmem:[#allocation5 + $0xa60] sm:$0xff]
    %v430 = vld [vmem:[#allocation5 + $0xa68] sm:$0xff]
    %v431 = vld [vmem:[#allocation5 + $0xa70] sm:$0xff]
    %v432 = vld [vmem:[#allocation5 + $0xa78] sm:$0xff]
    %v433 = vld [vmem:[#allocation5 + $0xa80] sm:$0xff]
    %v434 = vld [vmem:[#allocation5 + $0xa88] sm:$0xff]
    %v435 = vld [vmem:[#allocation5 + $0xa90] sm:$0xff]
    %v436 = vld [vmem:[#allocation5 + $0xa98] sm:$0xff]
    %v437 = vld [vmem:[#allocation5 + $0xaa0] sm:$0xff]
    %v438 = vld [vmem:[#allocation5 + $0xaa8] sm:$0xff]
    %v439 = vld [vmem:[#allocation5 + $0xab0] sm:$0xff]
    %v440 = vld [vmem:[#allocation5 + $0xab8] sm:$0xff]
    %v441 = vld [vmem:[#allocation5 + $0xac0] sm:$0xff]
    %v442 = vld [vmem:[#allocation5 + $0xac8] sm:$0xff]
    %v443 = vld [vmem:[#allocation5 + $0xad0] sm:$0xff]
    %v444 = vld [vmem:[#allocation5 + $0xad8] sm:$0xff]
    %v445 = vld [vmem:[#allocation5 + $0xae0] sm:$0xff]
    %v446 = vld [vmem:[#allocation5 + $0xae8] sm:$0xff]
    %v447 = vld [vmem:[#allocation5 + $0xaf0] sm:$0xff]
    %v448 = vld [vmem:[#allocation5 + $0xaf8] sm:$0xff]
    %v449 = vld [vmem:[#allocation5 + $0xb00] sm:$0xff]
    %v450 = vld [vmem:[#allocation5 + $0xb08] sm:$0xff]
    %v451 = vld [vmem:[#allocation5 + $0xb10] sm:$0xff]
    %v452 = vld [vmem:[#allocation5 + $0xb18] sm:$0xff]
    %v453 = vld [vmem:[#allocation5 + $0xb20] sm:$0xff]
    %v454 = vld [vmem:[#allocation5 + $0xb28] sm:$0xff]
    %v455 = vld [vmem:[#allocation5 + $0xb30] sm:$0xff]
    %v456 = vld [vmem:[#allocation5 + $0xb38] sm:$0xff]
    %v457 = vld [vmem:[#allocation5 + $0xb40] sm:$0xff]
    %v458 = vld [vmem:[#allocation5 + $0xb48] sm:$0xff]
    %v459 = vld [vmem:[#allocation5 + $0xb50] sm:$0xff]
    %v460 = vld [vmem:[#allocation5 + $0xb58] sm:$0xff]
    %v461 = vld [vmem:[#allocation5 + $0xb60] sm:$0xff]
    %v462 = vld [vmem:[#allocation5 + $0xb68] sm:$0xff]
    %v463 = vld [vmem:[#allocation5 + $0xb70] sm:$0xff]
    %v464 = vld [vmem:[#allocation5 + $0xb78] sm:$0xff]
    %v465 = vld [vmem:[#allocation5 + $0xb80] sm:$0xff]
    %v466 = vld [vmem:[#allocation5 + $0xb88] sm:$0xff]
    %v467 = vld [vmem:[#allocation5 + $0xb90] sm:$0xff]
    %v468 = vld [vmem:[#allocation5 + $0xb98] sm:$0xff]
    %v469 = vld [vmem:[#allocation5 + $0xba0] sm:$0xff]
    %v470 = vld [vmem:[#allocation5 + $0xba8] sm:$0xff]
    %v471 = vld [vmem:[#allocation5 + $0xbb0] sm:$0xff]
    %v472 = vld [vmem:[#allocation5 + $0xbb8] sm:$0xff]
    %v473 = vld [vmem:[#allocation5 + $0xbc0] sm:$0xff]
    %v474 = vld [vmem:[#allocation5 + $0xbc8] sm:$0xff]
    %v475 = vld [vmem:[#allocation5 + $0xbd0] sm:$0xff]
    %v476 = vld [vmem:[#allocation5 + $0xbd8] sm:$0xff]
    %v477 = vld [vmem:[#allocation5 + $0xbe0] sm:$0xff]
    %v478 = vld [vmem:[#allocation5 + $0xbe8] sm:$0xff]
    %v479 = vld [vmem:[#allocation5 + $0xbf0] sm:$0xff]
    %v480 = vld [vmem:[#allocation5 + $0xbf8] sm:$0xff]
    %v481 = vld [vmem:[#allocation5 + $0xc00] sm:$0xff]
    %v482 = vld [vmem:[#allocation5 + $0xc08] sm:$0xff]
    %v483 = vld [vmem:[#allocation5 + $0xc10] sm:$0xff]
    %v484 = vld [vmem:[#allocation5 + $0xc18] sm:$0xff]
    %v485 = vld [vmem:[#allocation5 + $0xc20] sm:$0xff]
    %v486 = vld [vmem:[#allocation5 + $0xc28] sm:$0xff]
    %v487 = vld [vmem:[#allocation5 + $0xc30] sm:$0xff]
    %v488 = vld [vmem:[#allocation5 + $0xc38] sm:$0xff]
    %v489 = vld [vmem:[#allocation5 + $0xc40] sm:$0xff]
    %v490 = vld [vmem:[#allocation5 + $0xc48] sm:$0xff]
    %v491 = vld [vmem:[#allocation5 + $0xc50] sm:$0xff]
    %v492 = vld [vmem:[#allocation5 + $0xc58] sm:$0xff]
    %v493 = vld [vmem:[#allocation5 + $0xc60] sm:$0xff]
    %v494 = vld [vmem:[#allocation5 + $0xc68] sm:$0xff]
    %v495 = vld [vmem:[#allocation5 + $0xc70] sm:$0xff]
    %v496 = vld [vmem:[#allocation5 + $0xc78] sm:$0xff]
    %v497 = vld [vmem:[#allocation5 + $0xc80] sm:$0xff]
    %v498 = vld [vmem:[#allocation5 + $0xc88] sm:$0xff]
    %v499 = vld [vmem:[#allocation5 + $0xc90] sm:$0xff]
    %v500 = vld [vmem:[#allocation5 + $0xc98] sm:$0xff]
    %v501 = vld [vmem:[#allocation5 + $0xca0] sm:$0xff]
    %v502 = vld [vmem:[#allocation5 + $0xca8] sm:$0xff]
    %v503 = vld [vmem:[#allocation5 + $0xcb0] sm:$0xff]
    %v504 = vld [vmem:[#allocation5 + $0xcb8] sm:$0xff]
    %v505 = vld [vmem:[#allocation5 + $0xcc0] sm:$0xff]
    %v506 = vld [vmem:[#allocation5 + $0xcc8] sm:$0xff]
    %v507 = vld [vmem:[#allocation5 + $0xcd0] sm:$0xff]
    %v508 = vld [vmem:[#allocation5 + $0xcd8] sm:$0xff]
    %v509 = vld [vmem:[#allocation5 + $0xce0] sm:$0xff]
    %v510 = vld [vmem:[#allocation5 + $0xce8] sm:$0xff]
    %v511 = vld [vmem:[#allocation5 + $0xcf0] sm:$0xff]
    %v512 = vld [vmem:[#allocation5 + $0xcf8] sm:$0xff]
    %v513 = vld [vmem:[#allocation5 + $0xd00] sm:$0xff]
    %v514 = vld [vmem:[#allocation5 + $0xd08] sm:$0xff]
    %v515 = vld [vmem:[#allocation5 + $0xd10] sm:$0xff]
    %v516 = vld [vmem:[#allocation5 + $0xd18] sm:$0xff]
    %v517 = vld [vmem:[#allocation5 + $0xd20] sm:$0xff]
    %v518 = vld [vmem:[#allocation5 + $0xd28] sm:$0xff]
    %v519 = vld [vmem:[#allocation5 + $0xd30] sm:$0xff]
    %v520 = vld [vmem:[#allocation5 + $0xd38] sm:$0xff]
    %v521 = vld [vmem:[#allocation5 + $0xd40] sm:$0xff]
    %v522 = vld [vmem:[#allocation5 + $0xd48] sm:$0xff]
    %v523 = vld [vmem:[#allocation5 + $0xd50] sm:$0xff]
    %v524 = vld [vmem:[#allocation5 + $0xd58] sm:$0xff]
    %v525 = vld [vmem:[#allocation5 + $0xd60] sm:$0xff]
    %v526 = vld [vmem:[#allocation5 + $0xd68] sm:$0xff]
    %v527 = vld [vmem:[#allocation5 + $0xd70] sm:$0xff]
    %v528 = vld [vmem:[#allocation5 + $0xd78] sm:$0xff]
    %v529 = vld [vmem:[#allocation5 + $0xd80] sm:$0xff]
    %v530 = vld [vmem:[#allocation5 + $0xd88] sm:$0xff]
    %v531 = vld [vmem:[#allocation5 + $0xd90] sm:$0xff]
    %v532 = vld [vmem:[#allocation5 + $0xd98] sm:$0xff]
    %v533 = vld [vmem:[#allocation5 + $0xda0] sm:$0xff]
    %v534 = vld [vmem:[#allocation5 + $0xda8] sm:$0xff]
    %v535 = vld [vmem:[#allocation5 + $0xdb0] sm:$0xff]
    %v536 = vld [vmem:[#allocation5 + $0xdb8] sm:$0xff]
    %v537 = vld [vmem:[#allocation5 + $0xdc0] sm:$0xff]
    %v538 = vld [vmem:[#allocation5 + $0xdc8] sm:$0xff]
    %v539 = vld [vmem:[#allocation5 + $0xdd0] sm:$0xff]
    %v540 = vld [vmem:[#allocation5 + $0xdd8] sm:$0xff]
    %v541 = vld [vmem:[#allocation5 + $0xde0] sm:$0xff]
    %v542 = vld [vmem:[#allocation5 + $0xde8] sm:$0xff]
    %v543 = vld [vmem:[#allocation5 + $0xdf0] sm:$0xff]
    %v544 = vld [vmem:[#allocation5 + $0xdf8] sm:$0xff]
    %v545 = vld [vmem:[#allocation5 + $0xe00] sm:$0xff]
    %v546 = vld [vmem:[#allocation5 + $0xe08] sm:$0xff]
    %v547 = vld [vmem:[#allocation5 + $0xe10] sm:$0xff]
    %v548 = vld [vmem:[#allocation5 + $0xe18] sm:$0xff]
    %v549 = vld [vmem:[#allocation5 + $0xe20] sm:$0xff]
    %v550 = vld [vmem:[#allocation5 + $0xe28] sm:$0xff]
    %v551 = vld [vmem:[#allocation5 + $0xe30] sm:$0xff]
    %v552 = vld [vmem:[#allocation5 + $0xe38] sm:$0xff]
    %v553 = vld [vmem:[#allocation5 + $0xe40] sm:$0xff]
    %v554 = vld [vmem:[#allocation5 + $0xe48] sm:$0xff]
    %v555 = vld [vmem:[#allocation5 + $0xe50] sm:$0xff]
    %v556 = vld [vmem:[#allocation5 + $0xe58] sm:$0xff]
    %v557 = vld [vmem:[#allocation5 + $0xe60] sm:$0xff]
    %v558 = vld [vmem:[#allocation5 + $0xe68] sm:$0xff]
    %v559 = vld [vmem:[#allocation5 + $0xe70] sm:$0xff]
    %v560 = vld [vmem:[#allocation5 + $0xe78] sm:$0xff]
    %v561 = vld [vmem:[#allocation5 + $0xe80] sm:$0xff]
    %v562 = vld [vmem:[#allocation5 + $0xe88] sm:$0xff]
    %v563 = vld [vmem:[#allocation5 + $0xe90] sm:$0xff]
    %v564 = vld [vmem:[#allocation5 + $0xe98] sm:$0xff]
    %v565 = vld [vmem:[#allocation5 + $0xea0] sm:$0xff]
    %v566 = vld [vmem:[#allocation5 + $0xea8] sm:$0xff]
    %v567 = vld [vmem:[#allocation5 + $0xeb0] sm:$0xff]
    %v568 = vld [vmem:[#allocation5 + $0xeb8] sm:$0xff]
    %v569 = vld [vmem:[#allocation5 + $0xec0] sm:$0xff]
    %v570 = vld [vmem:[#allocation5 + $0xec8] sm:$0xff]
    %v571 = vld [vmem:[#allocation5 + $0xed0] sm:$0xff]
    %v572 = vld [vmem:[#allocation5 + $0xed8] sm:$0xff]
    %v573 = vld [vmem:[#allocation5 + $0xee0] sm:$0xff]
    %v574 = vld [vmem:[#allocation5 + $0xee8] sm:$0xff]
    %v575 = vld [vmem:[#allocation5 + $0xef0] sm:$0xff]
    %v576 = vld [vmem:[#allocation5 + $0xef8] sm:$0xff]
    %v577 = vld [vmem:[#allocation5 + $0xf00] sm:$0xff]
    %v578 = vld [vmem:[#allocation5 + $0xf08] sm:$0xff]
    %v579 = vld [vmem:[#allocation5 + $0xf10] sm:$0xff]
    %v580 = vld [vmem:[#allocation5 + $0xf18] sm:$0xff]
    %v581 = vld [vmem:[#allocation5 + $0xf20] sm:$0xff]
    %v582 = vld [vmem:[#allocation5 + $0xf28] sm:$0xff]
    %v583 = vld [vmem:[#allocation5 + $0xf30] sm:$0xff]
    %v584 = vld [vmem:[#allocation5 + $0xf38] sm:$0xff]
    %v585 = vld [vmem:[#allocation5 + $0xf40] sm:$0xff]
    %v586 = vld [vmem:[#allocation5 + $0xf48] sm:$0xff]
    %v587 = vld [vmem:[#allocation5 + $0xf50] sm:$0xff]
    %v588 = vld [vmem:[#allocation5 + $0xf58] sm:$0xff]
    %v589 = vld [vmem:[#allocation5 + $0xf60] sm:$0xff]
    %v590 = vld [vmem:[#allocation5 + $0xf68] sm:$0xff]
    %v591 = vld [vmem:[#allocation5 + $0xf70] sm:$0xff]
    %v592 = vld [vmem:[#allocation5 + $0xf78] sm:$0xff]
    %v593 = vld [vmem:[#allocation5 + $0xf80] sm:$0xff]
    %v594 = vld [vmem:[#allocation5 + $0xf88] sm:$0xff]
    %v595 = vld [vmem:[#allocation5 + $0xf90] sm:$0xff]
    %v596 = vld [vmem:[#allocation5 + $0xf98] sm:$0xff]
    %v597 = vld [vmem:[#allocation5 + $0xfa0] sm:$0xff]
    %v598 = vld [vmem:[#allocation5 + $0xfa8] sm:$0xff]
    %v599 = vld [vmem:[#allocation5 + $0xfb0] sm:$0xff]
    %v600 = vld [vmem:[#allocation5 + $0xfb8] sm:$0xff]
    %v601 = vld [vmem:[#allocation5 + $0xfc0] sm:$0xff]
    %v602 = vld [vmem:[#allocation5 + $0xfc8] sm:$0xff]
    %v603 = vld [vmem:[#allocation5 + $0xfd0] sm:$0xff]
    %v604 = vld [vmem:[#allocation5 + $0xfd8] sm:$0xff]
    %v605 = vld [vmem:[#allocation5 + $0xfe0] sm:$0xff]
    %v606 = vld [vmem:[#allocation5 + $0xfe8] sm:$0xff]
    %v607 = vld [vmem:[#allocation5 + $0xff0] sm:$0xff]
    %v608 = vld [vmem:[#allocation5 + $0xff8] sm:$0xff]
    %v609 = vld [vmem:[#allocation5 + $0x1000] sm:$0xff]
    %v610 = vld [vmem:[#allocation5 + $0x1008] sm:$0xff]
    %v611 = vld [vmem:[#allocation5 + $0x1010] sm:$0xff]
    %v612 = vld [vmem:[#allocation5 + $0x1018] sm:$0xff]
    %v613 = vld [vmem:[#allocation5 + $0x1020] sm:$0xff]
    %v614 = vld [vmem:[#allocation5 + $0x1028] sm:$0xff]
    %v615 = vld [vmem:[#allocation5 + $0x1030] sm:$0xff]
    %v616 = vld [vmem:[#allocation5 + $0x1038] sm:$0xff]
    %v617 = vld [vmem:[#allocation5 + $0x1040] sm:$0xff]
    %v618 = vld [vmem:[#allocation5 + $0x1048] sm:$0xff]
    %v619 = vld [vmem:[#allocation5 + $0x1050] sm:$0xff]
    %v620 = vld [vmem:[#allocation5 + $0x1058] sm:$0xff]
    %v621 = vld [vmem:[#allocation5 + $0x1060] sm:$0xff]
    %v622 = vld [vmem:[#allocation5 + $0x1068] sm:$0xff]
    %v623 = vld [vmem:[#allocation5 + $0x1070] sm:$0xff]
    %v624 = vld [vmem:[#allocation5 + $0x1078] sm:$0xff]
    %v625 = vld [vmem:[#allocation5 + $0x1080] sm:$0xff]
    %v626 = vld [vmem:[#allocation5 + $0x1088] sm:$0xff]
    %v627 = vld [vmem:[#allocation5 + $0x1090] sm:$0xff]
    %v628 = vld [vmem:[#allocation5 + $0x1098] sm:$0xff]
    %v629 = vld [vmem:[#allocation5 + $0x10a0] sm:$0xff]
    %v630 = vld [vmem:[#allocation5 + $0x10a8] sm:$0xff]
    %v631 = vld [vmem:[#allocation5 + $0x10b0] sm:$0xff]
    %v632 = vld [vmem:[#allocation5 + $0x10b8] sm:$0xff]
    %v633 = vld [vmem:[#allocation5 + $0x10c0] sm:$0xff]
    %v634 = vld [vmem:[#allocation5 + $0x10c8] sm:$0xff]
    %v635 = vld [vmem:[#allocation5 + $0x10d0] sm:$0xff]
    %v636 = vld [vmem:[#allocation5 + $0x10d8] sm:$0xff]
    %v637 = vld [vmem:[#allocation5 + $0x10e0] sm:$0xff]
    %v638 = vld [vmem:[#allocation5 + $0x10e8] sm:$0xff]
    %v639 = vld [vmem:[#allocation5 + $0x10f0] sm:$0xff]
    %v640 = vld [vmem:[#allocation5 + $0x10f8] sm:$0xff]
    %v641 = vld [vmem:[#allocation5 + $0x1100] sm:$0xff]
    %v642 = vld [vmem:[#allocation5 + $0x1108] sm:$0xff]
    %v643 = vld [vmem:[#allocation5 + $0x1110] sm:$0xff]
    %v644 = vld [vmem:[#allocation5 + $0x1118] sm:$0xff]
    %v645 = vld [vmem:[#allocation5 + $0x1120] sm:$0xff]
    %v646 = vld [vmem:[#allocation5 + $0x1128] sm:$0xff]
    %v647 = vld [vmem:[#allocation5 + $0x1130] sm:$0xff]
    %v648 = vld [vmem:[#allocation5 + $0x1138] sm:$0xff]
    %v649 = vld [vmem:[#allocation5 + $0x1140] sm:$0xff]
    %v650 = vld [vmem:[#allocation5 + $0x1148] sm:$0xff]
    %v651 = vld [vmem:[#allocation5 + $0x1150] sm:$0xff]
    %v652 = vld [vmem:[#allocation5 + $0x1158] sm:$0xff]
    %v653 = vld [vmem:[#allocation5 + $0x1160] sm:$0xff]
    %v654 = vld [vmem:[#allocation5 + $0x1168] sm:$0xff]
    %v655 = vld [vmem:[#allocation5 + $0x1170] sm:$0xff]
    %v656 = vld [vmem:[#allocation5 + $0x1178] sm:$0xff]
    %v657 = vld [vmem:[#allocation5 + $0x1180] sm:$0xff]
    %v658 = vld [vmem:[#allocation5 + $0x1188] sm:$0xff]
    %v659 = vld [vmem:[#allocation5 + $0x1190] sm:$0xff]
    %v660 = vld [vmem:[#allocation5 + $0x1198] sm:$0xff]
    %v661 = vld [vmem:[#allocation5 + $0x11a0] sm:$0xff]
    %v662 = vld [vmem:[#allocation5 + $0x11a8] sm:$0xff]
    %v663 = vld [vmem:[#allocation5 + $0x11b0] sm:$0xff]
    %v664 = vld [vmem:[#allocation5 + $0x11b8] sm:$0xff]
    %v665 = vld [vmem:[#allocation5 + $0x11c0] sm:$0xff]
    %v666 = vld [vmem:[#allocation5 + $0x11c8] sm:$0xff]
    %v667 = vld [vmem:[#allocation5 + $0x11d0] sm:$0xff]
    %v668 = vld [vmem:[#allocation5 + $0x11d8] sm:$0xff]
    %v669 = vld [vmem:[#allocation5 + $0x11e0] sm:$0xff]
    %v670 = vld [vmem:[#allocation5 + $0x11e8] sm:$0xff]
    %v671 = vld [vmem:[#allocation5 + $0x11f0] sm:$0xff]
    %v672 = vld [vmem:[#allocation5 + $0x11f8] sm:$0xff]
    %v673 = vld [vmem:[#allocation5 + $0x1200] sm:$0xff]
    %v674 = vld [vmem:[#allocation5 + $0x1208] sm:$0xff]
    %v675 = vld [vmem:[#allocation5 + $0x1210] sm:$0xff]
    %v676 = vld [vmem:[#allocation5 + $0x1218] sm:$0xff]
    %v677 = vld [vmem:[#allocation5 + $0x1220] sm:$0xff]
    %v678 = vld [vmem:[#allocation5 + $0x1228] sm:$0xff]
    %v679 = vld [vmem:[#allocation5 + $0x1230] sm:$0xff]
    %v680 = vld [vmem:[#allocation5 + $0x1238] sm:$0xff]
    %v681 = vld [vmem:[#allocation5 + $0x1240] sm:$0xff]
    %v682 = vld [vmem:[#allocation5 + $0x1248] sm:$0xff]
    %v683 = vld [vmem:[#allocation5 + $0x1250] sm:$0xff]
    %v684 = vld [vmem:[#allocation5 + $0x1258] sm:$0xff]
    %v685 = vld [vmem:[#allocation5 + $0x1260] sm:$0xff]
    %v686 = vld [vmem:[#allocation5 + $0x1268] sm:$0xff]
    %v687 = vld [vmem:[#allocation5 + $0x1270] sm:$0xff]
    %v688 = vld [vmem:[#allocation5 + $0x1278] sm:$0xff]
    %v689 = vld [vmem:[#allocation5 + $0x1280] sm:$0xff]
    %v690 = vld [vmem:[#allocation5 + $0x1288] sm:$0xff]
    %v691 = vld [vmem:[#allocation5 + $0x1290] sm:$0xff]
    %v692 = vld [vmem:[#allocation5 + $0x1298] sm:$0xff]
    %v693 = vld [vmem:[#allocation5 + $0x12a0] sm:$0xff]
    %v694 = vld [vmem:[#allocation5 + $0x12a8] sm:$0xff]
    %v695 = vld [vmem:[#allocation5 + $0x12b0] sm:$0xff]
    %v696 = vld [vmem:[#allocation5 + $0x12b8] sm:$0xff]
    %v697 = vld [vmem:[#allocation5 + $0x12c0] sm:$0xff]
    %v698 = vld [vmem:[#allocation5 + $0x12c8] sm:$0xff]
    %v699 = vld [vmem:[#allocation5 + $0x12d0] sm:$0xff]
    %v700 = vld [vmem:[#allocation5 + $0x12d8] sm:$0xff]
    %v701 = vld [vmem:[#allocation5 + $0x12e0] sm:$0xff]
    %v702 = vld [vmem:[#allocation5 + $0x12e8] sm:$0xff]
    %v703 = vld [vmem:[#allocation5 + $0x12f0] sm:$0xff]
    %v704 = vld [vmem:[#allocation5 + $0x12f8] sm:$0xff]
    %v705 = vld [vmem:[#allocation5 + $0x1300] sm:$0xff]
    %v706 = vld [vmem:[#allocation5 + $0x1308] sm:$0xff]
    %v707 = vld [vmem:[#allocation5 + $0x1310] sm:$0xff]
    %v708 = vld [vmem:[#allocation5 + $0x1318] sm:$0xff]
    %v709 = vld [vmem:[#allocation5 + $0x1320] sm:$0xff]
    %v710 = vld [vmem:[#allocation5 + $0x1328] sm:$0xff]
    %v711 = vld [vmem:[#allocation5 + $0x1330] sm:$0xff]
    %v712 = vld [vmem:[#allocation5 + $0x1338] sm:$0xff]
    %v713 = vld [vmem:[#allocation5 + $0x1340] sm:$0xff]
    %v714 = vld [vmem:[#allocation5 + $0x1348] sm:$0xff]
    %v715 = vld [vmem:[#allocation5 + $0x1350] sm:$0xff]
    %v716 = vld [vmem:[#allocation5 + $0x1358] sm:$0xff]
    %v717 = vld [vmem:[#allocation5 + $0x1360] sm:$0xff]
    %v718 = vld [vmem:[#allocation5 + $0x1368] sm:$0xff]
    %v719 = vld [vmem:[#allocation5 + $0x1370] sm:$0xff]
    %v720 = vld [vmem:[#allocation5 + $0x1378] sm:$0xff]
    %v721 = vld [vmem:[#allocation5 + $0x1380] sm:$0xff]
    %v722 = vld [vmem:[#allocation5 + $0x1388] sm:$0xff]
    %v723 = vld [vmem:[#allocation5 + $0x1390] sm:$0xff]
    %v724 = vld [vmem:[#allocation5 + $0x1398] sm:$0xff]
    %v725 = vld [vmem:[#allocation5 + $0x13a0] sm:$0xff]
    %v726 = vld [vmem:[#allocation5 + $0x13a8] sm:$0xff]
    %v727 = vld [vmem:[#allocation5 + $0x13b0] sm:$0xff]
    %v728 = vld [vmem:[#allocation5 + $0x13b8] sm:$0xff]
    %v729 = vld [vmem:[#allocation5 + $0x13c0] sm:$0xff]
    %v730 = vld [vmem:[#allocation5 + $0x13c8] sm:$0xff]
    %v731 = vld [vmem:[#allocation5 + $0x13d0] sm:$0xff]
    %v732 = vld [vmem:[#allocation5 + $0x13d8] sm:$0xff]
    %v733 = vld [vmem:[#allocation5 + $0x13e0] sm:$0xff]
    %v734 = vld [vmem:[#allocation5 + $0x13e8] sm:$0xff]
    %v735 = vld [vmem:[#allocation5 + $0x13f0] sm:$0xff]
    %v736 = vld [vmem:[#allocation5 + $0x13f8] sm:$0xff]
    %v737 = vld [vmem:[#allocation5 + $0x1400] sm:$0xff]
    %v738 = vld [vmem:[#allocation5 + $0x1408] sm:$0xff]
    %v739 = vld [vmem:[#allocation5 + $0x1410] sm:$0xff]
    %v740 = vld [vmem:[#allocation5 + $0x1418] sm:$0xff]
    %v741 = vld [vmem:[#allocation5 + $0x1420] sm:$0xff]
    %v742 = vld [vmem:[#allocation5 + $0x1428] sm:$0xff]
    %v743 = vld [vmem:[#allocation5 + $0x1430] sm:$0xff]
    %v744 = vld [vmem:[#allocation5 + $0x1438] sm:$0xff]
    %v745 = vld [vmem:[#allocation5 + $0x1440] sm:$0xff]
    %v746 = vld [vmem:[#allocation5 + $0x1448] sm:$0xff]
    %v747 = vld [vmem:[#allocation5 + $0x1450] sm:$0xff]
    %v748 = vld [vmem:[#allocation5 + $0x1458] sm:$0xff]
    %v749 = vld [vmem:[#allocation5 + $0x1460] sm:$0xff]
    %v750 = vld [vmem:[#allocation5 + $0x1468] sm:$0xff]
    %v751 = vld [vmem:[#allocation5 + $0x1470] sm:$0xff]
    %v752 = vld [vmem:[#allocation5 + $0x1478] sm:$0xff]
    %v753 = vld [vmem:[#allocation5 + $0x1480] sm:$0xff]
    %v754 = vld [vmem:[#allocation5 + $0x1488] sm:$0xff]
    %v755 = vld [vmem:[#allocation5 + $0x1490] sm:$0xff]
    %v756 = vld [vmem:[#allocation5 + $0x1498] sm:$0xff]
    %v757 = vld [vmem:[#allocation5 + $0x14a0] sm:$0xff]
    %v758 = vld [vmem:[#allocation5 + $0x14a8] sm:$0xff]
    %v759 = vld [vmem:[#allocation5 + $0x14b0] sm:$0xff]
    %v760 = vld [vmem:[#allocation5 + $0x14b8] sm:$0xff]
    %v761 = vld [vmem:[#allocation5 + $0x14c0] sm:$0xff]
    %v762 = vld [vmem:[#allocation5 + $0x14c8] sm:$0xff]
    %v763 = vld [vmem:[#allocation5 + $0x14d0] sm:$0xff]
    %v764 = vld [vmem:[#allocation5 + $0x14d8] sm:$0xff]
    %v765 = vld [vmem:[#allocation5 + $0x14e0] sm:$0xff]
    %v766 = vld [vmem:[#allocation5 + $0x14e8] sm:$0xff]
    %v767 = vld [vmem:[#allocation5 + $0x14f0] sm:$0xff]
    %v768 = vld [vmem:[#allocation5 + $0x14f8] sm:$0xff]
    %v769 = vld [vmem:[#allocation5 + $0x1500] sm:$0xff]
    %v770 = vld [vmem:[#allocation5 + $0x1508] sm:$0xff]
    %v771 = vld [vmem:[#allocation5 + $0x1510] sm:$0xff]
    %v772 = vld [vmem:[#allocation5 + $0x1518] sm:$0xff]
    %v773 = vld [vmem:[#allocation5 + $0x1520] sm:$0xff]
    %v774 = vld [vmem:[#allocation5 + $0x1528] sm:$0xff]
    %v775 = vld [vmem:[#allocation5 + $0x1530] sm:$0xff]
    %v776 = vld [vmem:[#allocation5 + $0x1538] sm:$0xff]
    %v777 = vld [vmem:[#allocation5 + $0x1540] sm:$0xff]
    %v778 = vld [vmem:[#allocation5 + $0x1548] sm:$0xff]
    %v779 = vld [vmem:[#allocation5 + $0x1550] sm:$0xff]
    %v780 = vld [vmem:[#allocation5 + $0x1558] sm:$0xff]
    %v781 = vld [vmem:[#allocation5 + $0x1560] sm:$0xff]
    %v782 = vld [vmem:[#allocation5 + $0x1568] sm:$0xff]
    %v783 = vld [vmem:[#allocation5 + $0x1570] sm:$0xff]
    %v784 = vld [vmem:[#allocation5 + $0x1578] sm:$0xff]
    %v785 = vld [vmem:[#allocation5 + $0x1580] sm:$0xff]
    %v786 = vld [vmem:[#allocation5 + $0x1588] sm:$0xff]
    %v787 = vld [vmem:[#allocation5 + $0x1590] sm:$0xff]
    %v788 = vld [vmem:[#allocation5 + $0x1598] sm:$0xff]
    %v789 = vld [vmem:[#allocation5 + $0x15a0] sm:$0xff]
    %v790 = vld [vmem:[#allocation5 + $0x15a8] sm:$0xff]
    %v791 = vld [vmem:[#allocation5 + $0x15b0] sm:$0xff]
    %v792 = vld [vmem:[#allocation5 + $0x15b8] sm:$0xff]
    %v793 = vld [vmem:[#allocation5 + $0x15c0] sm:$0xff]
    %v794 = vld [vmem:[#allocation5 + $0x15c8] sm:$0xff]
    %v795 = vld [vmem:[#allocation5 + $0x15d0] sm:$0xff]
    %v796 = vld [vmem:[#allocation5 + $0x15d8] sm:$0xff]
    %v797 = vld [vmem:[#allocation5 + $0x15e0] sm:$0xff]
    %v798 = vld [vmem:[#allocation5 + $0x15e8] sm:$0xff]
    %v799 = vld [vmem:[#allocation5 + $0x15f0] sm:$0xff]
    %v800 = vld [vmem:[#allocation5 + $0x15f8] sm:$0xff]
    %v801 = vld [vmem:[#allocation5 + $0x1600] sm:$0xff]
    %v802 = vld [vmem:[#allocation5 + $0x1608] sm:$0xff]
    %v803 = vld [vmem:[#allocation5 + $0x1610] sm:$0xff]
    %v804 = vld [vmem:[#allocation5 + $0x1618] sm:$0xff]
    %v805 = vld [vmem:[#allocation5 + $0x1620] sm:$0xff]
    %v806 = vld [vmem:[#allocation5 + $0x1628] sm:$0xff]
    %v807 = vld [vmem:[#allocation5 + $0x1630] sm:$0xff]
    %v808 = vld [vmem:[#allocation5 + $0x1638] sm:$0xff]
    %v809 = vld [vmem:[#allocation5 + $0x1640] sm:$0xff]
    %v810 = vld [vmem:[#allocation5 + $0x1648] sm:$0xff]
    %v811 = vld [vmem:[#allocation5 + $0x1650] sm:$0xff]
    %v812 = vld [vmem:[#allocation5 + $0x1658] sm:$0xff]
    %v813 = vld [vmem:[#allocation5 + $0x1660] sm:$0xff]
    %v814 = vld [vmem:[#allocation5 + $0x1668] sm:$0xff]
    %v815 = vld [vmem:[#allocation5 + $0x1670] sm:$0xff]
    %v816 = vld [vmem:[#allocation5 + $0x1678] sm:$0xff]
    %v817 = vld [vmem:[#allocation5 + $0x1680] sm:$0xff]
    %v818 = vld [vmem:[#allocation5 + $0x1688] sm:$0xff]
    %v819 = vld [vmem:[#allocation5 + $0x1690] sm:$0xff]
    %v820 = vld [vmem:[#allocation5 + $0x1698] sm:$0xff]
    %v821 = vld [vmem:[#allocation5 + $0x16a0] sm:$0xff]
    %v822 = vld [vmem:[#allocation5 + $0x16a8] sm:$0xff]
    %v823 = vld [vmem:[#allocation5 + $0x16b0] sm:$0xff]
    %v824 = vld [vmem:[#allocation5 + $0x16b8] sm:$0xff]
    %v825 = vld [vmem:[#allocation5 + $0x16c0] sm:$0xff]
    %v826 = vld [vmem:[#allocation5 + $0x16c8] sm:$0xff]
    %v827 = vld [vmem:[#allocation5 + $0x16d0] sm:$0xff]
    %v828 = vld [vmem:[#allocation5 + $0x16d8] sm:$0xff]
    %v829 = vld [vmem:[#allocation5 + $0x16e0] sm:$0xff]
    %v830 = vld [vmem:[#allocation5 + $0x16e8] sm:$0xff]
    %v831 = vld [vmem:[#allocation5 + $0x16f0] sm:$0xff]
    %v832 = vld [vmem:[#allocation5 + $0x16f8] sm:$0xff]
    %v833 = vld [vmem:[#allocation5 + $0x1700] sm:$0xff]
    %v834 = vld [vmem:[#allocation5 + $0x1708] sm:$0xff]
    %v835 = vld [vmem:[#allocation5 + $0x1710] sm:$0xff]
    %v836 = vld [vmem:[#allocation5 + $0x1718] sm:$0xff]
    %v837 = vld [vmem:[#allocation5 + $0x1720] sm:$0xff]
    %v838 = vld [vmem:[#allocation5 + $0x1728] sm:$0xff]
    %v839 = vld [vmem:[#allocation5 + $0x1730] sm:$0xff]
    %v840 = vld [vmem:[#allocation5 + $0x1738] sm:$0xff]
    %v841 = vld [vmem:[#allocation5 + $0x1740] sm:$0xff]
    %v842 = vld [vmem:[#allocation5 + $0x1748] sm:$0xff]
    %v843 = vld [vmem:[#allocation5 + $0x1750] sm:$0xff]
    %v844 = vld [vmem:[#allocation5 + $0x1758] sm:$0xff]
    %v845 = vld [vmem:[#allocation5 + $0x1760] sm:$0xff]
    %v846 = vld [vmem:[#allocation5 + $0x1768] sm:$0xff]
    %v847 = vld [vmem:[#allocation5 + $0x1770] sm:$0xff]
    %v848 = vld [vmem:[#allocation5 + $0x1778] sm:$0xff]
    %v849 = vld [vmem:[#allocation5 + $0x1780] sm:$0xff]
    %v850 = vld [vmem:[#allocation5 + $0x1788] sm:$0xff]
    %v851 = vld [vmem:[#allocation5 + $0x1790] sm:$0xff]
    %v852 = vld [vmem:[#allocation5 + $0x1798] sm:$0xff]
    %v853 = vld [vmem:[#allocation5 + $0x17a0] sm:$0xff]
    %v854 = vld [vmem:[#allocation5 + $0x17a8] sm:$0xff]
    %v855 = vld [vmem:[#allocation5 + $0x17b0] sm:$0xff]
    %v856 = vld [vmem:[#allocation5 + $0x17b8] sm:$0xff]
    %v857 = vld [vmem:[#allocation5 + $0x17c0] sm:$0xff]
    %v858 = vld [vmem:[#allocation5 + $0x17c8] sm:$0xff]
    %v859 = vld [vmem:[#allocation5 + $0x17d0] sm:$0xff]
    %v860 = vld [vmem:[#allocation5 + $0x17d8] sm:$0xff]
    %v861 = vld [vmem:[#allocation5 + $0x17e0] sm:$0xff]
    %v862 = vld [vmem:[#allocation5 + $0x17e8] sm:$0xff]
    %v863 = vld [vmem:[#allocation5 + $0x17f0] sm:$0xff]
    %v864 = vld [vmem:[#allocation5 + $0x17f8] sm:$0xff]
    %v865 = vld [vmem:[#allocation5 + $0x1800] sm:$0xff]
    %v866 = vld [vmem:[#allocation5 + $0x1808] sm:$0xff]
    %v867 = vld [vmem:[#allocation5 + $0x1810] sm:$0xff]
    %v868 = vld [vmem:[#allocation5 + $0x1818] sm:$0xff]
    %v869 = vld [vmem:[#allocation5 + $0x1820] sm:$0xff]
    %v870 = vld [vmem:[#allocation5 + $0x1828] sm:$0xff]
    %v871 = vld [vmem:[#allocation5 + $0x1830] sm:$0xff]
    %v872 = vld [vmem:[#allocation5 + $0x1838] sm:$0xff]
    %v873 = vld [vmem:[#allocation5 + $0x1840] sm:$0xff]
    %v874 = vld [vmem:[#allocation5 + $0x1848] sm:$0xff]
    %v875 = vld [vmem:[#allocation5 + $0x1850] sm:$0xff]
    %v876 = vld [vmem:[#allocation5 + $0x1858] sm:$0xff]
    %v877 = vld [vmem:[#allocation5 + $0x1860] sm:$0xff]
    %v878 = vld [vmem:[#allocation5 + $0x1868] sm:$0xff]
    %v879 = vld [vmem:[#allocation5 + $0x1870] sm:$0xff]
    %v880 = vld [vmem:[#allocation5 + $0x1878] sm:$0xff]
    %v881 = vld [vmem:[#allocation5 + $0x1880] sm:$0xff]
    %v882 = vld [vmem:[#allocation5 + $0x1888] sm:$0xff]
    %v883 = vld [vmem:[#allocation5 + $0x1890] sm:$0xff]
    %v884 = vld [vmem:[#allocation5 + $0x1898] sm:$0xff]
    %v885 = vld [vmem:[#allocation5 + $0x18a0] sm:$0xff]
    %v886 = vld [vmem:[#allocation5 + $0x18a8] sm:$0xff]
    %v887 = vld [vmem:[#allocation5 + $0x18b0] sm:$0xff]
    %v888 = vld [vmem:[#allocation5 + $0x18b8] sm:$0xff]
    %v889 = vld [vmem:[#allocation5 + $0x18c0] sm:$0xff]
    %v890 = vld [vmem:[#allocation5 + $0x18c8] sm:$0xff]
    %v891 = vld [vmem:[#allocation5 + $0x18d0] sm:$0xff]
    %v892 = vld [vmem:[#allocation5 + $0x18d8] sm:$0xff]
    %v893 = vld [vmem:[#allocation5 + $0x18e0] sm:$0xff]
    %v894 = vld [vmem:[#allocation5 + $0x18e8] sm:$0xff]
    %v895 = vld [vmem:[#allocation5 + $0x18f0] sm:$0xff]
    %v896 = vld [vmem:[#allocation5 + $0x18f8] sm:$0xff]
    %v897 = vld [vmem:[#allocation5 + $0x1900] sm:$0xff]
    %v898 = vld [vmem:[#allocation5 + $0x1908] sm:$0xff]
    %v899 = vld [vmem:[#allocation5 + $0x1910] sm:$0xff]
    %v900 = vld [vmem:[#allocation5 + $0x1918] sm:$0xff]
    %v901 = vld [vmem:[#allocation5 + $0x1920] sm:$0xff]
    %v902 = vld [vmem:[#allocation5 + $0x1928] sm:$0xff]
    %v903 = vld [vmem:[#allocation5 + $0x1930] sm:$0xff]
    %v904 = vld [vmem:[#allocation5 + $0x1938] sm:$0xff]
    %v905 = vld [vmem:[#allocation5 + $0x1940] sm:$0xff]
    %v906 = vld [vmem:[#allocation5 + $0x1948] sm:$0xff]
    %v907 = vld [vmem:[#allocation5 + $0x1950] sm:$0xff]
    %v908 = vld [vmem:[#allocation5 + $0x1958] sm:$0xff]
    %v909 = vld [vmem:[#allocation5 + $0x1960] sm:$0xff]
    %v910 = vld [vmem:[#allocation5 + $0x1968] sm:$0xff]
    %v911 = vld [vmem:[#allocation5 + $0x1970] sm:$0xff]
    %v912 = vld [vmem:[#allocation5 + $0x1978] sm:$0xff]
    %v913 = vld [vmem:[#allocation5 + $0x1980] sm:$0xff]
    %v914 = vld [vmem:[#allocation5 + $0x1988] sm:$0xff]
    %v915 = vld [vmem:[#allocation5 + $0x1990] sm:$0xff]
    %v916 = vld [vmem:[#allocation5 + $0x1998] sm:$0xff]
    %v917 = vld [vmem:[#allocation5 + $0x19a0] sm:$0xff]
    %v918 = vld [vmem:[#allocation5 + $0x19a8] sm:$0xff]
    %v919 = vld [vmem:[#allocation5 + $0x19b0] sm:$0xff]
    %v920 = vld [vmem:[#allocation5 + $0x19b8] sm:$0xff]
    %v921 = vld [vmem:[#allocation5 + $0x19c0] sm:$0xff]
    %v922 = vld [vmem:[#allocation5 + $0x19c8] sm:$0xff]
    %v923 = vld [vmem:[#allocation5 + $0x19d0] sm:$0xff]
    %v924 = vld [vmem:[#allocation5 + $0x19d8] sm:$0xff]
    %v925 = vld [vmem:[#allocation5 + $0x19e0] sm:$0xff]
    %v926 = vld [vmem:[#allocation5 + $0x19e8] sm:$0xff]
    %v927 = vld [vmem:[#allocation5 + $0x19f0] sm:$0xff]
    %v928 = vld [vmem:[#allocation5 + $0x19f8] sm:$0xff]
    %v929 = vld [vmem:[#allocation5 + $0x1a00] sm:$0xff]
    %v930 = vld [vmem:[#allocation5 + $0x1a08] sm:$0xff]
    %v931 = vld [vmem:[#allocation5 + $0x1a10] sm:$0xff]
    %v932 = vld [vmem:[#allocation5 + $0x1a18] sm:$0xff]
    %v933 = vld [vmem:[#allocation5 + $0x1a20] sm:$0xff]
    %v934 = vld [vmem:[#allocation5 + $0x1a28] sm:$0xff]
    %v935 = vld [vmem:[#allocation5 + $0x1a30] sm:$0xff]
    %v936 = vld [vmem:[#allocation5 + $0x1a38] sm:$0xff]
    %v937 = vld [vmem:[#allocation5 + $0x1a40] sm:$0xff]
    %v938 = vld [vmem:[#allocation5 + $0x1a48] sm:$0xff]
    %v939 = vld [vmem:[#allocation5 + $0x1a50] sm:$0xff]
    %v940 = vld [vmem:[#allocation5 + $0x1a58] sm:$0xff]
    %v941 = vld [vmem:[#allocation5 + $0x1a60] sm:$0xff]
    %v942 = vld [vmem:[#allocation5 + $0x1a68] sm:$0xff]
    %v943 = vld [vmem:[#allocation5 + $0x1a70] sm:$0xff]
    %v944 = vld [vmem:[#allocation5 + $0x1a78] sm:$0xff]
    %v945 = vld [vmem:[#allocation5 + $0x1a80] sm:$0xff]
    %v946 = vld [vmem:[#allocation5 + $0x1a88] sm:$0xff]
    %v947 = vld [vmem:[#allocation5 + $0x1a90] sm:$0xff]
    %v948 = vld [vmem:[#allocation5 + $0x1a98] sm:$0xff]
    %v949 = vld [vmem:[#allocation5 + $0x1aa0] sm:$0xff]
    %v950 = vld [vmem:[#allocation5 + $0x1aa8] sm:$0xff]
    %v951 = vld [vmem:[#allocation5 + $0x1ab0] sm:$0xff]
    %v952 = vld [vmem:[#allocation5 + $0x1ab8] sm:$0xff]
    %v953 = vld [vmem:[#allocation5 + $0x1ac0] sm:$0xff]
    %v954 = vld [vmem:[#allocation5 + $0x1ac8] sm:$0xff]
    %v955 = vld [vmem:[#allocation5 + $0x1ad0] sm:$0xff]
    %v956 = vld [vmem:[#allocation5 + $0x1ad8] sm:$0xff]
    %v957 = vld [vmem:[#allocation5 + $0x1ae0] sm:$0xff]
    %v958 = vld [vmem:[#allocation5 + $0x1ae8] sm:$0xff]
    %v959 = vld [vmem:[#allocation5 + $0x1af0] sm:$0xff]
    %v960 = vld [vmem:[#allocation5 + $0x1af8] sm:$0xff]
    %v961 = vld [vmem:[#allocation5 + $0x1b00] sm:$0xff]
    %v962 = vld [vmem:[#allocation5 + $0x1b08] sm:$0xff]
    %v963 = vld [vmem:[#allocation5 + $0x1b10] sm:$0xff]
    %v964 = vld [vmem:[#allocation5 + $0x1b18] sm:$0xff]
    %v965 = vld [vmem:[#allocation5 + $0x1b20] sm:$0xff]
    %v966 = vld [vmem:[#allocation5 + $0x1b28] sm:$0xff]
    %v967 = vld [vmem:[#allocation5 + $0x1b30] sm:$0xff]
    %v968 = vld [vmem:[#allocation5 + $0x1b38] sm:$0xff]
    %v969 = vld [vmem:[#allocation5 + $0x1b40] sm:$0xff]
    %v970 = vld [vmem:[#allocation5 + $0x1b48] sm:$0xff]
    %v971 = vld [vmem:[#allocation5 + $0x1b50] sm:$0xff]
    %v972 = vld [vmem:[#allocation5 + $0x1b58] sm:$0xff]
    %v973 = vld [vmem:[#allocation5 + $0x1b60] sm:$0xff]
    %v974 = vld [vmem:[#allocation5 + $0x1b68] sm:$0xff]
    %v975 = vld [vmem:[#allocation5 + $0x1b70] sm:$0xff]
    %v976 = vld [vmem:[#allocation5 + $0x1b78] sm:$0xff]
    %v977 = vld [vmem:[#allocation5 + $0x1b80] sm:$0xff]
    %v978 = vld [vmem:[#allocation5 + $0x1b88] sm:$0xff]
    %v979 = vld [vmem:[#allocation5 + $0x1b90] sm:$0xff]
    %v980 = vld [vmem:[#allocation5 + $0x1b98] sm:$0xff]
    %v981 = vld [vmem:[#allocation5 + $0x1ba0] sm:$0xff]
    %v982 = vld [vmem:[#allocation5 + $0x1ba8] sm:$0xff]
    %v983 = vld [vmem:[#allocation5 + $0x1bb0] sm:$0xff]
    %v984 = vld [vmem:[#allocation5 + $0x1bb8] sm:$0xff]
    %v985 = vld [vmem:[#allocation5 + $0x1bc0] sm:$0xff]
    %v986 = vld [vmem:[#allocation5 + $0x1bc8] sm:$0xff]
    %v987 = vld [vmem:[#allocation5 + $0x1bd0] sm:$0xff]
    %v988 = vld [vmem:[#allocation5 + $0x1bd8] sm:$0xff]
    %v989 = vld [vmem:[#allocation5 + $0x1be0] sm:$0xff]
    %v990 = vld [vmem:[#allocation5 + $0x1be8] sm:$0xff]
    %v991 = vld [vmem:[#allocation5 + $0x1bf0] sm:$0xff]
    %v992 = vld [vmem:[#allocation5 + $0x1bf8] sm:$0xff]
    %v993 = vld [vmem:[#allocation5 + $0x1c00] sm:$0xff]
    %v994 = vld [vmem:[#allocation5 + $0x1c08] sm:$0xff]
    %v995 = vld [vmem:[#allocation5 + $0x1c10] sm:$0xff]
    %v996 = vld [vmem:[#allocation5 + $0x1c18] sm:$0xff]
    %v997 = vld [vmem:[#allocation5 + $0x1c20] sm:$0xff]
    %v998 = vld [vmem:[#allocation5 + $0x1c28] sm:$0xff]
    %v999 = vld [vmem:[#allocation5 + $0x1c30] sm:$0xff]
    %v1000 = vld [vmem:[#allocation5 + $0x1c38] sm:$0xff]
    %v1001 = vld [vmem:[#allocation5 + $0x1c40] sm:$0xff]
    %v1002 = vld [vmem:[#allocation5 + $0x1c48] sm:$0xff]
    %v1003 = vld [vmem:[#allocation5 + $0x1c50] sm:$0xff]
    %v1004 = vld [vmem:[#allocation5 + $0x1c58] sm:$0xff]
    %v1005 = vld [vmem:[#allocation5 + $0x1c60] sm:$0xff]
    %v1006 = vld [vmem:[#allocation5 + $0x1c68] sm:$0xff]
    %v1007 = vld [vmem:[#allocation5 + $0x1c70] sm:$0xff]
    %v1008 = vld [vmem:[#allocation5 + $0x1c78] sm:$0xff]
    %v1009 = vld [vmem:[#allocation5 + $0x1c80] sm:$0xff]
    %v1010 = vld [vmem:[#allocation5 + $0x1c88] sm:$0xff]
    %v1011 = vld [vmem:[#allocation5 + $0x1c90] sm:$0xff]
    %v1012 = vld [vmem:[#allocation5 + $0x1c98] sm:$0xff]
    %v1013 = vld [vmem:[#allocation5 + $0x1ca0] sm:$0xff]
    %v1014 = vld [vmem:[#allocation5 + $0x1ca8] sm:$0xff]
    %v1015 = vld [vmem:[#allocation5 + $0x1cb0] sm:$0xff]
    %v1016 = vld [vmem:[#allocation5 + $0x1cb8] sm:$0xff]
    %v1017 = vld [vmem:[#allocation5 + $0x1cc0] sm:$0xff]
    %v1018 = vld [vmem:[#allocation5 + $0x1cc8] sm:$0xff]
    %v1019 = vld [vmem:[#allocation5 + $0x1cd0] sm:$0xff]
    %v1020 = vld [vmem:[#allocation5 + $0x1cd8] sm:$0xff]
    %v1021 = vld [vmem:[#allocation5 + $0x1ce0] sm:$0xff]
    %v1022 = vld [vmem:[#allocation5 + $0x1ce8] sm:$0xff]
    %v1023 = vld [vmem:[#allocation5 + $0x1cf0] sm:$0xff]
    %v1024 = vld [vmem:[#allocation5 + $0x1cf8] sm:$0xff]
    %v1025 = vld [vmem:[#allocation5 + $0x1d00] sm:$0xff]
    %v1026 = vld [vmem:[#allocation5 + $0x1d08] sm:$0xff]
    %v1027 = vld [vmem:[#allocation5 + $0x1d10] sm:$0xff]
    %v1028 = vld [vmem:[#allocation5 + $0x1d18] sm:$0xff]
    %v1029 = vld [vmem:[#allocation5 + $0x1d20] sm:$0xff]
    %v1030 = vld [vmem:[#allocation5 + $0x1d28] sm:$0xff]
    %v1031 = vld [vmem:[#allocation5 + $0x1d30] sm:$0xff]
    %v1032 = vld [vmem:[#allocation5 + $0x1d38] sm:$0xff]
    %v1033 = vld [vmem:[#allocation5 + $0x1d40] sm:$0xff]
    %v1034 = vld [vmem:[#allocation5 + $0x1d48] sm:$0xff]
    %v1035 = vld [vmem:[#allocation5 + $0x1d50] sm:$0xff]
    %v1036 = vld [vmem:[#allocation5 + $0x1d58] sm:$0xff]
    %v1037 = vld [vmem:[#allocation5 + $0x1d60] sm:$0xff]
    %v1038 = vld [vmem:[#allocation5 + $0x1d68] sm:$0xff]
    %v1039 = vld [vmem:[#allocation5 + $0x1d70] sm:$0xff]
    %v1040 = vld [vmem:[#allocation5 + $0x1d78] sm:$0xff]
    %v1041 = vld [vmem:[#allocation5 + $0x1d80] sm:$0xff]
    %v1042 = vld [vmem:[#allocation5 + $0x1d88] sm:$0xff]
    %v1043 = vld [vmem:[#allocation5 + $0x1d90] sm:$0xff]
    %v1044 = vld [vmem:[#allocation5 + $0x1d98] sm:$0xff]
    %v1045 = vld [vmem:[#allocation5 + $0x1da0] sm:$0xff]
    %v1046 = vld [vmem:[#allocation5 + $0x1da8] sm:$0xff]
    %v1047 = vld [vmem:[#allocation5 + $0x1db0] sm:$0xff]
    %v1048 = vld [vmem:[#allocation5 + $0x1db8] sm:$0xff]
    %v1049 = vld [vmem:[#allocation5 + $0x1dc0] sm:$0xff]
    %v1050 = vld [vmem:[#allocation5 + $0x1dc8] sm:$0xff]
    %v1051 = vld [vmem:[#allocation5 + $0x1dd0] sm:$0xff]
    %v1052 = vld [vmem:[#allocation5 + $0x1dd8] sm:$0xff]
    %v1053 = vld [vmem:[#allocation5 + $0x1de0] sm:$0xff]
    %v1054 = vld [vmem:[#allocation5 + $0x1de8] sm:$0xff]
    %v1055 = vld [vmem:[#allocation5 + $0x1df0] sm:$0xff]
    %v1056 = vld [vmem:[#allocation5 + $0x1df8] sm:$0xff]
    %v1057 = vld [vmem:[#allocation5 + $0x1e00] sm:$0xff]
    %v1058 = vld [vmem:[#allocation5 + $0x1e08] sm:$0xff]
    %v1059 = vld [vmem:[#allocation5 + $0x1e10] sm:$0xff]
    %v1060 = vld [vmem:[#allocation5 + $0x1e18] sm:$0xff]
    %v1061 = vld [vmem:[#allocation5 + $0x1e20] sm:$0xff]
    %v1062 = vld [vmem:[#allocation5 + $0x1e28] sm:$0xff]
    %v1063 = vld [vmem:[#allocation5 + $0x1e30] sm:$0xff]
    %v1064 = vld [vmem:[#allocation5 + $0x1e38] sm:$0xff]
    %v1065 = vld [vmem:[#allocation5 + $0x1e40] sm:$0xff]
    %v1066 = vld [vmem:[#allocation5 + $0x1e48] sm:$0xff]
    %v1067 = vld [vmem:[#allocation5 + $0x1e50] sm:$0xff]
    %v1068 = vld [vmem:[#allocation5 + $0x1e58] sm:$0xff]
    %v1069 = vld [vmem:[#allocation5 + $0x1e60] sm:$0xff]
    %v1070 = vld [vmem:[#allocation5 + $0x1e68] sm:$0xff]
    %v1071 = vld [vmem:[#allocation5 + $0x1e70] sm:$0xff]
    %v1072 = vld [vmem:[#allocation5 + $0x1e78] sm:$0xff]
    %v1073 = vld [vmem:[#allocation5 + $0x1e80] sm:$0xff]
    %v1074 = vld [vmem:[#allocation5 + $0x1e88] sm:$0xff]
    %v1075 = vld [vmem:[#allocation5 + $0x1e90] sm:$0xff]
    %v1076 = vld [vmem:[#allocation5 + $0x1e98] sm:$0xff]
    %v1077 = vld [vmem:[#allocation5 + $0x1ea0] sm:$0xff]
    %v1078 = vld [vmem:[#allocation5 + $0x1ea8] sm:$0xff]
    %v1079 = vld [vmem:[#allocation5 + $0x1eb0] sm:$0xff]
    %v1080 = vld [vmem:[#allocation5 + $0x1eb8] sm:$0xff]
    %v1081 = vld [vmem:[#allocation5 + $0x1ec0] sm:$0xff]
    %v1082 = vld [vmem:[#allocation5 + $0x1ec8] sm:$0xff]
    %v1083 = vld [vmem:[#allocation5 + $0x1ed0] sm:$0xff]
    %v1084 = vld [vmem:[#allocation5 + $0x1ed8] sm:$0xff]
    %v1085 = vld [vmem:[#allocation5 + $0x1ee0] sm:$0xff]
    %v1086 = vld [vmem:[#allocation5 + $0x1ee8] sm:$0xff]
    %v1087 = vld [vmem:[#allocation5 + $0x1ef0] sm:$0xff]
    %v1088 = vld [vmem:[#allocation5 + $0x1ef8] sm:$0xff]
    %v1089 = vld [vmem:[#allocation5 + $0x1f00] sm:$0xff]
    %v1090 = vld [vmem:[#allocation5 + $0x1f08] sm:$0xff]
    %v1091 = vld [vmem:[#allocation5 + $0x1f10] sm:$0xff]
    %v1092 = vld [vmem:[#allocation5 + $0x1f18] sm:$0xff]
    %v1093 = vld [vmem:[#allocation5 + $0x1f20] sm:$0xff]
    %v1094 = vld [vmem:[#allocation5 + $0x1f28] sm:$0xff]
    %v1095 = vld [vmem:[#allocation5 + $0x1f30] sm:$0xff]
    %v1096 = vld [vmem:[#allocation5 + $0x1f38] sm:$0xff]
    %v1097 = vld [vmem:[#allocation5 + $0x1f40] sm:$0xff]
    %v1098 = vld [vmem:[#allocation5 + $0x1f48] sm:$0xff]
    %v1099 = vld [vmem:[#allocation5 + $0x1f50] sm:$0xff]
    %v1100 = vld [vmem:[#allocation5 + $0x1f58] sm:$0xff]
    %v1101 = vld [vmem:[#allocation5 + $0x1f60] sm:$0xff]
    %v1102 = vld [vmem:[#allocation5 + $0x1f68] sm:$0xff]
    %v1103 = vld [vmem:[#allocation5 + $0x1f70] sm:$0xff]
    %v1104 = vld [vmem:[#allocation5 + $0x1f78] sm:$0xff]
    %v1105 = vld [vmem:[#allocation5 + $0x1f80] sm:$0xff]
    %v1106 = vld [vmem:[#allocation5 + $0x1f88] sm:$0xff]
    %v1107 = vld [vmem:[#allocation5 + $0x1f90] sm:$0xff]
    %v1108 = vld [vmem:[#allocation5 + $0x1f98] sm:$0xff]
    %v1109 = vld [vmem:[#allocation5 + $0x1fa0] sm:$0xff]
    %v1110 = vld [vmem:[#allocation5 + $0x1fa8] sm:$0xff]
    %v1111 = vld [vmem:[#allocation5 + $0x1fb0] sm:$0xff]
    %v1112 = vld [vmem:[#allocation5 + $0x1fb8] sm:$0xff]
    %v1113 = vld [vmem:[#allocation5 + $0x1fc0] sm:$0xff]
    %v1114 = vld [vmem:[#allocation5 + $0x1fc8] sm:$0xff]
    %v1115 = vld [vmem:[#allocation5 + $0x1fd0] sm:$0xff]
    %v1116 = vld [vmem:[#allocation5 + $0x1fd8] sm:$0xff]
    %v1117 = vld [vmem:[#allocation5 + $0x1fe0] sm:$0xff]
    %v1118 = vld [vmem:[#allocation5 + $0x1fe8] sm:$0xff]
    %v1119 = vld [vmem:[#allocation5 + $0x1ff0] sm:$0xff]
    %v1120 = vld [vmem:[#allocation5 + $0x1ff8] sm:$0xff]
    %1121 = vmatprep.subr.mxu0 %v98
    %1122 = vmatpush1.msra.mxu0 %v97
    %1123 = vmatprep.subr.mxu0 %v102
    %1124 = vmatpush1.msra.mxu0 %v101
    %1125 = vmatprep.subr.mxu0 %v106
    %1126 = vmatpush1.msra.mxu0 %v105
    %1127 = vmatprep.subr.mxu0 %v110
    %1128 = vmatpush1.msra.mxu0 %v109
    %1129 = vmatprep.subr.mxu0 %v114
    %1130 = vmatpush1.msra.mxu0 %v113
    %1131 = vmatprep.subr.mxu0 %v118
    %1132 = vmatpush1.msra.mxu0 %v117
    %1133 = vmatprep.subr.mxu0 %v122
    %1134 = vmatpush1.msra.mxu0 %v121
    %1135 = vmatprep.subr.mxu0 %v126
    %1136 = vmatpush1.msra.mxu0 %v125
    %1137 = vmatprep.subr.mxu0 %v130
    %1138 = vmatpush1.msra.mxu0 %v129
    %1139 = vmatprep.subr.mxu0 %v134
    %1140 = vmatpush1.msra.mxu0 %v133
    %1141 = vmatprep.subr.mxu0 %v138
    %1142 = vmatpush1.msra.mxu0 %v137
    %1143 = vmatprep.subr.mxu0 %v142
    %1144 = vmatpush1.msra.mxu0 %v141
    %1145 = vmatprep.subr.mxu0 %v146
    %1146 = vmatpush1.msra.mxu0 %v145
    %1147 = vmatprep.subr.mxu0 %v150
    %1148 = vmatpush1.msra.mxu0 %v149
    %1149 = vmatprep.subr.mxu0 %v154
    %1150 = vmatpush1.msra.mxu0 %v153
    %1151 = vmatprep.subr.mxu0 %v158
    %1152 = vmatpush1.msra.mxu0 %v157
    %1153 = vmatprep.subr.mxu0 %v162
    %1154 = vmatpush1.msra.mxu0 %v161
    %1155 = vmatprep.subr.mxu0 %v166
    %1156 = vmatpush1.msra.mxu0 %v165
    %1157 = vmatprep.subr.mxu0 %v170
    %1158 = vmatpush1.msra.mxu0 %v169
    %1159 = vmatprep.subr.mxu0 %v174
    %1160 = vmatpush1.msra.mxu0 %v173
    %1161 = vmatprep.subr.mxu0 %v178
    %1162 = vmatpush1.msra.mxu0 %v177
    %1163 = vmatprep.subr.mxu0 %v182
    %1164 = vmatpush1.msra.mxu0 %v181
    %1165 = vmatprep.subr.mxu0 %v186
    %1166 = vmatpush1.msra.mxu0 %v185
    %1167 = vmatprep.subr.mxu0 %v190
    %1168 = vmatpush1.msra.mxu0 %v189
    %1169 = vmatprep.subr.mxu0 %v194
    %1170 = vmatpush1.msra.mxu0 %v193
    %1171 = vmatprep.subr.mxu0 %v198
    %1172 = vmatpush1.msra.mxu0 %v197
    %1173 = vmatprep.subr.mxu0 %v202
    %1174 = vmatpush1.msra.mxu0 %v201
    %1175 = vmatprep.subr.mxu0 %v206
    %1176 = vmatpush1.msra.mxu0 %v205
    %1177 = vmatprep.subr.mxu0 %v210
    %1178 = vmatpush1.msra.mxu0 %v209
    %1179 = vmatprep.subr.mxu0 %v214
    %1180 = vmatpush1.msra.mxu0 %v213
    %1181 = vmatprep.subr.mxu0 %v218
    %1182 = vmatpush1.msra.mxu0 %v217
    %1183 = vmatprep.subr.mxu0 %v222
    %1184 = vmatpush1.msra.mxu0 %v221
    %1185 = vmatprep.mubr.f32.mxu0 %v82
    %1186 = vmatmul.mubr.f32.gmra.mrb[0].mxu0 %v81
    %v1187 = vpop.f32.mrb[0].mxu0
    %v1188 = vadd.f32 0.0, %v1187
    %v1189 = vpop.f32.mrb[0].mxu0
    %v1190 = vadd.f32 0.0, %v1189
    %1191 = vdwg.mxu0
    %1192 = vmatprep.subr.mxu0 %v226
    %1193 = vmatpush1.msra.mxu0 %v225
    %1194 = vmatprep.subr.mxu0 %v230
    %1195 = vmatpush1.msra.mxu0 %v229
    %1196 = vmatprep.subr.mxu0 %v234
    %1197 = vmatpush1.msra.mxu0 %v233
    %1198 = vmatprep.subr.mxu0 %v238
    %1199 = vmatpush1.msra.mxu0 %v237
    %1200 = vmatprep.subr.mxu0 %v242
    %1201 = vmatpush1.msra.mxu0 %v241
    %1202 = vmatprep.subr.mxu0 %v246
    %1203 = vmatpush1.msra.mxu0 %v245
    %1204 = vmatprep.subr.mxu0 %v250
    %1205 = vmatpush1.msra.mxu0 %v249
    %1206 = vmatprep.subr.mxu0 %v254
    %1207 = vmatpush1.msra.mxu0 %v253
    %1208 = vmatprep.subr.mxu0 %v258
    %1209 = vmatpush1.msra.mxu0 %v257
    %1210 = vmatprep.subr.mxu0 %v262
    %1211 = vmatpush1.msra.mxu0 %v261
    %1212 = vmatprep.subr.mxu0 %v266
    %1213 = vmatpush1.msra.mxu0 %v265
    %1214 = vmatprep.subr.mxu0 %v270
    %1215 = vmatpush1.msra.mxu0 %v269
    %1216 = vmatprep.subr.mxu0 %v274
    %1217 = vmatpush1.msra.mxu0 %v273
    %1218 = vmatprep.subr.mxu0 %v278
    %1219 = vmatpush1.msra.mxu0 %v277
    %1220 = vmatprep.subr.mxu0 %v282
    %1221 = vmatpush1.msra.mxu0 %v281
    %1222 = vmatprep.subr.mxu0 %v286
    %1223 = vmatpush1.msra.mxu0 %v285
    %1224 = vmatprep.subr.mxu0 %v290
    %1225 = vmatpush1.msra.mxu0 %v289
    %1226 = vmatprep.subr.mxu0 %v294
    %1227 = vmatpush1.msra.mxu0 %v293
    %1228 = vmatprep.subr.mxu0 %v298
    %1229 = vmatpush1.msra.mxu0 %v297
    %1230 = vmatprep.subr.mxu0 %v302
    %1231 = vmatpush1.msra.mxu0 %v301
    %1232 = vmatprep.subr.mxu0 %v306
    %1233 = vmatpush1.msra.mxu0 %v305
    %1234 = vmatprep.subr.mxu0 %v310
    %1235 = vmatpush1.msra.mxu0 %v309
    %1236 = vmatprep.subr.mxu0 %v314
    %1237 = vmatpush1.msra.mxu0 %v313
    %1238 = vmatprep.subr.mxu0 %v318
    %1239 = vmatpush1.msra.mxu0 %v317
    %1240 = vmatprep.subr.mxu0 %v322
    %1241 = vmatpush1.msra.mxu0 %v321
    %1242 = vmatprep.subr.mxu0 %v326
    %1243 = vmatpush1.msra.mxu0 %v325
    %1244 = vmatprep.subr.mxu0 %v330
    %1245 = vmatpush1.msra.mxu0 %v329
    %1246 = vmatprep.subr.mxu0 %v334
    %1247 = vmatpush1.msra.mxu0 %v333
    %1248 = vmatprep.subr.mxu0 %v338
    %1249 = vmatpush1.msra.mxu0 %v337
    %1250 = vmatprep.subr.mxu0 %v342
    %1251 = vmatpush1.msra.mxu0 %v341
    %1252 = vmatprep.subr.mxu0 %v346
    %1253 = vmatpush1.msra.mxu0 %v345
    %1254 = vmatprep.subr.mxu0 %v350
    %1255 = vmatpush1.msra.mxu0 %v349
    %1256 = vmatprep.mubr.f32.mxu0 %v84
    %1257 = vmatmul.mubr.f32.gmra.mrb[0].mxu0 %v83
    %v1258 = vpop.f32.mrb[0].mxu0
    %v1259 = vadd.f32 %v1188, %v1258
    %v1260 = vpop.f32.mrb[0].mxu0
    %v1261 = vadd.f32 %v1190, %v1260
    %1262 = vdwg.mxu0
    %1263 = vmatprep.subr.mxu0 %v354
    %1264 = vmatpush1.msra.mxu0 %v353
    %1265 = vmatprep.subr.mxu0 %v358
    %1266 = vmatpush1.msra.mxu0 %v357
    %1267 = vmatprep.subr.mxu0 %v362
    %1268 = vmatpush1.msra.mxu0 %v361
    %1269 = vmatprep.subr.mxu0 %v366
    %1270 = vmatpush1.msra.mxu0 %v365
    %1271 = vmatprep.subr.mxu0 %v370
    %1272 = vmatpush1.msra.mxu0 %v369
    %1273 = vmatprep.subr.mxu0 %v374
    %1274 = vmatpush1.msra.mxu0 %v373
    %1275 = vmatprep.subr.mxu0 %v378
    %1276 = vmatpush1.msra.mxu0 %v377
    %1277 = vmatprep.subr.mxu0 %v382
    %1278 = vmatpush1.msra.mxu0 %v381
    %1279 = vmatprep.subr.mxu0 %v386
    %1280 = vmatpush1.msra.mxu0 %v385
    %1281 = vmatprep.subr.mxu0 %v390
    %1282 = vmatpush1.msra.mxu0 %v389
    %1283 = vmatprep.subr.mxu0 %v394
    %1284 = vmatpush1.msra.mxu0 %v393
    %1285 = vmatprep.subr.mxu0 %v398
    %1286 = vmatpush1.msra.mxu0 %v397
    %1287 = vmatprep.subr.mxu0 %v402
    %1288 = vmatpush1.msra.mxu0 %v401
    %1289 = vmatprep.subr.mxu0 %v406
    %1290 = vmatpush1.msra.mxu0 %v405
    %1291 = vmatprep.subr.mxu0 %v410
    %1292 = vmatpush1.msra.mxu0 %v409
    %1293 = vmatprep.subr.mxu0 %v414
    %1294 = vmatpush1.msra.mxu0 %v413
    %1295 = vmatprep.subr.mxu0 %v418
    %1296 = vmatpush1.msra.mxu0 %v417
    %1297 = vmatprep.subr.mxu0 %v422
    %1298 = vmatpush1.msra.mxu0 %v421
    %1299 = vmatprep.subr.mxu0 %v426
    %1300 = vmatpush1.msra.mxu0 %v425
    %1301 = vmatprep.subr.mxu0 %v430
    %1302 = vmatpush1.msra.mxu0 %v429
    %1303 = vmatprep.subr.mxu0 %v434
    %1304 = vmatpush1.msra.mxu0 %v433
    %1305 = vmatprep.subr.mxu0 %v438
    %1306 = vmatpush1.msra.mxu0 %v437
    %1307 = vmatprep.subr.mxu0 %v442
    %1308 = vmatpush1.msra.mxu0 %v441
    %1309 = vmatprep.subr.mxu0 %v446
    %1310 = vmatpush1.msra.mxu0 %v445
    %1311 = vmatprep.subr.mxu0 %v450
    %1312 = vmatpush1.msra.mxu0 %v449
    %1313 = vmatprep.subr.mxu0 %v454
    %1314 = vmatpush1.msra.mxu0 %v453
    %1315 = vmatprep.subr.mxu0 %v458
    %1316 = vmatpush1.msra.mxu0 %v457
    %1317 = vmatprep.subr.mxu0 %v462
    %1318 = vmatpush1.msra.mxu0 %v461
    %1319 = vmatprep.subr.mxu0 %v466
    %1320 = vmatpush1.msra.mxu0 %v465
    %1321 = vmatprep.subr.mxu0 %v470
    %1322 = vmatpush1.msra.mxu0 %v469
    %1323 = vmatprep.subr.mxu0 %v474
    %1324 = vmatpush1.msra.mxu0 %v473
    %1325 = vmatprep.subr.mxu0 %v478
    %1326 = vmatpush1.msra.mxu0 %v477
    %1327 = vmatprep.mubr.f32.mxu0 %v86
    %1328 = vmatmul.mubr.f32.gmra.mrb[0].mxu0 %v85
    %v1329 = vpop.f32.mrb[0].mxu0
    %v1330 = vadd.f32 %v1259, %v1329
    %v1331 = vpop.f32.mrb[0].mxu0
    %v1332 = vadd.f32 %v1261, %v1331
    %1333 = vdwg.mxu0
    %1334 = vmatprep.subr.mxu0 %v482
    %1335 = vmatpush1.msra.mxu0 %v481
    %1336 = vmatprep.subr.mxu0 %v486
    %1337 = vmatpush1.msra.mxu0 %v485
    %1338 = vmatprep.subr.mxu0 %v490
    %1339 = vmatpush1.msra.mxu0 %v489
    %1340 = vmatprep.subr.mxu0 %v494
    %1341 = vmatpush1.msra.mxu0 %v493
    %1342 = vmatprep.subr.mxu0 %v498
    %1343 = vmatpush1.msra.mxu0 %v497
    %1344 = vmatprep.subr.mxu0 %v502
    %1345 = vmatpush1.msra.mxu0 %v501
    %1346 = vmatprep.subr.mxu0 %v506
    %1347 = vmatpush1.msra.mxu0 %v505
    %1348 = vmatprep.subr.mxu0 %v510
    %1349 = vmatpush1.msra.mxu0 %v509
    %1350 = vmatprep.subr.mxu0 %v514
    %1351 = vmatpush1.msra.mxu0 %v513
    %1352 = vmatprep.subr.mxu0 %v518
    %1353 = vmatpush1.msra.mxu0 %v517
    %1354 = vmatprep.subr.mxu0 %v522
    %1355 = vmatpush1.msra.mxu0 %v521
    %1356 = vmatprep.subr.mxu0 %v526
    %1357 = vmatpush1.msra.mxu0 %v525
    %1358 = vmatprep.subr.mxu0 %v530
    %1359 = vmatpush1.msra.mxu0 %v529
    %1360 = vmatprep.subr.mxu0 %v534
    %1361 = vmatpush1.msra.mxu0 %v533
    %1362 = vmatprep.subr.mxu0 %v538
    %1363 = vmatpush1.msra.mxu0 %v537
    %1364 = vmatprep.subr.mxu0 %v542
    %1365 = vmatpush1.msra.mxu0 %v541
    %1366 = vmatprep.subr.mxu0 %v546
    %1367 = vmatpush1.msra.mxu0 %v545
    %1368 = vmatprep.subr.mxu0 %v550
    %1369 = vmatpush1.msra.mxu0 %v549
    %1370 = vmatprep.subr.mxu0 %v554
    %1371 = vmatpush1.msra.mxu0 %v553
    %1372 = vmatprep.subr.mxu0 %v558
    %1373 = vmatpush1.msra.mxu0 %v557
    %1374 = vmatprep.subr.mxu0 %v562
    %1375 = vmatpush1.msra.mxu0 %v561
    %1376 = vmatprep.subr.mxu0 %v566
    %1377 = vmatpush1.msra.mxu0 %v565
    %1378 = vmatprep.subr.mxu0 %v570
    %1379 = vmatpush1.msra.mxu0 %v569
    %1380 = vmatprep.subr.mxu0 %v574
    %1381 = vmatpush1.msra.mxu0 %v573
    %1382 = vmatprep.subr.mxu0 %v578
    %1383 = vmatpush1.msra.mxu0 %v577
    %1384 = vmatprep.subr.mxu0 %v582
    %1385 = vmatpush1.msra.mxu0 %v581
    %1386 = vmatprep.subr.mxu0 %v586
    %1387 = vmatpush1.msra.mxu0 %v585
    %1388 = vmatprep.subr.mxu0 %v590
    %1389 = vmatpush1.msra.mxu0 %v589
    %1390 = vmatprep.subr.mxu0 %v594
    %1391 = vmatpush1.msra.mxu0 %v593
    %1392 = vmatprep.subr.mxu0 %v598
    %1393 = vmatpush1.msra.mxu0 %v597
    %1394 = vmatprep.subr.mxu0 %v602
    %1395 = vmatpush1.msra.mxu0 %v601
    %1396 = vmatprep.subr.mxu0 %v606
    %1397 = vmatpush1.msra.mxu0 %v605
    %1398 = vmatprep.mubr.f32.mxu0 %v88
    %1399 = vmatmul.mubr.f32.gmra.mrb[0].mxu0 %v87
    %v1400 = vpop.f32.mrb[0].mxu0
    %v1401 = vadd.f32 %v1330, %v1400
    %v1402 = vpop.f32.mrb[0].mxu0
    %v1403 = vadd.f32 %v1332, %v1402
    %1404 = vdwg.mxu0
    %1405 = vmatprep.subr.mxu0 %v610
    %1406 = vmatpush1.msra.mxu0 %v609
    %1407 = vmatprep.subr.mxu0 %v614
    %1408 = vmatpush1.msra.mxu0 %v613
    %1409 = vmatprep.subr.mxu0 %v618
    %1410 = vmatpush1.msra.mxu0 %v617
    %1411 = vmatprep.subr.mxu0 %v622
    %1412 = vmatpush1.msra.mxu0 %v621
    %1413 = vmatprep.subr.mxu0 %v626
    %1414 = vmatpush1.msra.mxu0 %v625
    %1415 = vmatprep.subr.mxu0 %v630
    %1416 = vmatpush1.msra.mxu0 %v629
    %1417 = vmatprep.subr.mxu0 %v634
    %1418 = vmatpush1.msra.mxu0 %v633
    %1419 = vmatprep.subr.mxu0 %v638
    %1420 = vmatpush1.msra.mxu0 %v637
    %1421 = vmatprep.subr.mxu0 %v642
    %1422 = vmatpush1.msra.mxu0 %v641
    %1423 = vmatprep.subr.mxu0 %v646
    %1424 = vmatpush1.msra.mxu0 %v645
    %1425 = vmatprep.subr.mxu0 %v650
    %1426 = vmatpush1.msra.mxu0 %v649
    %1427 = vmatprep.subr.mxu0 %v654
    %1428 = vmatpush1.msra.mxu0 %v653
    %1429 = vmatprep.subr.mxu0 %v658
    %1430 = vmatpush1.msra.mxu0 %v657
    %1431 = vmatprep.subr.mxu0 %v662
    %1432 = vmatpush1.msra.mxu0 %v661
    %1433 = vmatprep.subr.mxu0 %v666
    %1434 = vmatpush1.msra.mxu0 %v665
    %1435 = vmatprep.subr.mxu0 %v670
    %1436 = vmatpush1.msra.mxu0 %v669
    %1437 = vmatprep.subr.mxu0 %v674
    %1438 = vmatpush1.msra.mxu0 %v673
    %1439 = vmatprep.subr.mxu0 %v678
    %1440 = vmatpush1.msra.mxu0 %v677
    %1441 = vmatprep.subr.mxu0 %v682
    %1442 = vmatpush1.msra.mxu0 %v681
    %1443 = vmatprep.subr.mxu0 %v686
    %1444 = vmatpush1.msra.mxu0 %v685
    %1445 = vmatprep.subr.mxu0 %v690
    %1446 = vmatpush1.msra.mxu0 %v689
    %1447 = vmatprep.subr.mxu0 %v694
    %1448 = vmatpush1.msra.mxu0 %v693
    %1449 = vmatprep.subr.mxu0 %v698
    %1450 = vmatpush1.msra.mxu0 %v697
    %1451 = vmatprep.subr.mxu0 %v702
    %1452 = vmatpush1.msra.mxu0 %v701
    %1453 = vmatprep.subr.mxu0 %v706
    %1454 = vmatpush1.msra.mxu0 %v705
    %1455 = vmatprep.subr.mxu0 %v710
    %1456 = vmatpush1.msra.mxu0 %v709
    %1457 = vmatprep.subr.mxu0 %v714
    %1458 = vmatpush1.msra.mxu0 %v713
    %1459 = vmatprep.subr.mxu0 %v718
    %1460 = vmatpush1.msra.mxu0 %v717
    %1461 = vmatprep.subr.mxu0 %v722
    %1462 = vmatpush1.msra.mxu0 %v721
    %1463 = vmatprep.subr.mxu0 %v726
    %1464 = vmatpush1.msra.mxu0 %v725
    %1465 = vmatprep.subr.mxu0 %v730
    %1466 = vmatpush1.msra.mxu0 %v729
    %1467 = vmatprep.subr.mxu0 %v734
    %1468 = vmatpush1.msra.mxu0 %v733
    %1469 = vmatprep.mubr.f32.mxu0 %v90
    %1470 = vmatmul.mubr.f32.gmra.mrb[0].mxu0 %v89
    %v1471 = vpop.f32.mrb[0].mxu0
    %v1472 = vadd.f32 %v1401, %v1471
    %v1473 = vpop.f32.mrb[0].mxu0
    %v1474 = vadd.f32 %v1403, %v1473
    %1475 = vdwg.mxu0
    %1476 = vmatprep.subr.mxu0 %v738
    %1477 = vmatpush1.msra.mxu0 %v737
    %1478 = vmatprep.subr.mxu0 %v742
    %1479 = vmatpush1.msra.mxu0 %v741
    %1480 = vmatprep.subr.mxu0 %v746
    %1481 = vmatpush1.msra.mxu0 %v745
    %1482 = vmatprep.subr.mxu0 %v750
    %1483 = vmatpush1.msra.mxu0 %v749
    %1484 = vmatprep.subr.mxu0 %v754
    %1485 = vmatpush1.msra.mxu0 %v753
    %1486 = vmatprep.subr.mxu0 %v758
    %1487 = vmatpush1.msra.mxu0 %v757
    %1488 = vmatprep.subr.mxu0 %v762
    %1489 = vmatpush1.msra.mxu0 %v761
    %1490 = vmatprep.subr.mxu0 %v766
    %1491 = vmatpush1.msra.mxu0 %v765
    %1492 = vmatprep.subr.mxu0 %v770
    %1493 = vmatpush1.msra.mxu0 %v769
    %1494 = vmatprep.subr.mxu0 %v774
    %1495 = vmatpush1.msra.mxu0 %v773
    %1496 = vmatprep.subr.mxu0 %v778
    %1497 = vmatpush1.msra.mxu0 %v777
    %1498 = vmatprep.subr.mxu0 %v782
    %1499 = vmatpush1.msra.mxu0 %v781
    %1500 = vmatprep.subr.mxu0 %v786
    %1501 = vmatpush1.msra.mxu0 %v785
    %1502 = vmatprep.subr.mxu0 %v790
    %1503 = vmatpush1.msra.mxu0 %v789
    %1504 = vmatprep.subr.mxu0 %v794
    %1505 = vmatpush1.msra.mxu0 %v793
    %1506 = vmatprep.subr.mxu0 %v798
    %1507 = vmatpush1.msra.mxu0 %v797
    %1508 = vmatprep.subr.mxu0 %v802
    %1509 = vmatpush1.msra.mxu0 %v801
    %1510 = vmatprep.subr.mxu0 %v806
    %1511 = vmatpush1.msra.mxu0 %v805
    %1512 = vmatprep.subr.mxu0 %v810
    %1513 = vmatpush1.msra.mxu0 %v809
    %1514 = vmatprep.subr.mxu0 %v814
    %1515 = vmatpush1.msra.mxu0 %v813
    %1516 = vmatprep.subr.mxu0 %v818
    %1517 = vmatpush1.msra.mxu0 %v817
    %1518 = vmatprep.subr.mxu0 %v822
    %1519 = vmatpush1.msra.mxu0 %v821
    %1520 = vmatprep.subr.mxu0 %v826
    %1521 = vmatpush1.msra.mxu0 %v825
    %1522 = vmatprep.subr.mxu0 %v830
    %1523 = vmatpush1.msra.mxu0 %v829
    %1524 = vmatprep.subr.mxu0 %v834
    %1525 = vmatpush1.msra.mxu0 %v833
    %1526 = vmatprep.subr.mxu0 %v838
    %1527 = vmatpush1.msra.mxu0 %v837
    %1528 = vmatprep.subr.mxu0 %v842
    %1529 = vmatpush1.msra.mxu0 %v841
    %1530 = vmatprep.subr.mxu0 %v846
    %1531 = vmatpush1.msra.mxu0 %v845
    %1532 = vmatprep.subr.mxu0 %v850
    %1533 = vmatpush1.msra.mxu0 %v849
    %1534 = vmatprep.subr.mxu0 %v854
    %1535 = vmatpush1.msra.mxu0 %v853
    %1536 = vmatprep.subr.mxu0 %v858
    %1537 = vmatpush1.msra.mxu0 %v857
    %1538 = vmatprep.subr.mxu0 %v862
    %1539 = vmatpush1.msra.mxu0 %v861
    %1540 = vmatprep.mubr.f32.mxu0 %v92
    %1541 = vmatmul.mubr.f32.gmra.mrb[0].mxu0 %v91
    %v1542 = vpop.f32.mrb[0].mxu0
    %v1543 = vadd.f32 %v1472, %v1542
    %v1544 = vpop.f32.mrb[0].mxu0
    %v1545 = vadd.f32 %v1474, %v1544
    %1546 = vdwg.mxu0
    %1547 = vmatprep.subr.mxu0 %v866
    %1548 = vmatpush1.msra.mxu0 %v865
    %1549 = vmatprep.subr.mxu0 %v870
    %1550 = vmatpush1.msra.mxu0 %v869
    %1551 = vmatprep.subr.mxu0 %v874
    %1552 = vmatpush1.msra.mxu0 %v873
    %1553 = vmatprep.subr.mxu0 %v878
    %1554 = vmatpush1.msra.mxu0 %v877
    %1555 = vmatprep.subr.mxu0 %v882
    %1556 = vmatpush1.msra.mxu0 %v881
    %1557 = vmatprep.subr.mxu0 %v886
    %1558 = vmatpush1.msra.mxu0 %v885
    %1559 = vmatprep.subr.mxu0 %v890
    %1560 = vmatpush1.msra.mxu0 %v889
    %1561 = vmatprep.subr.mxu0 %v894
    %1562 = vmatpush1.msra.mxu0 %v893
    %1563 = vmatprep.subr.mxu0 %v898
    %1564 = vmatpush1.msra.mxu0 %v897
    %1565 = vmatprep.subr.mxu0 %v902
    %1566 = vmatpush1.msra.mxu0 %v901
    %1567 = vmatprep.subr.mxu0 %v906
    %1568 = vmatpush1.msra.mxu0 %v905
    %1569 = vmatprep.subr.mxu0 %v910
    %1570 = vmatpush1.msra.mxu0 %v909
    %1571 = vmatprep.subr.mxu0 %v914
    %1572 = vmatpush1.msra.mxu0 %v913
    %1573 = vmatprep.subr.mxu0 %v918
    %1574 = vmatpush1.msra.mxu0 %v917
    %1575 = vmatprep.subr.mxu0 %v922
    %1576 = vmatpush1.msra.mxu0 %v921
    %1577 = vmatprep.subr.mxu0 %v926
    %1578 = vmatpush1.msra.mxu0 %v925
    %1579 = vmatprep.subr.mxu0 %v930
    %1580 = vmatpush1.msra.mxu0 %v929
    %1581 = vmatprep.subr.mxu0 %v934
    %1582 = vmatpush1.msra.mxu0 %v933
    %1583 = vmatprep.subr.mxu0 %v938
    %1584 = vmatpush1.msra.mxu0 %v937
    %1585 = vmatprep.subr.mxu0 %v942
    %1586 = vmatpush1.msra.mxu0 %v941
    %1587 = vmatprep.subr.mxu0 %v946
    %1588 = vmatpush1.msra.mxu0 %v945
    %1589 = vmatprep.subr.mxu0 %v950
    %1590 = vmatpush1.msra.mxu0 %v949
    %1591 = vmatprep.subr.mxu0 %v954
    %1592 = vmatpush1.msra.mxu0 %v953
    %1593 = vmatprep.subr.mxu0 %v958
    %1594 = vmatpush1.msra.mxu0 %v957
    %1595 = vmatprep.subr.mxu0 %v962
    %1596 = vmatpush1.msra.mxu0 %v961
    %1597 = vmatprep.subr.mxu0 %v966
    %1598 = vmatpush1.msra.mxu0 %v965
    %1599 = vmatprep.subr.mxu0 %v970
    %1600 = vmatpush1.msra.mxu0 %v969
    %1601 = vmatprep.subr.mxu0 %v974
    %1602 = vmatpush1.msra.mxu0 %v973
    %1603 = vmatprep.subr.mxu0 %v978
    %1604 = vmatpush1.msra.mxu0 %v977
    %1605 = vmatprep.subr.mxu0 %v982
    %1606 = vmatpush1.msra.mxu0 %v981
    %1607 = vmatprep.subr.mxu0 %v986
    %1608 = vmatpush1.msra.mxu0 %v985
    %1609 = vmatprep.subr.mxu0 %v990
    %1610 = vmatpush1.msra.mxu0 %v989
    %1611 = vmatprep.mubr.f32.mxu0 %v94
    %1612 = vmatmul.mubr.f32.gmra.mrb[0].mxu0 %v93
    %v1613 = vpop.f32.mrb[0].mxu0
    %v1614 = vadd.f32 %v1543, %v1613
    %v1615 = vpop.f32.mrb[0].mxu0
    %v1616 = vadd.f32 %v1545, %v1615
    %1617 = vdwg.mxu0
    %1618 = vmatprep.subr.mxu0 %v994
    %1619 = vmatpush1.msra.mxu0 %v993
    %1620 = vmatprep.subr.mxu0 %v998
    %1621 = vmatpush1.msra.mxu0 %v997
    %1622 = vmatprep.subr.mxu0 %v1002
    %1623 = vmatpush1.msra.mxu0 %v1001
    %1624 = vmatprep.subr.mxu0 %v1006
    %1625 = vmatpush1.msra.mxu0 %v1005
    %1626 = vmatprep.subr.mxu0 %v1010
    %1627 = vmatpush1.msra.mxu0 %v1009
    %1628 = vmatprep.subr.mxu0 %v1014
    %1629 = vmatpush1.msra.mxu0 %v1013
    %1630 = vmatprep.subr.mxu0 %v1018
    %1631 = vmatpush1.msra.mxu0 %v1017
    %1632 = vmatprep.subr.mxu0 %v1022
    %1633 = vmatpush1.msra.mxu0 %v1021
    %1634 = vmatprep.subr.mxu0 %v1026
    %1635 = vmatpush1.msra.mxu0 %v1025
    %1636 = vmatprep.subr.mxu0 %v1030
    %1637 = vmatpush1.msra.mxu0 %v1029
    %1638 = vmatprep.subr.mxu0 %v1034
    %1639 = vmatpush1.msra.mxu0 %v1033
    %1640 = vmatprep.subr.mxu0 %v1038
    %1641 = vmatpush1.msra.mxu0 %v1037
    %1642 = vmatprep.subr.mxu0 %v1042
    %1643 = vmatpush1.msra.mxu0 %v1041
    %1644 = vmatprep.subr.mxu0 %v1046
    %1645 = vmatpush1.msra.mxu0 %v1045
    %1646 = vmatprep.subr.mxu0 %v1050
    %1647 = vmatpush1.msra.mxu0 %v1049
    %1648 = vmatprep.subr.mxu0 %v1054
    %1649 = vmatpush1.msra.mxu0 %v1053
    %1650 = vmatprep.subr.mxu0 %v1058
    %1651 = vmatpush1.msra.mxu0 %v1057
    %1652 = vmatprep.subr.mxu0 %v1062
    %1653 = vmatpush1.msra.mxu0 %v1061
    %1654 = vmatprep.subr.mxu0 %v1066
    %1655 = vmatpush1.msra.mxu0 %v1065
    %1656 = vmatprep.subr.mxu0 %v1070
    %1657 = vmatpush1.msra.mxu0 %v1069
    %1658 = vmatprep.subr.mxu0 %v1074
    %1659 = vmatpush1.msra.mxu0 %v1073
    %1660 = vmatprep.subr.mxu0 %v1078
    %1661 = vmatpush1.msra.mxu0 %v1077
    %1662 = vmatprep.subr.mxu0 %v1082
    %1663 = vmatpush1.msra.mxu0 %v1081
    %1664 = vmatprep.subr.mxu0 %v1086
    %1665 = vmatpush1.msra.mxu0 %v1085
    %1666 = vmatprep.subr.mxu0 %v1090
    %1667 = vmatpush1.msra.mxu0 %v1089
    %1668 = vmatprep.subr.mxu0 %v1094
    %1669 = vmatpush1.msra.mxu0 %v1093
    %1670 = vmatprep.subr.mxu0 %v1098
    %1671 = vmatpush1.msra.mxu0 %v1097
    %1672 = vmatprep.subr.mxu0 %v1102
    %1673 = vmatpush1.msra.mxu0 %v1101
    %1674 = vmatprep.subr.mxu0 %v1106
    %1675 = vmatpush1.msra.mxu0 %v1105
    %1676 = vmatprep.subr.mxu0 %v1110
    %1677 = vmatpush1.msra.mxu0 %v1109
    %1678 = vmatprep.subr.mxu0 %v1114
    %1679 = vmatpush1.msra.mxu0 %v1113
    %1680 = vmatprep.subr.mxu0 %v1118
    %1681 = vmatpush1.msra.mxu0 %v1117
    %1682 = vmatprep.mubr.f32.mxu0 %v96
    %1683 = vmatmul.mubr.f32.gmra.mrb[0].mxu0 %v95
    %v1684 = vpop.f32.mrb[0].mxu0
    %v1685 = vadd.f32 %v1614, %v1684
    %v1686 = vpop.f32.mrb[0].mxu0
    %v1687 = vadd.f32 %v1616, %v1686
    %1688 = vdwg.mxu0
    %1689 = vmatprep.subr.mxu0 %v100
    %1690 = vmatpush1.msra.mxu0 %v99
    %1691 = vmatprep.subr.mxu0 %v104
    %1692 = vmatpush1.msra.mxu0 %v103
    %1693 = vmatprep.subr.mxu0 %v108
    %1694 = vmatpush1.msra.mxu0 %v107
    %1695 = vmatprep.subr.mxu0 %v112
    %1696 = vmatpush1.msra.mxu0 %v111
    %1697 = vmatprep.subr.mxu0 %v116
    %1698 = vmatpush1.msra.mxu0 %v115
    %1699 = vmatprep.subr.mxu0 %v120
    %1700 = vmatpush1.msra.mxu0 %v119
    %1701 = vmatprep.subr.mxu0 %v124
    %1702 = vmatpush1.msra.mxu0 %v123
    %1703 = vmatprep.subr.mxu0 %v128
    %1704 = vmatpush1.msra.mxu0 %v127
    %1705 = vmatprep.subr.mxu0 %v132
    %1706 = vmatpush1.msra.mxu0 %v131
    %1707 = vmatprep.subr.mxu0 %v136
    %1708 = vmatpush1.msra.mxu0 %v135
    %1709 = vmatprep.subr.mxu0 %v140
    %1710 = vmatpush1.msra.mxu0 %v139
    %1711 = vmatprep.subr.mxu0 %v144
    %1712 = vmatpush1.msra.mxu0 %v143
    %1713 = vmatprep.subr.mxu0 %v148
    %1714 = vmatpush1.msra.mxu0 %v147
    %1715 = vmatprep.subr.mxu0 %v152
    %1716 = vmatpush1.msra.mxu0 %v151
    %1717 = vmatprep.subr.mxu0 %v156
    %1718 = vmatpush1.msra.mxu0 %v155
    %1719 = vmatprep.subr.mxu0 %v160
    %1720 = vmatpush1.msra.mxu0 %v159
    %1721 = vmatprep.subr.mxu0 %v164
    %1722 = vmatpush1.msra.mxu0 %v163
    %1723 = vmatprep.subr.mxu0 %v168
    %1724 = vmatpush1.msra.mxu0 %v167
    %1725 = vmatprep.subr.mxu0 %v172
    %1726 = vmatpush1.msra.mxu0 %v171
    %1727 = vmatprep.subr.mxu0 %v176
    %1728 = vmatpush1.msra.mxu0 %v175
    %1729 = vmatprep.subr.mxu0 %v180
    %1730 = vmatpush1.msra.mxu0 %v179
    %1731 = vmatprep.subr.mxu0 %v184
    %1732 = vmatpush1.msra.mxu0 %v183
    %1733 = vmatprep.subr.mxu0 %v188
    %1734 = vmatpush1.msra.mxu0 %v187
    %1735 = vmatprep.subr.mxu0 %v192
    %1736 = vmatpush1.msra.mxu0 %v191
    %1737 = vmatprep.subr.mxu0 %v196
    %1738 = vmatpush1.msra.mxu0 %v195
    %1739 = vmatprep.subr.mxu0 %v200
    %1740 = vmatpush1.msra.mxu0 %v199
    %1741 = vmatprep.subr.mxu0 %v204
    %1742 = vmatpush1.msra.mxu0 %v203
    %1743 = vmatprep.subr.mxu0 %v208
    %1744 = vmatpush1.msra.mxu0 %v207
    %1745 = vmatprep.subr.mxu0 %v212
    %1746 = vmatpush1.msra.mxu0 %v211
    %1747 = vmatprep.subr.mxu0 %v216
    %1748 = vmatpush1.msra.mxu0 %v215
    %1749 = vmatprep.subr.mxu0 %v220
    %1750 = vmatpush1.msra.mxu0 %v219
    %1751 = vmatprep.subr.mxu0 %v224
    %1752 = vmatpush1.msra.mxu0 %v223
    %1753 = vmatprep.mubr.f32.mxu0 %v82
    %1754 = vmatmul.mubr.f32.gmra.mrb[0].mxu0 %v81
    %v1755 = vpop.f32.mrb[0].mxu0
    %v1756 = vadd.f32 0.0, %v1755
    %v1757 = vpop.f32.mrb[0].mxu0
    %v1758 = vadd.f32 0.0, %v1757
    %1759 = vdwg.mxu0
    %1760 = vmatprep.subr.mxu0 %v228
    %1761 = vmatpush1.msra.mxu0 %v227
    %1762 = vmatprep.subr.mxu0 %v232
    %1763 = vmatpush1.msra.mxu0 %v231
    %1764 = vmatprep.subr.mxu0 %v236
    %1765 = vmatpush1.msra.mxu0 %v235
    %1766 = vmatprep.subr.mxu0 %v240
    %1767 = vmatpush1.msra.mxu0 %v239
    %1768 = vmatprep.subr.mxu0 %v244
    %1769 = vmatpush1.msra.mxu0 %v243
    %1770 = vmatprep.subr.mxu0 %v248
    %1771 = vmatpush1.msra.mxu0 %v247
    %1772 = vmatprep.subr.mxu0 %v252
    %1773 = vmatpush1.msra.mxu0 %v251
    %1774 = vmatprep.subr.mxu0 %v256
    %1775 = vmatpush1.msra.mxu0 %v255
    %1776 = vmatprep.subr.mxu0 %v260
    %1777 = vmatpush1.msra.mxu0 %v259
    %1778 = vmatprep.subr.mxu0 %v264
    %1779 = vmatpush1.msra.mxu0 %v263
    %1780 = vmatprep.subr.mxu0 %v268
    %1781 = vmatpush1.msra.mxu0 %v267
    %1782 = vmatprep.subr.mxu0 %v272
    %1783 = vmatpush1.msra.mxu0 %v271
    %1784 = vmatprep.subr.mxu0 %v276
    %1785 = vmatpush1.msra.mxu0 %v275
    %1786 = vmatprep.subr.mxu0 %v280
    %1787 = vmatpush1.msra.mxu0 %v279
    %1788 = vmatprep.subr.mxu0 %v284
    %1789 = vmatpush1.msra.mxu0 %v283
    %1790 = vmatprep.subr.mxu0 %v288
    %1791 = vmatpush1.msra.mxu0 %v287
    %1792 = vmatprep.subr.mxu0 %v292
    %1793 = vmatpush1.msra.mxu0 %v291
    %1794 = vmatprep.subr.mxu0 %v296
    %1795 = vmatpush1.msra.mxu0 %v295
    %1796 = vmatprep.subr.mxu0 %v300
    %1797 = vmatpush1.msra.mxu0 %v299
    %1798 = vmatprep.subr.mxu0 %v304
    %1799 = vmatpush1.msra.mxu0 %v303
    %1800 = vmatprep.subr.mxu0 %v308
    %1801 = vmatpush1.msra.mxu0 %v307
    %1802 = vmatprep.subr.mxu0 %v312
    %1803 = vmatpush1.msra.mxu0 %v311
    %1804 = vmatprep.subr.mxu0 %v316
    %1805 = vmatpush1.msra.mxu0 %v315
    %1806 = vmatprep.subr.mxu0 %v320
    %1807 = vmatpush1.msra.mxu0 %v319
    %1808 = vmatprep.subr.mxu0 %v324
    %1809 = vmatpush1.msra.mxu0 %v323
    %1810 = vmatprep.subr.mxu0 %v328
    %1811 = vmatpush1.msra.mxu0 %v327
    %1812 = vmatprep.subr.mxu0 %v332
    %1813 = vmatpush1.msra.mxu0 %v331
    %1814 = vmatprep.subr.mxu0 %v336
    %1815 = vmatpush1.msra.mxu0 %v335
    %1816 = vmatprep.subr.mxu0 %v340
    %1817 = vmatpush1.msra.mxu0 %v339
    %1818 = vmatprep.subr.mxu0 %v344
    %1819 = vmatpush1.msra.mxu0 %v343
    %1820 = vmatprep.subr.mxu0 %v348
    %1821 = vmatpush1.msra.mxu0 %v347
    %1822 = vmatprep.subr.mxu0 %v352
    %1823 = vmatpush1.msra.mxu0 %v351
    %1824 = vmatprep.mubr.f32.mxu0 %v84
    %1825 = vmatmul.mubr.f32.gmra.mrb[0].mxu0 %v83
    %v1826 = vpop.f32.mrb[0].mxu0
    %v1827 = vadd.f32 %v1756, %v1826
    %v1828 = vpop.f32.mrb[0].mxu0
    %v1829 = vadd.f32 %v1758, %v1828
    %1830 = vdwg.mxu0
    %1831 = vmatprep.subr.mxu0 %v356
    %1832 = vmatpush1.msra.mxu0 %v355
    %1833 = vmatprep.subr.mxu0 %v360
    %1834 = vmatpush1.msra.mxu0 %v359
    %1835 = vmatprep.subr.mxu0 %v364
    %1836 = vmatpush1.msra.mxu0 %v363
    %1837 = vmatprep.subr.mxu0 %v368
    %1838 = vmatpush1.msra.mxu0 %v367
    %1839 = vmatprep.subr.mxu0 %v372
    %1840 = vmatpush1.msra.mxu0 %v371
    %1841 = vmatprep.subr.mxu0 %v376
    %1842 = vmatpush1.msra.mxu0 %v375
    %1843 = vmatprep.subr.mxu0 %v380
    %1844 = vmatpush1.msra.mxu0 %v379
    %1845 = vmatprep.subr.mxu0 %v384
    %1846 = vmatpush1.msra.mxu0 %v383
    %1847 = vmatprep.subr.mxu0 %v388
    %1848 = vmatpush1.msra.mxu0 %v387
    %1849 = vmatprep.subr.mxu0 %v392
    %1850 = vmatpush1.msra.mxu0 %v391
    %1851 = vmatprep.subr.mxu0 %v396
    %1852 = vmatpush1.msra.mxu0 %v395
    %1853 = vmatprep.subr.mxu0 %v400
    %1854 = vmatpush1.msra.mxu0 %v399
    %1855 = vmatprep.subr.mxu0 %v404
    %1856 = vmatpush1.msra.mxu0 %v403
    %1857 = vmatprep.subr.mxu0 %v408
    %1858 = vmatpush1.msra.mxu0 %v407
    %1859 = vmatprep.subr.mxu0 %v412
    %1860 = vmatpush1.msra.mxu0 %v411
    %1861 = vmatprep.subr.mxu0 %v416
    %1862 = vmatpush1.msra.mxu0 %v415
    %1863 = vmatprep.subr.mxu0 %v420
    %1864 = vmatpush1.msra.mxu0 %v419
    %1865 = vmatprep.subr.mxu0 %v424
    %1866 = vmatpush1.msra.mxu0 %v423
    %1867 = vmatprep.subr.mxu0 %v428
    %1868 = vmatpush1.msra.mxu0 %v427
    %1869 = vmatprep.subr.mxu0 %v432
    %1870 = vmatpush1.msra.mxu0 %v431
    %1871 = vmatprep.subr.mxu0 %v436
    %1872 = vmatpush1.msra.mxu0 %v435
    %1873 = vmatprep.subr.mxu0 %v440
    %1874 = vmatpush1.msra.mxu0 %v439
    %1875 = vmatprep.subr.mxu0 %v444
    %1876 = vmatpush1.msra.mxu0 %v443
    %1877 = vmatprep.subr.mxu0 %v448
    %1878 = vmatpush1.msra.mxu0 %v447
    %1879 = vmatprep.subr.mxu0 %v452
    %1880 = vmatpush1.msra.mxu0 %v451
    %1881 = vmatprep.subr.mxu0 %v456
    %1882 = vmatpush1.msra.mxu0 %v455
    %1883 = vmatprep.subr.mxu0 %v460
    %1884 = vmatpush1.msra.mxu0 %v459
    %1885 = vmatprep.subr.mxu0 %v464
    %1886 = vmatpush1.msra.mxu0 %v463
    %1887 = vmatprep.subr.mxu0 %v468
    %1888 = vmatpush1.msra.mxu0 %v467
    %1889 = vmatprep.subr.mxu0 %v472
    %1890 = vmatpush1.msra.mxu0 %v471
    %1891 = vmatprep.subr.mxu0 %v476
    %1892 = vmatpush1.msra.mxu0 %v475
    %1893 = vmatprep.subr.mxu0 %v480
    %1894 = vmatpush1.msra.mxu0 %v479
    %1895 = vmatprep.mubr.f32.mxu0 %v86
    %1896 = vmatmul.mubr.f32.gmra.mrb[0].mxu0 %v85
    %v1897 = vpop.f32.mrb[0].mxu0
    %v1898 = vadd.f32 %v1827, %v1897
    %v1899 = vpop.f32.mrb[0].mxu0
    %v1900 = vadd.f32 %v1829, %v1899
    %1901 = vdwg.mxu0
    %1902 = vmatprep.subr.mxu0 %v484
    %1903 = vmatpush1.msra.mxu0 %v483
    %1904 = vmatprep.subr.mxu0 %v488
    %1905 = vmatpush1.msra.mxu0 %v487
    %1906 = vmatprep.subr.mxu0 %v492
    %1907 = vmatpush1.msra.mxu0 %v491
    %1908 = vmatprep.subr.mxu0 %v496
    %1909 = vmatpush1.msra.mxu0 %v495
    %1910 = vmatprep.subr.mxu0 %v500
    %1911 = vmatpush1.msra.mxu0 %v499
    %1912 = vmatprep.subr.mxu0 %v504
    %1913 = vmatpush1.msra.mxu0 %v503
    %1914 = vmatprep.subr.mxu0 %v508
    %1915 = vmatpush1.msra.mxu0 %v507
    %1916 = vmatprep.subr.mxu0 %v512
    %1917 = vmatpush1.msra.mxu0 %v511
    %1918 = vmatprep.subr.mxu0 %v516
    %1919 = vmatpush1.msra.mxu0 %v515
    %1920 = vmatprep.subr.mxu0 %v520
    %1921 = vmatpush1.msra.mxu0 %v519
    %1922 = vmatprep.subr.mxu0 %v524
    %1923 = vmatpush1.msra.mxu0 %v523
    %1924 = vmatprep.subr.mxu0 %v528
    %1925 = vmatpush1.msra.mxu0 %v527
    %1926 = vmatprep.subr.mxu0 %v532
    %1927 = vmatpush1.msra.mxu0 %v531
    %1928 = vmatprep.subr.mxu0 %v536
    %1929 = vmatpush1.msra.mxu0 %v535
    %1930 = vmatprep.subr.mxu0 %v540
    %1931 = vmatpush1.msra.mxu0 %v539
    %1932 = vmatprep.subr.mxu0 %v544
    %1933 = vmatpush1.msra.mxu0 %v543
    %1934 = vmatprep.subr.mxu0 %v548
    %1935 = vmatpush1.msra.mxu0 %v547
    %1936 = vmatprep.subr.mxu0 %v552
    %1937 = vmatpush1.msra.mxu0 %v551
    %1938 = vmatprep.subr.mxu0 %v556
    %1939 = vmatpush1.msra.mxu0 %v555
    %1940 = vmatprep.subr.mxu0 %v560
    %1941 = vmatpush1.msra.mxu0 %v559
    %1942 = vmatprep.subr.mxu0 %v564
    %1943 = vmatpush1.msra.mxu0 %v563
    %1944 = vmatprep.subr.mxu0 %v568
    %1945 = vmatpush1.msra.mxu0 %v567
    %1946 = vmatprep.subr.mxu0 %v572
    %1947 = vmatpush1.msra.mxu0 %v571
    %1948 = vmatprep.subr.mxu0 %v576
    %1949 = vmatpush1.msra.mxu0 %v575
    %1950 = vmatprep.subr.mxu0 %v580
    %1951 = vmatpush1.msra.mxu0 %v579
    %1952 = vmatprep.subr.mxu0 %v584
    %1953 = vmatpush1.msra.mxu0 %v583
    %1954 = vmatprep.subr.mxu0 %v588
    %1955 = vmatpush1.msra.mxu0 %v587
    %1956 = vmatprep.subr.mxu0 %v592
    %1957 = vmatpush1.msra.mxu0 %v591
    %1958 = vmatprep.subr.mxu0 %v596
    %1959 = vmatpush1.msra.mxu0 %v595
    %1960 = vmatprep.subr.mxu0 %v600
    %1961 = vmatpush1.msra.mxu0 %v599
    %1962 = vmatprep.subr.mxu0 %v604
    %1963 = vmatpush1.msra.mxu0 %v603
    %1964 = vmatprep.subr.mxu0 %v608
    %1965 = vmatpush1.msra.mxu0 %v607
    %1966 = vmatprep.mubr.f32.mxu0 %v88
    %1967 = vmatmul.mubr.f32.gmra.mrb[0].mxu0 %v87
    %v1968 = vpop.f32.mrb[0].mxu0
    %v1969 = vadd.f32 %v1898, %v1968
    %v1970 = vpop.f32.mrb[0].mxu0
    %v1971 = vadd.f32 %v1900, %v1970
    %1972 = vdwg.mxu0
    %1973 = vmatprep.subr.mxu0 %v612
    %1974 = vmatpush1.msra.mxu0 %v611
    %1975 = vmatprep.subr.mxu0 %v616
    %1976 = vmatpush1.msra.mxu0 %v615
    %1977 = vmatprep.subr.mxu0 %v620
    %1978 = vmatpush1.msra.mxu0 %v619
    %1979 = vmatprep.subr.mxu0 %v624
    %1980 = vmatpush1.msra.mxu0 %v623
    %1981 = vmatprep.subr.mxu0 %v628
    %1982 = vmatpush1.msra.mxu0 %v627
    %1983 = vmatprep.subr.mxu0 %v632
    %1984 = vmatpush1.msra.mxu0 %v631
    %1985 = vmatprep.subr.mxu0 %v636
    %1986 = vmatpush1.msra.mxu0 %v635
    %1987 = vmatprep.subr.mxu0 %v640
    %1988 = vmatpush1.msra.mxu0 %v639
    %1989 = vmatprep.subr.mxu0 %v644
    %1990 = vmatpush1.msra.mxu0 %v643
    %1991 = vmatprep.subr.mxu0 %v648
    %1992 = vmatpush1.msra.mxu0 %v647
    %1993 = vmatprep.subr.mxu0 %v652
    %1994 = vmatpush1.msra.mxu0 %v651
    %1995 = vmatprep.subr.mxu0 %v656
    %1996 = vmatpush1.msra.mxu0 %v655
    %1997 = vmatprep.subr.mxu0 %v660
    %1998 = vmatpush1.msra.mxu0 %v659
    %1999 = vmatprep.subr.mxu0 %v664
    %2000 = vmatpush1.msra.mxu0 %v663
    %2001 = vmatprep.subr.mxu0 %v668
    %2002 = vmatpush1.msra.mxu0 %v667
    %2003 = vmatprep.subr.mxu0 %v672
    %2004 = vmatpush1.msra.mxu0 %v671
    %2005 = vmatprep.subr.mxu0 %v676
    %2006 = vmatpush1.msra.mxu0 %v675
    %2007 = vmatprep.subr.mxu0 %v680
    %2008 = vmatpush1.msra.mxu0 %v679
    %2009 = vmatprep.subr.mxu0 %v684
    %2010 = vmatpush1.msra.mxu0 %v683
    %2011 = vmatprep.subr.mxu0 %v688
    %2012 = vmatpush1.msra.mxu0 %v687
    %2013 = vmatprep.subr.mxu0 %v692
    %2014 = vmatpush1.msra.mxu0 %v691
    %2015 = vmatprep.subr.mxu0 %v696
    %2016 = vmatpush1.msra.mxu0 %v695
    %2017 = vmatprep.subr.mxu0 %v700
    %2018 = vmatpush1.msra.mxu0 %v699
    %2019 = vmatprep.subr.mxu0 %v704
    %2020 = vmatpush1.msra.mxu0 %v703
    %2021 = vmatprep.subr.mxu0 %v708
    %2022 = vmatpush1.msra.mxu0 %v707
    %2023 = vmatprep.subr.mxu0 %v712
    %2024 = vmatpush1.msra.mxu0 %v711
    %2025 = vmatprep.subr.mxu0 %v716
    %2026 = vmatpush1.msra.mxu0 %v715
    %2027 = vmatprep.subr.mxu0 %v720
    %2028 = vmatpush1.msra.mxu0 %v719
    %2029 = vmatprep.subr.mxu0 %v724
    %2030 = vmatpush1.msra.mxu0 %v723
    %2031 = vmatprep.subr.mxu0 %v728
    %2032 = vmatpush1.msra.mxu0 %v727
    %2033 = vmatprep.subr.mxu0 %v732
    %2034 = vmatpush1.msra.mxu0 %v731
    %2035 = vmatprep.subr.mxu0 %v736
    %2036 = vmatpush1.msra.mxu0 %v735
    %2037 = vmatprep.mubr.f32.mxu0 %v90
    %2038 = vmatmul.mubr.f32.gmra.mrb[0].mxu0 %v89
    %v2039 = vpop.f32.mrb[0].mxu0
    %v2040 = vadd.f32 %v1969, %v2039
    %v2041 = vpop.f32.mrb[0].mxu0
    %v2042 = vadd.f32 %v1971, %v2041
    %2043 = vdwg.mxu0
    %2044 = vmatprep.subr.mxu0 %v740
    %2045 = vmatpush1.msra.mxu0 %v739
    %2046 = vmatprep.subr.mxu0 %v744
    %2047 = vmatpush1.msra.mxu0 %v743
    %2048 = vmatprep.subr.mxu0 %v748
    %2049 = vmatpush1.msra.mxu0 %v747
    %2050 = vmatprep.subr.mxu0 %v752
    %2051 = vmatpush1.msra.mxu0 %v751
    %2052 = vmatprep.subr.mxu0 %v756
    %2053 = vmatpush1.msra.mxu0 %v755
    %2054 = vmatprep.subr.mxu0 %v760
    %2055 = vmatpush1.msra.mxu0 %v759
    %2056 = vmatprep.subr.mxu0 %v764
    %2057 = vmatpush1.msra.mxu0 %v763
    %2058 = vmatprep.subr.mxu0 %v768
    %2059 = vmatpush1.msra.mxu0 %v767
    %2060 = vmatprep.subr.mxu0 %v772
    %2061 = vmatpush1.msra.mxu0 %v771
    %2062 = vmatprep.subr.mxu0 %v776
    %2063 = vmatpush1.msra.mxu0 %v775
    %2064 = vmatprep.subr.mxu0 %v780
    %2065 = vmatpush1.msra.mxu0 %v779
    %2066 = vmatprep.subr.mxu0 %v784
    %2067 = vmatpush1.msra.mxu0 %v783
    %2068 = vmatprep.subr.mxu0 %v788
    %2069 = vmatpush1.msra.mxu0 %v787
    %2070 = vmatprep.subr.mxu0 %v792
    %2071 = vmatpush1.msra.mxu0 %v791
    %2072 = vmatprep.subr.mxu0 %v796
    %2073 = vmatpush1.msra.mxu0 %v795
    %2074 = vmatprep.subr.mxu0 %v800
    %2075 = vmatpush1.msra.mxu0 %v799
    %2076 = vmatprep.subr.mxu0 %v804
    %2077 = vmatpush1.msra.mxu0 %v803
    %2078 = vmatprep.subr.mxu0 %v808
    %2079 = vmatpush1.msra.mxu0 %v807
    %2080 = vmatprep.subr.mxu0 %v812
    %2081 = vmatpush1.msra.mxu0 %v811
    %2082 = vmatprep.subr.mxu0 %v816
    %2083 = vmatpush1.msra.mxu0 %v815
    %2084 = vmatprep.subr.mxu0 %v820
    %2085 = vmatpush1.msra.mxu0 %v819
    %2086 = vmatprep.subr.mxu0 %v824
    %2087 = vmatpush1.msra.mxu0 %v823
    %2088 = vmatprep.subr.mxu0 %v828
    %2089 = vmatpush1.msra.mxu0 %v827
    %2090 = vmatprep.subr.mxu0 %v832
    %2091 = vmatpush1.msra.mxu0 %v831
    %2092 = vmatprep.subr.mxu0 %v836
    %2093 = vmatpush1.msra.mxu0 %v835
    %2094 = vmatprep.subr.mxu0 %v840
    %2095 = vmatpush1.msra.mxu0 %v839
    %2096 = vmatprep.subr.mxu0 %v844
    %2097 = vmatpush1.msra.mxu0 %v843
    %2098 = vmatprep.subr.mxu0 %v848
    %2099 = vmatpush1.msra.mxu0 %v847
    %2100 = vmatprep.subr.mxu0 %v852
    %2101 = vmatpush1.msra.mxu0 %v851
    %2102 = vmatprep.subr.mxu0 %v856
    %2103 = vmatpush1.msra.mxu0 %v855
    %2104 = vmatprep.subr.mxu0 %v860
    %2105 = vmatpush1.msra.mxu0 %v859
    %2106 = vmatprep.subr.mxu0 %v864
    %2107 = vmatpush1.msra.mxu0 %v863
    %2108 = vmatprep.mubr.f32.mxu0 %v92
    %2109 = vmatmul.mubr.f32.gmra.mrb[0].mxu0 %v91
    %v2110 = vpop.f32.mrb[0].mxu0
    %v2111 = vadd.f32 %v2040, %v2110
    %v2112 = vpop.f32.mrb[0].mxu0
    %v2113 = vadd.f32 %v2042, %v2112
    %2114 = vdwg.mxu0
    %2115 = vmatprep.subr.mxu0 %v868
    %2116 = vmatpush1.msra.mxu0 %v867
    %2117 = vmatprep.subr.mxu0 %v872
    %2118 = vmatpush1.msra.mxu0 %v871
    %2119 = vmatprep.subr.mxu0 %v876
    %2120 = vmatpush1.msra.mxu0 %v875
    %2121 = vmatprep.subr.mxu0 %v880
    %2122 = vmatpush1.msra.mxu0 %v879
    %2123 = vmatprep.subr.mxu0 %v884
    %2124 = vmatpush1.msra.mxu0 %v883
    %2125 = vmatprep.subr.mxu0 %v888
    %2126 = vmatpush1.msra.mxu0 %v887
    %2127 = vmatprep.subr.mxu0 %v892
    %2128 = vmatpush1.msra.mxu0 %v891
    %2129 = vmatprep.subr.mxu0 %v896
    %2130 = vmatpush1.msra.mxu0 %v895
    %2131 = vmatprep.subr.mxu0 %v900
    %2132 = vmatpush1.msra.mxu0 %v899
    %2133 = vmatprep.subr.mxu0 %v904
    %2134 = vmatpush1.msra.mxu0 %v903
    %2135 = vmatprep.subr.mxu0 %v908
    %2136 = vmatpush1.msra.mxu0 %v907
    %2137 = vmatprep.subr.mxu0 %v912
    %2138 = vmatpush1.msra.mxu0 %v911
    %2139 = vmatprep.subr.mxu0 %v916
    %2140 = vmatpush1.msra.mxu0 %v915
    %2141 = vmatprep.subr.mxu0 %v920
    %2142 = vmatpush1.msra.mxu0 %v919
    %2143 = vmatprep.subr.mxu0 %v924
    %2144 = vmatpush1.msra.mxu0 %v923
    %2145 = vmatprep.subr.mxu0 %v928
    %2146 = vmatpush1.msra.mxu0 %v927
    %2147 = vmatprep.subr.mxu0 %v932
    %2148 = vmatpush1.msra.mxu0 %v931
    %2149 = vmatprep.subr.mxu0 %v936
    %2150 = vmatpush1.msra.mxu0 %v935
    %2151 = vmatprep.subr.mxu0 %v940
    %2152 = vmatpush1.msra.mxu0 %v939
    %2153 = vmatprep.subr.mxu0 %v944
    %2154 = vmatpush1.msra.mxu0 %v943
    %2155 = vmatprep.subr.mxu0 %v948
    %2156 = vmatpush1.msra.mxu0 %v947
    %2157 = vmatprep.subr.mxu0 %v952
    %2158 = vmatpush1.msra.mxu0 %v951
    %2159 = vmatprep.subr.mxu0 %v956
    %2160 = vmatpush1.msra.mxu0 %v955
    %2161 = vmatprep.subr.mxu0 %v960
    %2162 = vmatpush1.msra.mxu0 %v959
    %2163 = vmatprep.subr.mxu0 %v964
    %2164 = vmatpush1.msra.mxu0 %v963
    %2165 = vmatprep.subr.mxu0 %v968
    %2166 = vmatpush1.msra.mxu0 %v967
    %2167 = vmatprep.subr.mxu0 %v972
    %2168 = vmatpush1.msra.mxu0 %v971
    %2169 = vmatprep.subr.mxu0 %v976
    %2170 = vmatpush1.msra.mxu0 %v975
    %2171 = vmatprep.subr.mxu0 %v980
    %2172 = vmatpush1.msra.mxu0 %v979
    %2173 = vmatprep.subr.mxu0 %v984
    %2174 = vmatpush1.msra.mxu0 %v983
    %2175 = vmatprep.subr.mxu0 %v988
    %2176 = vmatpush1.msra.mxu0 %v987
    %2177 = vmatprep.subr.mxu0 %v992
    %2178 = vmatpush1.msra.mxu0 %v991
    %2179 = vmatprep.mubr.f32.mxu0 %v94
    %2180 = vmatmul.mubr.f32.gmra.mrb[0].mxu0 %v93
    %v2181 = vpop.f32.mrb[0].mxu0
    %v2182 = vadd.f32 %v2111, %v2181
    %v2183 = vpop.f32.mrb[0].mxu0
    %v2184 = vadd.f32 %v2113, %v2183
    %2185 = vdwg.mxu0
    %2186 = vmatprep.subr.mxu0 %v996
    %2187 = vmatpush1.msra.mxu0 %v995
    %2188 = vmatprep.subr.mxu0 %v1000
    %2189 = vmatpush1.msra.mxu0 %v999
    %2190 = vmatprep.subr.mxu0 %v1004
    %2191 = vmatpush1.msra.mxu0 %v1003
    %2192 = vmatprep.subr.mxu0 %v1008
    %2193 = vmatpush1.msra.mxu0 %v1007
    %2194 = vmatprep.subr.mxu0 %v1012
    %2195 = vmatpush1.msra.mxu0 %v1011
    %2196 = vmatprep.subr.mxu0 %v1016
    %2197 = vmatpush1.msra.mxu0 %v1015
    %2198 = vmatprep.subr.mxu0 %v1020
    %2199 = vmatpush1.msra.mxu0 %v1019
    %2200 = vmatprep.subr.mxu0 %v1024
    %2201 = vmatpush1.msra.mxu0 %v1023
    %2202 = vmatprep.subr.mxu0 %v1028
    %2203 = vmatpush1.msra.mxu0 %v1027
    %2204 = vmatprep.subr.mxu0 %v1032
    %2205 = vmatpush1.msra.mxu0 %v1031
    %2206 = vmatprep.subr.mxu0 %v1036
    %2207 = vmatpush1.msra.mxu0 %v1035
    %2208 = vmatprep.subr.mxu0 %v1040
    %2209 = vmatpush1.msra.mxu0 %v1039
    %2210 = vmatprep.subr.mxu0 %v1044
    %2211 = vmatpush1.msra.mxu0 %v1043
    %2212 = vmatprep.subr.mxu0 %v1048
    %2213 = vmatpush1.msra.mxu0 %v1047
    %2214 = vmatprep.subr.mxu0 %v1052
    %2215 = vmatpush1.msra.mxu0 %v1051
    %2216 = vmatprep.subr.mxu0 %v1056
    %2217 = vmatpush1.msra.mxu0 %v1055
    %2218 = vmatprep.subr.mxu0 %v1060
    %2219 = vmatpush1.msra.mxu0 %v1059
    %2220 = vmatprep.subr.mxu0 %v1064
    %2221 = vmatpush1.msra.mxu0 %v1063
    %2222 = vmatprep.subr.mxu0 %v1068
    %2223 = vmatpush1.msra.mxu0 %v1067
    %2224 = vmatprep.subr.mxu0 %v1072
    %2225 = vmatpush1.msra.mxu0 %v1071
    %2226 = vmatprep.subr.mxu0 %v1076
    %2227 = vmatpush1.msra.mxu0 %v1075
    %2228 = vmatprep.subr.mxu0 %v1080
    %2229 = vmatpush1.msra.mxu0 %v1079
    %2230 = vmatprep.subr.mxu0 %v1084
    %2231 = vmatpush1.msra.mxu0 %v1083
    %2232 = vmatprep.subr.mxu0 %v1088
    %2233 = vmatpush1.msra.mxu0 %v1087
    %2234 = vmatprep.subr.mxu0 %v1092
    %2235 = vmatpush1.msra.mxu0 %v1091
    %2236 = vmatprep.subr.mxu0 %v1096
    %2237 = vmatpush1.msra.mxu0 %v1095
    %2238 = vmatprep.subr.mxu0 %v1100
    %2239 = vmatpush1.msra.mxu0 %v1099
    %2240 = vmatprep.subr.mxu0 %v1104
    %2241 = vmatpush1.msra.mxu0 %v1103
    %2242 = vmatprep.subr.mxu0 %v1108
    %2243 = vmatpush1.msra.mxu0 %v1107
    %2244 = vmatprep.subr.mxu0 %v1112
    %2245 = vmatpush1.msra.mxu0 %v1111
    %2246 = vmatprep.subr.mxu0 %v1116
    %2247 = vmatpush1.msra.mxu0 %v1115
    %2248 = vmatprep.subr.mxu0 %v1120
    %2249 = vmatpush1.msra.mxu0 %v1119
    %2250 = vmatprep.mubr.f32.mxu0 %v96
    %2251 = vmatmul.mubr.f32.gmra.mrb[0].mxu0 %v95
    %v2252 = vpop.f32.mrb[0].mxu0
    %v2253 = vadd.f32 %v2182, %v2252
    %v2254 = vpop.f32.mrb[0].mxu0
    %v2255 = vadd.f32 %v2184, %v2254
    %2256 = vdwg.mxu0
    %v2257 = vadd.f32 %v77, %v1685
    %v2258 = vadd.f32 %v78, %v1687
    %v2259 = vadd.f32 %v79, %v2253
    %v2260 = vadd.f32 %v80, %v2255
    %2261 = vst [vmem:[#allocation2] sm:$0xff] %v2257
    %2262 = vst [vmem:[#allocation2 + $0x8] sm:$0xff] %v2258
    %2263 = vst [vmem:[#allocation2 + $0x10] sm:$0xff] %v2259
    %2264 = vst [vmem:[#allocation2 + $0x18] sm:$0xff] %v2260
    // Predicated region
    $region42: #{classifier_forward.1} parent=1 // pred_check
      %p2265 = pneg %p69
    $region43: #{classifier_forward.1} parent=1 // pred_check_branch
      %2267 = sbr.rel (%p2265) target = $region45
    $region44: #{classifier_forward.1} parent=1 // pred_region
      %v2268 = vld [vmem:[#allocation2] sm:$0xff]
      %v2269 = vld [vmem:[#allocation2 + $0x8] sm:$0xff]
      %v2270 = vld [vmem:[#allocation2 + $0x10] sm:$0xff]
      %v2271 = vld [vmem:[#allocation2 + $0x18] sm:$0xff]
      %v2272 = vrot.slane %v2268, 4
      %v2273 = vadd.f32 %v2268, %v2272
      %v2274 = vrot.slane %v2273, 2
      %v2275 = vadd.f32 %v2273, %v2274
      %v2276 = vrot.slane %v2275, 1
      %v2277 = vadd.f32 %v2275, %v2276
      %v2278 = vrot.slane %v2269, 4
      %v2279 = vadd.f32 %v2269, %v2278
      %v2280 = vrot.slane %v2279, 2
      %v2281 = vadd.f32 %v2279, %v2280
      %v2282 = vrot.slane %v2281, 1
      %v2283 = vadd.f32 %v2281, %v2282
      %v2284 = vrot.slane %v2270, 4
      %v2285 = vadd.f32 %v2270, %v2284
      %v2286 = vrot.slane %v2285, 2
      %v2287 = vadd.f32 %v2285, %v2286
      %v2288 = vrot.slane %v2287, 1
      %v2289 = vadd.f32 %v2287, %v2288
      %v2290 = vrot.slane %v2271, 4
      %v2291 = vadd.f32 %v2271, %v2290
      %v2292 = vrot.slane %v2291, 2
      %v2293 = vadd.f32 %v2291, %v2292
      %v2294 = vrot.slane %v2293, 1
      %v2295 = vadd.f32 %v2293, %v2294
      %v2296 = vrcp.pop 8.0
      %v2297 = vmul.f32 %v2277, %v2296
      %v2298 = vmul.f32 %v2283, %v2296
      %v2299 = vmul.f32 %v2289, %v2296
      %v2300 = vmul.f32 %v2295, %v2296
      %v2301 = vmul.f32 %v2268, %v2268
      %v2302 = vmul.f32 %v2269, %v2269
      %v2303 = vmul.f32 %v2270, %v2270
      %v2304 = vmul.f32 %v2271, %v2271
      %v2305 = vrot.slane %v2301, 4
      %v2306 = vadd.f32 %v2301, %v2305
      %v2307 = vrot.slane %v2306, 2
      %v2308 = vadd.f32 %v2306, %v2307
      %v2309 = vrot.slane %v2308, 1
      %v2310 = vadd.f32 %v2308, %v2309
      %v2311 = vrot.slane %v2302, 4
      %v2312 = vadd.f32 %v2302, %v2311
      %v2313 = vrot.slane %v2312, 2
      %v2314 = vadd.f32 %v2312, %v2313
      %v2315 = vrot.slane %v2314, 1
      %v2316 = vadd.f32 %v2314, %v2315
      %v2317 = vrot.slane %v2303, 4
      %v2318 = vadd.f32 %v2303, %v2317
      %v2319 = vrot.slane %v2318, 2
      %v2320 = vadd.f32 %v2318, %v2319
      %v2321 = vrot.slane %v2320, 1
      %v2322 = vadd.f32 %v2320, %v2321
      %v2323 = vrot.slane %v2304, 4
      %v2324 = vadd.f32 %v2304, %v2323
      %v2325 = vrot.slane %v2324, 2
      %v2326 = vadd.f32 %v2324, %v2325
      %v2327 = vrot.slane %v2326, 1
      %v2328 = vadd.f32 %v2326, %v2327
      %v2329 = vmul.f32 %v2310, %v2296
      %v2330 = vmul.f32 %v2316, %v2296
      %v2331 = vmul.f32 %v2322, %v2296
      %v2332 = vmul.f32 %v2328, %v2296
      %v2333 = vmul.f32 %v2297, %v2297
      %v2334 = vmul.f32 %v2298, %v2298
      %v2335 = vmul.f32 %v2299, %v2299
      %v2336 = vmul.f32 %v2300, %v2300
      %v2337 = vsub.f32 %v2329, %v2333
      %v2338 = vsub.f32 %v2330, %v2334
      %v2339 = vsub.f32 %v2331, %v2335
      %v2340 = vsub.f32 %v2332, %v2336
      %v2341 = vmax.f32 %v2337, 0.0
      %v2342 = vmax.f32 %v2338, 0.0
      %v2343 = vmax.f32 %v2339, 0.0
      %v2344 = vmax.f32 %v2340, 0.0
      %v2345 = vld [vmem:[#allocation7] sm:$0xf]
      %v2346 = vadd.f32 %v2341, 1e-05
      %v2347 = vadd.f32 %v2342, 1e-05
      %v2348 = vadd.f32 %v2343, 1e-05
      %v2349 = vadd.f32 %v2344, 1e-05
      %v2350 = vrsqrt.pop %v2346
      %v2351 = vrsqrt.pop %v2347
      %v2352 = vrsqrt.pop %v2348
      %v2353 = vrsqrt.pop %v2349
      %v2358 = vcombine.low %v2350, %v2351
      %v2359 = vcombine.low %v2352, %v2353
      %v2361 = vunpack.c.l.s4 1966171168
      %v2362 = vunpack.c.0.s8 %v2361
      %v2363 = vlaneseq
      %v2364 = vshrl.u32 %v2363, 7
      %v2365 = vsub.s32 %v2362, %v2364
      %v2366 = vrot.slane %v2358, %v2365
      %v2368 = vunpack.c.l.s4 1966171168
      %v2369 = vunpack.c.0.s8 %v2368
      %v2370 = vlaneseq
      %v2371 = vshrl.u32 %v2370, 7
      %v2372 = vsub.s32 %v2369, %v2371
      %v2373 = vrot.slane %v2359, %v2372
      %v2374 = vcombine.low %v2366, %v2373
      %v2376 = vunpack.c.l.s4 1966171168
      %v2377 = vunpack.c.0.s8 %v2376
      %v2378 = vlaneseq
      %v2379 = vshrl.u32 %v2378, 7
      %v2380 = vsub.s32 %v2377, %v2379
      %v2381 = vrot.slane %v2374, %v2380
      %v2383 = vmul.f32 %v2345, %v2381
      %v2384 = vld [vmem:[#allocation8] sm:$0xf]
      %v2386 = vlaneseq
      %v2387 = vshrl.u32 %v2386, 7
      %v2388 = vsub.s32 0, %v2387
      %v2389 = vrot.slane %v2383, %v2388
      %v2390 = vlaneseq
      %v2391 = vshrl.u32 %v2390, 7
      %v2392 = vsub.s32 1, %v2391
      %v2393 = vrot.slane %v2383, %v2392
      %v2394 = vlaneseq
      %v2395 = vshrl.u32 %v2394, 7
      %v2396 = vsub.s32 2, %v2395
      %v2397 = vrot.slane %v2383, %v2396
      %v2398 = vlaneseq
      %v2399 = vshrl.u32 %v2398, 7
      %v2400 = vsub.s32 3, %v2399
      %v2401 = vrot.slane %v2383, %v2400
      %v2406 = vmul.f32 %v2297, %v2389
      %v2407 = vmul.f32 %v2298, %v2393
      %v2408 = vmul.f32 %v2299, %v2397
      %v2409 = vmul.f32 %v2300, %v2401
      %v2414 = vcombine.low %v2406, %v2407
      %v2415 = vcombine.low %v2408, %v2409
      %v2417 = vunpack.c.l.s4 1966171168
      %v2418 = vunpack.c.0.s8 %v2417
      %v2419 = vlaneseq
      %v2420 = vshrl.u32 %v2419, 7
      %v2421 = vsub.s32 %v2418, %v2420
      %v2422 = vrot.slane %v2414, %v2421
      %v2424 = vunpack.c.l.s4 1966171168
      %v2425 = vunpack.c.0.s8 %v2424
      %v2426 = vlaneseq
      %v2427 = vshrl.u32 %v2426, 7
      %v2428 = vsub.s32 %v2425, %v2427
      %v2429 = vrot.slane %v2415, %v2428
      %v2430 = vcombine.low %v2422, %v2429
      %v2432 = vunpack.c.l.s4 1966171168
      %v2433 = vunpack.c.0.s8 %v2432
      %v2434 = vlaneseq
      %v2435 = vshrl.u32 %v2434, 7
      %v2436 = vsub.s32 %v2433, %v2435
      %v2437 = vrot.slane %v2430, %v2436
      %v2439 = vsub.f32 %v2384, %v2437
      %v2440 = vmul.f32 %v2268, %v2389
      %v2441 = vmul.f32 %v2269, %v2393
      %v2442 = vmul.f32 %v2270, %v2397
      %v2443 = vmul.f32 %v2271, %v2401
      %v2445 = vlaneseq
      %v2446 = vshrl.u32 %v2445, 7
      %v2447 = vsub.s32 0, %v2446
      %v2448 = vrot.slane %v2439, %v2447
      %v2449 = vlaneseq
      %v2450 = vshrl.u32 %v2449, 7
      %v2451 = vsub.s32 1, %v2450
      %v2452 = vrot.slane %v2439, %v2451
      %v2453 = vlaneseq
      %v2454 = vshrl.u32 %v2453, 7
      %v2455 = vsub.s32 2, %v2454
      %v2456 = vrot.slane %v2439, %v2455
      %v2457 = vlaneseq
      %v2458 = vshrl.u32 %v2457, 7
      %v2459 = vsub.s32 3, %v2458
      %v2460 = vrot.slane %v2439, %v2459
      %v2465 = vadd.f32 %v2440, %v2448
      %v2466 = vadd.f32 %v2441, %v2452
      %v2467 = vadd.f32 %v2442, %v2456
      %v2468 = vadd.f32 %v2443, %v2460
      %v2469 = vmax.f32 %v2465, 0.0
      %v2470 = vmax.f32 %v2466, 0.0
      %v2471 = vmax.f32 %v2467, 0.0
      %v2472 = vmax.f32 %v2468, 0.0
      %v2473 = vld [vmem:[%s4] sm:$0xff]
      %v2474 = vld [vmem:[%s4 + $0x8] sm:$0xff]
      %v2475 = vld [vmem:[%s4 + $0x10] sm:$0xff]
      %v2476 = vld [vmem:[%s4 + $0x18] sm:$0xff]
      %v2477 = vld [vmem:[%s4 + $0x20] sm:$0xff]
      %v2478 = vld [vmem:[%s4 + $0x28] sm:$0xff]
      %v2479 = vld [vmem:[%s4 + $0x30] sm:$0xff]
      %v2480 = vld [vmem:[%s4 + $0x38] sm:$0xff]
      %v2481 = vld [vmem:[%s4 + $0x40] sm:$0xff]
      %v2482 = vld [vmem:[%s4 + $0x48] sm:$0xff]
      %v2483 = vld [vmem:[%s4 + $0x50] sm:$0xff]
      %v2484 = vld [vmem:[%s4 + $0x58] sm:$0xff]
      %v2485 = vld [vmem:[%s4 + $0x60] sm:$0xff]
      %v2486 = vld [vmem:[%s4 + $0x68] sm:$0xff]
      %v2487 = vld [vmem:[%s4 + $0x70] sm:$0xff]
      %v2488 = vld [vmem:[%s4 + $0x78] sm:$0xff]
      %v2489 = vld [vmem:[%s4 + $0x80] sm:$0xff]
      %v2490 = vld [vmem:[%s4 + $0x88] sm:$0xff]
      %v2491 = vld [vmem:[%s4 + $0x90] sm:$0xff]
      %v2492 = vld [vmem:[%s4 + $0x98] sm:$0xff]
      %v2493 = vld [vmem:[%s4 + $0xa0] sm:$0xff]
      %v2494 = vld [vmem:[%s4 + $0xa8] sm:$0xff]
      %v2495 = vld [vmem:[%s4 + $0xb0] sm:$0xff]
      %v2496 = vld [vmem:[%s4 + $0xb8] sm:$0xff]
      %v2497 = vld [vmem:[%s4 + $0xc0] sm:$0xff]
      %v2498 = vld [vmem:[%s4 + $0xc8] sm:$0xff]
      %v2499 = vld [vmem:[%s4 + $0xd0] sm:$0xff]
      %v2500 = vld [vmem:[%s4 + $0xd8] sm:$0xff]
      %v2501 = vld [vmem:[%s4 + $0xe0] sm:$0xff]
      %v2502 = vld [vmem:[%s4 + $0xe8] sm:$0xff]
      %v2503 = vld [vmem:[%s4 + $0xf0] sm:$0xff]
      %v2504 = vld [vmem:[%s4 + $0xf8] sm:$0xff]
      %v2505 = vld [vmem:[%s4 + $0x100] sm:$0xff]
      %v2506 = vld [vmem:[%s4 + $0x108] sm:$0xff]
      %v2507 = vld [vmem:[%s4 + $0x110] sm:$0xff]
      %v2508 = vld [vmem:[%s4 + $0x118] sm:$0xff]
      %v2509 = vld [vmem:[%s4 + $0x120] sm:$0xff]
      %v2510 = vld [vmem:[%s4 + $0x128] sm:$0xff]
      %v2511 = vld [vmem:[%s4 + $0x130] sm:$0xff]
      %v2512 = vld [vmem:[%s4 + $0x138] sm:$0xff]
      %v2513 = vld [vmem:[%s4 + $0x140] sm:$0xff]
      %v2514 = vld [vmem:[%s4 + $0x148] sm:$0xff]
      %v2515 = vld [vmem:[%s4 + $0x150] sm:$0xff]
      %v2516 = vld [vmem:[%s4 + $0x158] sm:$0xff]
      %v2517 = vld [vmem:[%s4 + $0x160] sm:$0xff]
      %v2518 = vld [vmem:[%s4 + $0x168] sm:$0xff]
      %v2519 = vld [vmem:[%s4 + $0x170] sm:$0xff]
      %v2520 = vld [vmem:[%s4 + $0x178] sm:$0xff]
      %v2521 = vld [vmem:[%s4 + $0x180] sm:$0xff]
      %v2522 = vld [vmem:[%s4 + $0x188] sm:$0xff]
      %v2523 = vld [vmem:[%s4 + $0x190] sm:$0xff]
      %v2524 = vld [vmem:[%s4 + $0x198] sm:$0xff]
      %v2525 = vld [vmem:[%s4 + $0x1a0] sm:$0xff]
      %v2526 = vld [vmem:[%s4 + $0x1a8] sm:$0xff]
      %v2527 = vld [vmem:[%s4 + $0x1b0] sm:$0xff]
      %v2528 = vld [vmem:[%s4 + $0x1b8] sm:$0xff]
      %v2529 = vld [vmem:[%s4 + $0x1c0] sm:$0xff]
      %v2530 = vld [vmem:[%s4 + $0x1c8] sm:$0xff]
      %v2531 = vld [vmem:[%s4 + $0x1d0] sm:$0xff]
      %v2532 = vld [vmem:[%s4 + $0x1d8] sm:$0xff]
      %v2533 = vld [vmem:[%s4 + $0x1e0] sm:$0xff]
      %v2534 = vld [vmem:[%s4 + $0x1e8] sm:$0xff]
      %v2535 = vld [vmem:[%s4 + $0x1f0] sm:$0xff]
      %v2536 = vld [vmem:[%s4 + $0x1f8] sm:$0xff]
      %2537 = vmatprep.subr.mxu0 0.0
      %2538 = vmatpush1.msra.mxu0 %v2473
      %2539 = vmatprep.subr.mxu0 0.0
      %2540 = vmatpush1.msra.mxu0 %v2474
      %2541 = vmatprep.subr.mxu0 0.0
      %2542 = vmatpush1.msra.mxu0 %v2475
      %2543 = vmatprep.subr.mxu0 0.0
      %2544 = vmatpush1.msra.mxu0 %v2476
      %2545 = vmatprep.subr.mxu0 0.0
      %2546 = vmatpush1.msra.mxu0 %v2477
      %2547 = vmatprep.subr.mxu0 0.0
      %2548 = vmatpush1.msra.mxu0 %v2478
      %2549 = vmatprep.subr.mxu0 0.0
      %2550 = vmatpush1.msra.mxu0 %v2479
      %2551 = vmatprep.subr.mxu0 0.0
      %2552 = vmatpush1.msra.mxu0 %v2480
      %2553 = vmatprep.subr.mxu0 0.0
      %2554 = vmatpush1.msra.mxu0 %v2481
      %2555 = vmatprep.subr.mxu0 0.0
      %2556 = vmatpush1.msra.mxu0 %v2482
      %2557 = vmatprep.subr.mxu0 0.0
      %2558 = vmatpush1.msra.mxu0 %v2483
      %2559 = vmatprep.subr.mxu0 0.0
      %2560 = vmatpush1.msra.mxu0 %v2484
      %2561 = vmatprep.subr.mxu0 0.0
      %2562 = vmatpush1.msra.mxu0 %v2485
      %2563 = vmatprep.subr.mxu0 0.0
      %2564 = vmatpush1.msra.mxu0 %v2486
      %2565 = vmatprep.subr.mxu0 0.0
      %2566 = vmatpush1.msra.mxu0 %v2487
      %2567 = vmatprep.subr.mxu0 0.0
      %2568 = vmatpush1.msra.mxu0 %v2488
      %2569 = vmatprep.subr.mxu0 0.0
      %2570 = vmatpush1.msra.mxu0 %v2489
      %2571 = vmatprep.subr.mxu0 0.0
      %2572 = vmatpush1.msra.mxu0 %v2490
      %2573 = vmatprep.subr.mxu0 0.0
      %2574 = vmatpush1.msra.mxu0 %v2491
      %2575 = vmatprep.subr.mxu0 0.0
      %2576 = vmatpush1.msra.mxu0 %v2492
      %2577 = vmatprep.subr.mxu0 0.0
      %2578 = vmatpush1.msra.mxu0 %v2493
      %2579 = vmatprep.subr.mxu0 0.0
      %2580 = vmatpush1.msra.mxu0 %v2494
      %2581 = vmatprep.subr.mxu0 0.0
      %2582 = vmatpush1.msra.mxu0 %v2495
      %2583 = vmatprep.subr.mxu0 0.0
      %2584 = vmatpush1.msra.mxu0 %v2496
      %2585 = vmatprep.subr.mxu0 0.0
      %2586 = vmatpush1.msra.mxu0 %v2497
      %2587 = vmatprep.subr.mxu0 0.0
      %2588 = vmatpush1.msra.mxu0 %v2498
      %2589 = vmatprep.subr.mxu0 0.0
      %2590 = vmatpush1.msra.mxu0 %v2499
      %2591 = vmatprep.subr.mxu0 0.0
      %2592 = vmatpush1.msra.mxu0 %v2500
      %2593 = vmatprep.subr.mxu0 0.0
      %2594 = vmatpush1.msra.mxu0 %v2501
      %2595 = vmatprep.subr.mxu0 0.0
      %2596 = vmatpush1.msra.mxu0 %v2502
      %2597 = vmatprep.subr.mxu0 0.0
      %2598 = vmatpush1.msra.mxu0 %v2503
      %2599 = vmatprep.subr.mxu0 0.0
      %2600 = vmatpush1.msra.mxu0 %v2504
      %2601 = vmatprep.mubr.f32.mxu0 %v2470
      %2602 = vmatmul.mubr.f32.gmra.mrb[0].mxu0 %v2469
      %v2603 = vpop.f32.mrb[0].mxu0
      %v2604 = vadd.f32 0.0, %v2603
      %v2605 = vpop.f32.mrb[0].mxu0
      %2606 = vdwg.mxu0
      %2607 = vmatprep.subr.mxu0 0.0
      %2608 = vmatpush1.msra.mxu0 %v2505
      %2609 = vmatprep.subr.mxu0 0.0
      %2610 = vmatpush1.msra.mxu0 %v2506
      %2611 = vmatprep.subr.mxu0 0.0
      %2612 = vmatpush1.msra.mxu0 %v2507
      %2613 = vmatprep.subr.mxu0 0.0
      %2614 = vmatpush1.msra.mxu0 %v2508
      %2615 = vmatprep.subr.mxu0 0.0
      %2616 = vmatpush1.msra.mxu0 %v2509
      %2617 = vmatprep.subr.mxu0 0.0
      %2618 = vmatpush1.msra.mxu0 %v2510
      %2619 = vmatprep.subr.mxu0 0.0
      %2620 = vmatpush1.msra.mxu0 %v2511
      %2621 = vmatprep.subr.mxu0 0.0
      %2622 = vmatpush1.msra.mxu0 %v2512
      %2623 = vmatprep.subr.mxu0 0.0
      %2624 = vmatpush1.msra.mxu0 %v2513
      %2625 = vmatprep.subr.mxu0 0.0
      %2626 = vmatpush1.msra.mxu0 %v2514
      %2627 = vmatprep.subr.mxu0 0.0
      %2628 = vmatpush1.msra.mxu0 %v2515
      %2629 = vmatprep.subr.mxu0 0.0
      %2630 = vmatpush1.msra.mxu0 %v2516
      %2631 = vmatprep.subr.mxu0 0.0
      %2632 = vmatpush1.msra.mxu0 %v2517
      %2633 = vmatprep.subr.mxu0 0.0
      %2634 = vmatpush1.msra.mxu0 %v2518
      %2635 = vmatprep.subr.mxu0 0.0
      %2636 = vmatpush1.msra.mxu0 %v2519
      %2637 = vmatprep.subr.mxu0 0.0
      %2638 = vmatpush1.msra.mxu0 %v2520
      %2639 = vmatprep.subr.mxu0 0.0
      %2640 = vmatpush1.msra.mxu0 %v2521
      %2641 = vmatprep.subr.mxu0 0.0
      %2642 = vmatpush1.msra.mxu0 %v2522
      %2643 = vmatprep.subr.mxu0 0.0
      %2644 = vmatpush1.msra.mxu0 %v2523
      %2645 = vmatprep.subr.mxu0 0.0
      %2646 = vmatpush1.msra.mxu0 %v2524
      %2647 = vmatprep.subr.mxu0 0.0
      %2648 = vmatpush1.msra.mxu0 %v2525
      %2649 = vmatprep.subr.mxu0 0.0
      %2650 = vmatpush1.msra.mxu0 %v2526
      %2651 = vmatprep.subr.mxu0 0.0
      %2652 = vmatpush1.msra.mxu0 %v2527
      %2653 = vmatprep.subr.mxu0 0.0
      %2654 = vmatpush1.msra.mxu0 %v2528
      %2655 = vmatprep.subr.mxu0 0.0
      %2656 = vmatpush1.msra.mxu0 %v2529
      %2657 = vmatprep.subr.mxu0 0.0
      %2658 = vmatpush1.msra.mxu0 %v2530
      %2659 = vmatprep.subr.mxu0 0.0
      %2660 = vmatpush1.msra.mxu0 %v2531
      %2661 = vmatprep.subr.mxu0 0.0
      %2662 = vmatpush1.msra.mxu0 %v2532
      %2663 = vmatprep.subr.mxu0 0.0
      %2664 = vmatpush1.msra.mxu0 %v2533
      %2665 = vmatprep.subr.mxu0 0.0
      %2666 = vmatpush1.msra.mxu0 %v2534
      %2667 = vmatprep.subr.mxu0 0.0
      %2668 = vmatpush1.msra.mxu0 %v2535
      %2669 = vmatprep.subr.mxu0 0.0
      %2670 = vmatpush1.msra.mxu0 %v2536
      %2671 = vmatprep.mubr.f32.mxu0 %v2472
      %2672 = vmatmul.mubr.f32.gmra.mrb[0].mxu0 %v2471
      %v2673 = vpop.f32.mrb[0].mxu0
      %v2674 = vadd.f32 %v2604, %v2673
      %v2675 = vpop.f32.mrb[0].mxu0
      %2676 = vdwg.mxu0
      %2677 = vst [vmem:[%s5] sm:$0xff] %v2674
    $region45: #{classifier_forward.1} parent=1 // pred_fallthru
      _
    // Predicated region
    $region46: #{classifier_forward.1} parent=1 // pred_check
      _
    $region47: #{classifier_forward.1} parent=1 // pred_check_branch
      %2679 = sbr.rel (0) target = $region49
    $region48: #{classifier_forward.1} parent=1 // pred_region
      _
    $region49: #{classifier_forward.1} parent=1 // pred_fallthru
      _
    // Predicated region
    $region50: #{classifier_forward.1} parent=1 // pred_check
      _
    $region51: #{classifier_forward.1} parent=1 // pred_check_branch
      %2681 = sbr.rel (0) target = $region53
    $region52: #{classifier_forward.1} parent=1 // pred_region
      _
    $region53: #{classifier_forward.1} parent=1 // pred_fallthru
      _
    %2682 = vsyncpa [#allocation4], 1
    %2683 = vsyncpa [#allocation6], 1
    %2684 = vsyncpa [#allocation9], 1

</llo_original>
